<compile_context>
chip_gen: v5e
topology: v5e:2x2
jax: 0.10.0
libtpu: 0.0.40
codegen_flags: <defaults>
</compile_context>

<pallas_src>
import functools

import jax
import jax.numpy as jnp
import numpy as np
from jax.experimental import pallas as pl
from jax.experimental.pallas import tpu as pltpu

EPS = 1e-5  # torch.nn.InstanceNorm1d default eps (affine=False, track_running_stats=False)
_HIGHEST = jax.lax.Precision.HIGHEST


def _instance_norm_time(x):
    # x: (Bb, T, C) f32. Normalize over time per (sample, channel), biased variance,
    # eps inside rsqrt -> matches torch.nn.InstanceNorm1d(affine=False).
    mean = jnp.mean(x, axis=1, keepdims=True)
    var = jnp.mean(jnp.square(x - mean), axis=1, keepdims=True)
    return (x - mean) * jax.lax.rsqrt(var + EPS)


def _wavenet_stack_kernel(h_ref, seq_ref, w_in_ref, w_rs_ref, skip_ref,
                          xpad_sc, xtaps_sc, skip_sc,
                          *, gate_dim, residual_dim, skip_dim, kernel_size,
                          dilations, seq_len, pad_left, block_batch):
    G, Cr, Cs = gate_dim, residual_dim, skip_dim
    K, T, Bb = kernel_size, seq_len, block_batch
    cdt = xtaps_sc.dtype                                   # compute (MXU / elementwise) dtype

    # Zero only the padding halos; the centre is rewritten by every cell below.  Not
    # guarded on program_id()==0: under megacore partitioning of the 'parallel' batch
    # axis a core's first step may have id > 0 while its scratch is uninitialized.
    if pad_left > 0:
        xpad_sc[:, :pad_left, :] = jnp.zeros((Bb, pad_left, Cr), cdt)
        xpad_sc[:, pad_left + T:, :] = jnp.zeros((Bb, pad_left, Cr), cdt)

    skip_sc[...] = jnp.zeros_like(skip_sc)                 # skip accumulator (f32, VMEM)
    x = seq_ref[...]                                       # (Bb, T, Cr) residual stream (f32)

    # TODO(synk): for deep stacks (L >~ 16) unroll only the dilation cycle and wrap the
    # repeats in a lax.fori_loop (weights indexed dynamically) to bound live ranges.
    for l, dil in enumerate(dilations):                    # static unroll over the stack
        pad = dil * (K - 1) // 2

        # ---- in_seq_layer: dilated "same" conv fused into ONE MXU matmul ----
        # (bias dropped: it cancels in the non-affine InstanceNorm below)
        xpad_sc[:, pad_left:pad_left + T, :] = x.astype(cdt)        # aligned centre write
        for j in range(K):                                          # stage K shifted taps
            off = pad_left - pad + j * dil                          # static per-tap offset
            xtaps_sc[:, :, j * Cr:(j + 1) * Cr] = xpad_sc[:, off:off + T, :]
        gate_pre = jnp.dot(xtaps_sc[...].reshape(Bb * T, K * Cr), w_in_ref[l],
                           preferred_element_type=jnp.float32)
        gate = _instance_norm_time(gate_pre.reshape(Bb, T, 2 * G))

        # ---- in_cond_layer (MLP precomputed in the wrapper), broadcast over time ----
        gate = gate + h_ref[:, l:l + 1, :]                          # (Bb,T,2G) + (Bb,1,2G)

        # ---- gating on the bf16 VPU/EUP path (plain f32 when compute_dtype=float32) ----
        gate_c = gate.astype(cdt)
        gated = jax.nn.sigmoid(gate_c[..., G:]) * jnp.tanh(gate_c[..., :G])   # (Bb,T,G)

        # ---- fused residual|skip 1x1 conv + InstanceNorm (single MXU push) ----
        rs = jnp.dot(gated.reshape(Bb * T, G), w_rs_ref[l],
                     preferred_element_type=jnp.float32)
        rs = _instance_norm_time(rs.reshape(Bb, T, Cr + Cs))

        x = x + rs[..., :Cr]                               # residual stream stays f32/VMEM
        skip_sc[...] += rs[..., Cr:]

    # Single lane-dense NCW store per grid step: (Bb, Cs, T) puts time on the 128 lanes,
    # so production T (a multiple of 128) stores unmasked and no wrapper transpose is needed.
    skip_ref[...] = jnp.transpose(skip_sc[...], (0, 2, 1))


def wavenet_like_stack(seq_ncw, cond, params, *, gate_dim, kernel_size, dilations,
                       block_batch=8, compute_dtype=jnp.bfloat16,
                       vmem_budget_bytes=48 * 1024 * 1024):
    """seq_ncw: (B, C_res, T), cond: (B, cond_dim). Returns accumulated skip (B, C_skip, T)."""
    B, Cr, T = seq_ncw.shape
    G, K, L = gate_dim, kernel_size, len(dilations)
    Cs = params["w_skip"].shape[-1]
    assert T % 8 == 0, "seq_len must be a multiple of 8 (TPU sublane) for the in-kernel reshapes"
    for d in dilations:
        assert (d * (K - 1)) % 2 == 0, "'same' conv needs dilation*(kernel_size-1) even"

    # ---- conditional MLPs hoisted to XLA: one batched matmul per MLP layer, all cells ----
    c = cond.astype(jnp.float32)
    h = jax.nn.relu(jnp.einsum("bc,lcg->lbg", c, params["w1"], precision=_HIGHEST)
                    + params["b1"][:, None, :])
    h = jax.nn.relu(jnp.einsum("lbg,lgh->lbh", h, params["w2"], precision=_HIGHEST)
                    + params["b2"][:, None, :])
    h = jax.nn.relu(jnp.einsum("lbh,lhk->lbk", h, params["w3"], precision=_HIGHEST)
                    + params["b3"][:, None, :])
    h_all = jnp.transpose(h, (1, 0, 2))                          # (B, L, 2G) f32

    # TODO(synk): DMA seq (and emit skip) in bf16 to halve per-block HBM traffic; kept f32
    # here so the all-f32 correctness path below stays quantization-free end to end.
    x = jnp.transpose(seq_ncw, (0, 2, 1)).astype(jnp.float32)    # (B, T, Cr)

    cbytes = jnp.dtype(compute_dtype).itemsize
    align = 8 if cbytes >= 4 else 16                              # sublane packing of xpad
    pad_max = max(d * (K - 1) // 2 for d in dilations)
    pad_left = (-(-pad_max // align) * align) if pad_max else 0   # aligned centre offset

    # ---- per-sample VMEM footprint: double-buffered blocks + scratch + live temporaries ----
    per_sample = (2 * T * Cr * 4                         # seq input block (x2 buffers)
                  + 2 * L * 2 * G * 4                    # cond-MLP activations block
                  + 2 * Cs * T * 4                       # skip output block
                  + (T + 2 * pad_left) * Cr * cbytes     # xpad scratch
                  + T * K * Cr * cbytes                  # xtaps scratch
                  + T * Cs * 4                           # skip accumulator scratch
                  + 2 * T * 2 * G * 4                    # gate + norm temporaries
                  + T * G * cbytes + T * (Cr + Cs) * 4)  # gated + rs temporaries
    weights_bytes = 2 * (L * K * Cr * 2 * G + L * G * (Cr + Cs)) * cbytes   # double-buffered
    # TODO(synk): pin the constant-index weight specs with pipeline_mode=pl.Buffered(1) (or a
    # one-shot pl.ANY DMA) to reclaim weights_bytes/2 of VMEM for bigger batch blocks.

    Bb = max(1, min(block_batch, B, (vmem_budget_bytes - weights_bytes) // per_sample))
    if B >= 2:
        Bb = max(1, min(Bb, -(-B // 2)))  # guarantee >= 2 grid steps so megacore can split them
    B_pad = -(-B // Bb) * Bb
    if B_pad != B:                        # pad batch so the grid divides evenly (rows discarded)
        x = jnp.pad(x, ((0, B_pad - B), (0, 0), (0, 0)))
        h_all = jnp.pad(h_all, ((0, B_pad - B), (0, 0), (0, 0)))

    # ---- weights: fused conv taps (L, K*Cr, 2G) and fused res|skip (L, G, Cr+Cs) ----
    w_in = params["w_in"].reshape(L, K * Cr, 2 * G).astype(compute_dtype)
    w_rs = jnp.concatenate([params["w_res"], params["w_skip"]], axis=-1).astype(compute_dtype)
    # NOTE: b_in / b_res / b_skip are intentionally NOT passed: a per-channel constant
    # cancels exactly inside the non-affine InstanceNorm that immediately follows it.

    est_vmem = int(weights_bytes + Bb * per_sample)
    vmem_limit = int(min(max(2 * est_vmem, 32 * 1024 * 1024), 64 * 1024 * 1024))

    kernel = functools.partial(
        _wavenet_stack_kernel, gate_dim=G, residual_dim=Cr, skip_dim=Cs,
        kernel_size=K, dilations=tuple(dilations), seq_len=T,
        pad_left=pad_left, block_batch=Bb)

    cost = pl.CostEstimate(
        flops=int(2 * B_pad * T * L * (K * Cr * 2 * G + G * (Cr + Cs))),
        transcendentals=int(2 * B_pad * T * L * G),
        bytes_accessed=int(B_pad * T * Cr * 4 + B_pad * Cs * T * 4 + B_pad * L * 2 * G * 4
                           + (L * K * Cr * 2 * G + L * G * (Cr + Cs)) * cbytes))

    skip = pl.pallas_call(
        kernel,
        out_shape=jax.ShapeDtypeStruct((B_pad, Cs, T), jnp.float32),   # NCW, lane-dense in T
        grid_spec=pltpu.PrefetchScalarGridSpec(
            num_scalar_prefetch=0,
            grid=(B_pad // Bb,),
            in_specs=[
                pl.BlockSpec((Bb, L, 2 * G), lambda b: (b, 0, 0)),        # cond activations
                pl.BlockSpec((Bb, T, Cr), lambda b: (b, 0, 0)),           # residual stream input
                pl.BlockSpec((L, K * Cr, 2 * G), lambda b: (0, 0, 0)),    # fused conv weights
                pl.BlockSpec((L, G, Cr + Cs), lambda b: (0, 0, 0)),       # fused res|skip weights
            ],
            out_specs=pl.BlockSpec((Bb, Cs, T), lambda b: (b, 0, 0)),
            scratch_shapes=[
                pltpu.VMEM((Bb, T + 2 * pad_left, Cr), compute_dtype),    # zero-padded stream
                pltpu.VMEM((Bb, T, K * Cr), compute_dtype),               # staged conv taps
                pltpu.VMEM((Bb, T, Cs), jnp.float32),                     # skip accumulator
            ],
        ),
        compiler_params=pltpu.CompilerParams(
            dimension_semantics=("parallel",),
            vmem_limit_bytes=vmem_limit),
        cost_estimate=cost,
        # TODO(synk): for long production sequences add a T-tiling grid axis with a two-pass
        # InstanceNorm (accumulate per-channel sum/sum-sq, then normalize) so activation
        # blocks stay inside v7x's 64 MiB VMEM.
    )(h_all, x, w_in, w_rs)

    return skip[:B]                                                  # already (B, Cs, T) NCW


# ----------------------- parameter init (deterministic, in-script) -----------------------
def init_params(key, residual_dim, gate_dim, skip_dim, cond_dim, kernel_size, dilations):
    L = len(dilations)
    Cr, G, Cs, K = residual_dim, gate_dim, skip_dim, kernel_size
    ks = jax.random.split(key, 9)

    def xavier_conv(k, n, c_out, c_in, ksz):
        bound = float(np.sqrt(6.0 / (c_in * ksz + c_out * ksz)))
        return jax.random.uniform(k, (n, c_out, c_in, ksz), jnp.float32, -bound, bound)

    def kaiming_lin(k, n, c_in, c_out):     # torch kaiming_uniform on (out,in): bound=sqrt(6/fan_in)
        bound = float(np.sqrt(6.0 / c_in))
        return jax.random.uniform(k, (n, c_in, c_out), jnp.float32, -bound, bound)

    w_in_t = xavier_conv(ks[0], L, 2 * G, Cr, K)     # torch layout (L, out, in, k)
    w_res_t = xavier_conv(ks[1], L, Cr, G, 1)
    w_skip_t = xavier_conv(ks[2], L, Cs, G, 1)

    return {
        # kernel-layout conv weights: (L, K, C_in, C_out)
        "w_in": jnp.transpose(w_in_t, (0, 3, 2, 1)),
        "w_res": jnp.transpose(w_res_t, (0, 3, 2, 1))[:, 0],     # (L, G, Cr)
        "w_skip": jnp.transpose(w_skip_t, (0, 3, 2, 1))[:, 0],   # (L, G, Cs)
        # conv biases: used ONLY by the reference (they cancel in the non-affine norms)
        "b_in": jax.random.uniform(ks[3], (L, 2 * G), jnp.float32, -0.1, 0.1),
        "b_res": jax.random.uniform(ks[4], (L, Cr), jnp.float32, -0.1, 0.1),
        "b_skip": jax.random.uniform(ks[5], (L, Cs), jnp.float32, -0.1, 0.1),
        # per-cell conditional MLP (in, out layout; torch fills biases with 0.01)
        "w1": kaiming_lin(ks[6], L, cond_dim, G), "b1": jnp.full((L, G), 0.01, jnp.float32),
        "w2": kaiming_lin(ks[7], L, G, G),        "b2": jnp.full((L, G), 0.01, jnp.float32),
        "w3": kaiming_lin(ks[8], L, G, 2 * G),    "b3": jnp.full((L, 2 * G), 0.01, jnp.float32),
    }


# ----------------------- pure-JAX reference (mirrors torch Stack.forward) -----------------------
def ref_forward(seq_ncw, cond, params, *, gate_dim, kernel_size, dilations,
                compute_dtype=jnp.bfloat16):
    """Mirrors torch WaveNetLikeStack.forward. Matmul operands and the gate entering the
    sigmoid/tanh gating are cast to `compute_dtype` (f32 accumulation everywhere) to match
    the kernel's MXU / bf16-EUP precision; with compute_dtype=float32 this is exactly the
    torch f32 computation. The redundant conv biases ARE applied here, demonstrating that
    dropping them inside the kernel is exact."""
    B, Cr, T = seq_ncw.shape
    G, K = gate_dim, kernel_size
    Cs = params["w_skip"].shape[-1]

    def inorm(y):  # (B, T, C): normalize over time
        mean = jnp.mean(y, axis=1, keepdims=True)
        var = jnp.mean(jnp.square(y - mean), axis=1, keepdims=True)
        return (y - mean) * jax.lax.rsqrt(var + EPS)

    x = jnp.transpose(seq_ncw, (0, 2, 1)).astype(jnp.float32)
    skip_total = jnp.zeros((B, T, Cs), jnp.float32)
    for l, dil in enumerate(dilations):
        pad = dil * (K - 1) // 2
        # in_cond_layer
        h = jax.nn.relu(jnp.einsum("bc,cg->bg", cond, params["w1"][l], precision=_HIGHEST)
                        + params["b1"][l])
        h = jax.nn.relu(jnp.einsum("bg,gh->bh", h, params["w2"][l], precision=_HIGHEST)
                        + params["b2"][l])
        h = jax.nn.relu(jnp.einsum("bh,hk->bk", h, params["w3"][l], precision=_HIGHEST)
                        + params["b3"][l])                                      # (B, 2G)
        # in_seq_layer: dilated "same" conv (+bias) + InstanceNorm
        xpad = jnp.pad(x, ((0, 0), (pad, pad), (0, 0))).astype(compute_dtype)
        conv = jnp.zeros((B, T, 2 * G), jnp.float32)
        for j in range(K):
            conv = conv + jnp.einsum("btc,cg->btg", xpad[:, j * dil:j * dil + T, :],
                                     params["w_in"][l, j].astype(compute_dtype),
                                     preferred_element_type=jnp.float32, precision=_HIGHEST)
        gate = inorm(conv + params["b_in"][l]) + h[:, None, :]
        gate_c = gate.astype(compute_dtype)               # same quantization point as the kernel
        gated = jax.nn.sigmoid(gate_c[..., G:]) * jnp.tanh(gate_c[..., :G])
        res = inorm(jnp.einsum("btg,gc->btc", gated, params["w_res"][l].astype(compute_dtype),
                               preferred_element_type=jnp.float32, precision=_HIGHEST)
                    + params["b_res"][l])
        skp = inorm(jnp.einsum("btg,gc->btc", gated, params["w_skip"][l].astype(compute_dtype),
                               preferred_element_type=jnp.float32, precision=_HIGHEST)
                    + params["b_skip"][l])
        x = x + res
        skip_total = skip_total + skp
    return jnp.transpose(skip_total, (0, 2, 1))     # (B, Cs, T)


if __name__ == "__main__":
    B, residual_dim, gate_dim, skip_dim, cond_dim, T = 4, 8, 16, 8, 16, 16
    kernel_size, dilation_steps, dilation_repeats = 3, 3, 2
    dilations = tuple(2 ** s for _ in range(dilation_repeats) for s in range(dilation_steps))

    key = jax.random.PRNGKey(0)
    k_seq, k_cond, k_par = jax.random.split(key, 3)
    seq = jax.random.normal(k_seq, (B, residual_dim, T), jnp.float32)   # NCW like PyTorch
    cond = jax.random.normal(k_cond, (B, cond_dim), jnp.float32)
    params = init_params(k_par, residual_dim, gate_dim, skip_dim, cond_dim,
                         kernel_size, dilations)

    run = functools.partial(wavenet_like_stack, gate_dim=gate_dim, kernel_size=kernel_size,
                            dilations=dilations, block_batch=2)
    ref = functools.partial(ref_forward, gate_dim=gate_dim, kernel_size=kernel_size,
                            dilations=dilations)

    # 1) Strict all-f32 check: no low-precision casts anywhere, so kernel-vs-reference
    #    differences are only reduction-order / Mosaic-vs-XLA transcendental ulps; this is
    #    the real correctness gate and also proves the bias-under-InstanceNorm cancellation.
    skip_f32 = jax.jit(functools.partial(run, compute_dtype=jnp.float32))(seq, cond, params)
    jax.block_until_ready(skip_f32)
    ref_f32 = ref(seq, cond, params, compute_dtype=jnp.float32)
    np.testing.assert_allclose(np.asarray(skip_f32), np.asarray(ref_f32), rtol=1e-4, atol=1e-4)

    # 2) Production-precision path (bf16 MXU operands + bf16 gating). The reference applies
    #    the same bf16 casts, so the loose tolerance only absorbs bf16 rounding-point /
    #    transcendental-implementation differences cascading through the stack.
    skip_bf16 = jax.jit(functools.partial(run, compute_dtype=jnp.bfloat16))(seq, cond, params)
    jax.block_until_ready(skip_bf16)
    ref_bf16 = ref(seq, cond, params, compute_dtype=jnp.bfloat16)
    np.testing.assert_allclose(np.asarray(skip_bf16), np.asarray(ref_bf16), rtol=3e-2, atol=3e-2)

    print("KERNEL_OK")
</pallas_src>

<mosaic_0001>
module attributes {stable_mosaic.version = 11 : i64} {
  func.func @_wavenet_stack_kernel(%arg0: i32, %arg1: memref<2x6x32xf32, #tpu.memory_space<vmem>>, %arg2: memref<2x16x8xf32, #tpu.memory_space<vmem>>, %arg3: memref<6x24x32xf32, #tpu.memory_space<vmem>>, %arg4: memref<6x16x16xf32, #tpu.memory_space<vmem>>, %arg5: memref<2x8x16xf32, #tpu.memory_space<vmem>>, %arg6: memref<2x32x8xf32, #tpu.memory_space<vmem>>, %arg7: memref<2x16x24xf32, #tpu.memory_space<vmem>>, %arg8: memref<2x16x8xf32, #tpu.memory_space<vmem>>) attributes {dimension_semantics = [#tpu.dimension_semantics<parallel>], iteration_bounds = array<i64: 2>, scalar_prefetch = 0 : i64, scratch_operands = 3 : i64, tpu.core_type = #tpu.core_type<tc>, window_params = [{transform_indices = @transform_0, window_bounds = array<i64: 2, 6, 32>}, {transform_indices = @transform_1, window_bounds = array<i64: 2, 16, 8>}, {pipeline_mode = #tpu.pipeline_mode<synchronous>, transform_indices = @transform_2, window_bounds = array<i64: 6, 24, 32>}, {pipeline_mode = #tpu.pipeline_mode<synchronous>, transform_indices = @transform_3, window_bounds = array<i64: 6, 16, 16>}, {transform_indices = @transform_4, window_bounds = array<i64: 2, 8, 16>}]} {
    %cst = arith.constant 0.000000e+00 : f32
    %0 = vector.broadcast %cst : f32 to vector<2x8x8xf32>
    %c0 = arith.constant 0 : index
    %c0_0 = arith.constant 0 : index
    %c0_1 = arith.constant 0 : index
    %1 = vector.load %arg6[%c0, %c0_0, %c0_1] : memref<2x32x8xf32, #tpu.memory_space<vmem>>, vector<2x8x8xf32>
    tpu.vector_store %arg6[%c0, %c0_0, %c0_1], %0 {strides = array<i32>} : memref<2x32x8xf32, #tpu.memory_space<vmem>>, vector<2x8x8xf32>,
    %cst_2 = arith.constant 0.000000e+00 : f32
    %2 = vector.broadcast %cst_2 : f32 to vector<2x8x8xf32>
    %c0_3 = arith.constant 0 : index
    %c24 = arith.constant 24 : index
    %c0_4 = arith.constant 0 : index
    %3 = vector.load %arg6[%c0_3, %c24, %c0_4] : memref<2x32x8xf32, #tpu.memory_space<vmem>>, vector<2x8x8xf32>
    tpu.vector_store %arg6[%c0_3, %c24, %c0_4], %2 {strides = array<i32>} : memref<2x32x8xf32, #tpu.memory_space<vmem>>, vector<2x8x8xf32>,
    %cst_5 = arith.constant 0.000000e+00 : f32
    %4 = vector.broadcast %cst_5 : f32 to vector<2x16x8xf32>
    %c0_6 = arith.constant 0 : index
    %c0_7 = arith.constant 0 : index
    %c0_8 = arith.constant 0 : index
    %5 = vector.load %arg8[%c0_6, %c0_7, %c0_8] : memref<2x16x8xf32, #tpu.memory_space<vmem>>, vector<2x16x8xf32>
    tpu.vector_store %arg8[%c0_6, %c0_7, %c0_8], %4 {strides = array<i32>} : memref<2x16x8xf32, #tpu.memory_space<vmem>>, vector<2x16x8xf32>,
    %c0_9 = arith.constant 0 : index
    %c0_10 = arith.constant 0 : index
    %c0_11 = arith.constant 0 : index
    %6 = vector.load %arg2[%c0_9, %c0_10, %c0_11] : memref<2x16x8xf32, #tpu.memory_space<vmem>>, vector<2x16x8xf32>
    %c0_12 = arith.constant 0 : index
    %c8 = arith.constant 8 : index
    %c0_13 = arith.constant 0 : index
    %7 = vector.load %arg6[%c0_12, %c8, %c0_13] : memref<2x32x8xf32, #tpu.memory_space<vmem>>, vector<2x16x8xf32>
    tpu.vector_store %arg6[%c0_12, %c8, %c0_13], %6 {strides = array<i32>} : memref<2x32x8xf32, #tpu.memory_space<vmem>>, vector<2x16x8xf32>,
    %c0_14 = arith.constant 0 : index
    %c7 = arith.constant 7 : index
    %c0_15 = arith.constant 0 : index
    %8 = vector.load %arg6[%c0_14, %c7, %c0_15] : memref<2x32x8xf32, #tpu.memory_space<vmem>>, vector<2x16x8xf32>
    %c0_16 = arith.constant 0 : index
    %c0_17 = arith.constant 0 : index
    %c0_18 = arith.constant 0 : index
    %9 = vector.load %arg7[%c0_16, %c0_17, %c0_18] : memref<2x16x24xf32, #tpu.memory_space<vmem>>, vector<2x16x8xf32>
    tpu.vector_store %arg7[%c0_16, %c0_17, %c0_18], %8 {strides = array<i32>} : memref<2x16x24xf32, #tpu.memory_space<vmem>>, vector<2x16x8xf32>,
    %c0_19 = arith.constant 0 : index
    %c8_20 = arith.constant 8 : index
    %c0_21 = arith.constant 0 : index
    %10 = vector.load %arg6[%c0_19, %c8_20, %c0_21] : memref<2x32x8xf32, #tpu.memory_space<vmem>>, vector<2x16x8xf32>
    %c0_22 = arith.constant 0 : index
    %c0_23 = arith.constant 0 : index
    %c8_24 = arith.constant 8 : index
    %11 = vector.load %arg7[%c0_22, %c0_23, %c8_24] : memref<2x16x24xf32, #tpu.memory_space<vmem>>, vector<2x16x8xf32>
    tpu.vector_store %arg7[%c0_22, %c0_23, %c8_24], %10 {strides = array<i32>} : memref<2x16x24xf32, #tpu.memory_space<vmem>>, vector<2x16x8xf32>,
    %c0_25 = arith.constant 0 : index
    %c9 = arith.constant 9 : index
    %c0_26 = arith.constant 0 : index
    %12 = vector.load %arg6[%c0_25, %c9, %c0_26] : memref<2x32x8xf32, #tpu.memory_space<vmem>>, vector<2x16x8xf32>
    %c0_27 = arith.constant 0 : index
    %c0_28 = arith.constant 0 : index
    %c16 = arith.constant 16 : index
    %13 = vector.load %arg7[%c0_27, %c0_28, %c16] : memref<2x16x24xf32, #tpu.memory_space<vmem>>, vector<2x16x8xf32>
    tpu.vector_store %arg7[%c0_27, %c0_28, %c16], %12 {strides = array<i32>} : memref<2x16x24xf32, #tpu.memory_space<vmem>>, vector<2x16x8xf32>,
    %c0_29 = arith.constant 0 : index
    %c0_30 = arith.constant 0 : index
    %c0_31 = arith.constant 0 : index
    %14 = vector.load %arg7[%c0_29, %c0_30, %c0_31] : memref<2x16x24xf32, #tpu.memory_space<vmem>>, vector<2x16x24xf32>
    %15 = vector.shape_cast %14 : vector<2x16x24xf32> to vector<32x24xf32>
    %c0_32 = arith.constant 0 : index
    %c0_33 = arith.constant 0 : index
    %c0_34 = arith.constant 0 : index
    %16 = vector.load %arg3[%c0_32, %c0_33, %c0_34] : memref<6x24x32xf32, #tpu.memory_space<vmem>>, vector<1x24x32xf32>
    %17 = vector.shape_cast %16 : vector<1x24x32xf32> to vector<24x32xf32>
    %cst_35 = arith.constant dense<0.000000e+00> : vector<32x32xf32>
    %18 = tpu.matmul %15, %17, %cst_35 {dimension_numbers = #tpu.dot_dimension_numbers<[1], [0], [0], [1], [0, 0, 1, 1], [], []>} : vector<32x24xf32>, vector<24x32xf32>, vector<32x32xf32> -> vector<32x32xf32>
    %19 = vector.shape_cast %18 : vector<32x32xf32> to vector<2x16x32xf32>
    %cst_36 = arith.constant dense<0.000000e+00> : vector<2x32xf32>
    %20 = vector.multi_reduction <add>, %19, %cst_36 [1] : vector<2x16x32xf32> to vector<2x32xf32>
    %21 = vector.shape_cast %20 : vector<2x32xf32> to vector<2x1x32xf32>
    %cst_37 = arith.constant 1.600000e+01 : f32
    %22 = vector.broadcast %cst_37 : f32 to vector<2x1x32xf32>
    %23 = arith.divf %21, %22 : vector<2x1x32xf32>
    %24 = vector.broadcast %23 : vector<2x1x32xf32> to vector<2x16x32xf32>
    %25 = arith.subf %19, %24 : vector<2x16x32xf32>
    %26 = arith.mulf %25, %25 : vector<2x16x32xf32>
    %cst_38 = arith.constant dense<0.000000e+00> : vector<2x32xf32>
    %27 = vector.multi_reduction <add>, %26, %cst_38 [1] : vector<2x16x32xf32> to vector<2x32xf32>
    %28 = vector.shape_cast %27 : vector<2x32xf32> to vector<2x1x32xf32>
    %cst_39 = arith.constant 1.600000e+01 : f32
    %29 = vector.broadcast %cst_39 : f32 to vector<2x1x32xf32>
    %30 = arith.divf %28, %29 : vector<2x1x32xf32>
    %31 = vector.broadcast %23 : vector<2x1x32xf32> to vector<2x16x32xf32>
    %32 = arith.subf %19, %31 : vector<2x16x32xf32>
    %cst_40 = arith.constant 9.99999974E-6 : f32
    %33 = vector.broadcast %cst_40 : f32 to vector<2x1x32xf32>
    %34 = arith.addf %30, %33 : vector<2x1x32xf32>
    %35 = math.rsqrt %34 : vector<2x1x32xf32>
    %36 = vector.broadcast %35 : vector<2x1x32xf32> to vector<2x16x32xf32>
    %37 = arith.mulf %32, %36 : vector<2x16x32xf32>
    %c0_41 = arith.constant 0 : index
    %c0_42 = arith.constant 0 : index
    %c0_43 = arith.constant 0 : index
    %38 = vector.load %arg1[%c0_41, %c0_42, %c0_43] : memref<2x6x32xf32, #tpu.memory_space<vmem>>, vector<2x1x32xf32>
    %39 = vector.broadcast %38 : vector<2x1x32xf32> to vector<2x16x32xf32>
    %40 = arith.addf %37, %39 : vector<2x16x32xf32>
    %41 = vector.extract_strided_slice %40 {offsets = [0, 0, 16], sizes = [2, 16, 16], strides = [1, 1, 1]} : vector<2x16x32xf32> to vector<2x16x16xf32>
    %42 = arith.negf %41 : vector<2x16x16xf32>
    %43 = math.exp %42 : vector<2x16x16xf32>
    %cst_44 = arith.constant 1.000000e+00 : f32
    %44 = vector.broadcast %cst_44 : f32 to vector<2x16x16xf32>
    %45 = arith.addf %44, %43 : vector<2x16x16xf32>
    %46 = arith.divf %44, %45 : vector<2x16x16xf32>
    %47 = vector.extract_strided_slice %40 {offsets = [0, 0, 0], sizes = [2, 16, 16], strides = [1, 1, 1]} : vector<2x16x32xf32> to vector<2x16x16xf32>
    %48 = math.tanh %47 : vector<2x16x16xf32>
    %49 = arith.mulf %46, %48 : vector<2x16x16xf32>
    %50 = vector.shape_cast %49 : vector<2x16x16xf32> to vector<32x16xf32>
    %c0_45 = arith.constant 0 : index
    %c0_46 = arith.constant 0 : index
    %c0_47 = arith.constant 0 : index
    %51 = vector.load %arg4[%c0_45, %c0_46, %c0_47] : memref<6x16x16xf32, #tpu.memory_space<vmem>>, vector<1x16x16xf32>
    %52 = vector.shape_cast %51 : vector<1x16x16xf32> to vector<16x16xf32>
    %cst_48 = arith.constant dense<0.000000e+00> : vector<32x16xf32>
    %53 = tpu.matmul %50, %52, %cst_48 {dimension_numbers = #tpu.dot_dimension_numbers<[1], [0], [0], [1], [0, 0, 1, 1], [], []>} : vector<32x16xf32>, vector<16x16xf32>, vector<32x16xf32> -> vector<32x16xf32>
    %54 = vector.shape_cast %53 : vector<32x16xf32> to vector<2x16x16xf32>
    %cst_49 = arith.constant dense<0.000000e+00> : vector<2x16xf32>
    %55 = vector.multi_reduction <add>, %54, %cst_49 [1] : vector<2x16x16xf32> to vector<2x16xf32>
    %56 = vector.shape_cast %55 : vector<2x16xf32> to vector<2x1x16xf32>
    %cst_50 = arith.constant 1.600000e+01 : f32
    %57 = vector.broadcast %cst_50 : f32 to vector<2x1x16xf32>
    %58 = arith.divf %56, %57 : vector<2x1x16xf32>
    %59 = vector.broadcast %58 : vector<2x1x16xf32> to vector<2x16x16xf32>
    %60 = arith.subf %54, %59 : vector<2x16x16xf32>
    %61 = arith.mulf %60, %60 : vector<2x16x16xf32>
    %cst_51 = arith.constant dense<0.000000e+00> : vector<2x16xf32>
    %62 = vector.multi_reduction <add>, %61, %cst_51 [1] : vector<2x16x16xf32> to vector<2x16xf32>
    %63 = vector.shape_cast %62 : vector<2x16xf32> to vector<2x1x16xf32>
    %cst_52 = arith.constant 1.600000e+01 : f32
    %64 = vector.broadcast %cst_52 : f32 to vector<2x1x16xf32>
    %65 = arith.divf %63, %64 : vector<2x1x16xf32>
    %66 = vector.broadcast %58 : vector<2x1x16xf32> to vector<2x16x16xf32>
    %67 = arith.subf %54, %66 : vector<2x16x16xf32>
    %cst_53 = arith.constant 9.99999974E-6 : f32
    %68 = vector.broadcast %cst_53 : f32 to vector<2x1x16xf32>
    %69 = arith.addf %65, %68 : vector<2x1x16xf32>
    %70 = math.rsqrt %69 : vector<2x1x16xf32>
    %71 = vector.broadcast %70 : vector<2x1x16xf32> to vector<2x16x16xf32>
    %72 = arith.mulf %67, %71 : vector<2x16x16xf32>
    %73 = vector.extract_strided_slice %72 {offsets = [0, 0, 0], sizes = [2, 16, 8], strides = [1, 1, 1]} : vector<2x16x16xf32> to vector<2x16x8xf32>
    %74 = arith.addf %6, %73 : vector<2x16x8xf32>
    %c0_54 = arith.constant 0 : index
    %c0_55 = arith.constant 0 : index
    %c0_56 = arith.constant 0 : index
    %75 = vector.load %arg8[%c0_54, %c0_55, %c0_56] : memref<2x16x8xf32, #tpu.memory_space<vmem>>, vector<2x16x8xf32>
    %76 = vector.extract_strided_slice %72 {offsets = [0, 0, 8], sizes = [2, 16, 8], strides = [1, 1, 1]} : vector<2x16x16xf32> to vector<2x16x8xf32>
    %77 = arith.addf %75, %76 : vector<2x16x8xf32>
    %c0_57 = arith.constant 0 : index
    %c0_58 = arith.constant 0 : index
    %c0_59 = arith.constant 0 : index
    %78 = vector.load %arg8[%c0_57, %c0_58, %c0_59] : memref<2x16x8xf32, #tpu.memory_space<vmem>>, vector<2x16x8xf32>
    tpu.vector_store %arg8[%c0_57, %c0_58, %c0_59], %77 {strides = array<i32>} : memref<2x16x8xf32, #tpu.memory_space<vmem>>, vector<2x16x8xf32>,
    %c0_60 = arith.constant 0 : index
    %c8_61 = arith.constant 8 : index
    %c0_62 = arith.constant 0 : index
    %79 = vector.load %arg6[%c0_60, %c8_61, %c0_62] : memref<2x32x8xf32, #tpu.memory_space<vmem>>, vector<2x16x8xf32>
    tpu.vector_store %arg6[%c0_60, %c8_61, %c0_62], %74 {strides = array<i32>} : memref<2x32x8xf32, #tpu.memory_space<vmem>>, vector<2x16x8xf32>,
    %c0_63 = arith.constant 0 : index
    %c6 = arith.constant 6 : index
    %c0_64 = arith.constant 0 : index
    %80 = vector.load %arg6[%c0_63, %c6, %c0_64] : memref<2x32x8xf32, #tpu.memory_space<vmem>>, vector<2x16x8xf32>
    %c0_65 = arith.constant 0 : index
    %c0_66 = arith.constant 0 : index
    %c0_67 = arith.constant 0 : index
    %81 = vector.load %arg7[%c0_65, %c0_66, %c0_67] : memref<2x16x24xf32, #tpu.memory_space<vmem>>, vector<2x16x8xf32>
    tpu.vector_store %arg7[%c0_65, %c0_66, %c0_67], %80 {strides = array<i32>} : memref<2x16x24xf32, #tpu.memory_space<vmem>>, vector<2x16x8xf32>,
    %c0_68 = arith.constant 0 : index
    %c8_69 = arith.constant 8 : index
    %c0_70 = arith.constant 0 : index
    %82 = vector.load %arg6[%c0_68, %c8_69, %c0_70] : memref<2x32x8xf32, #tpu.memory_space<vmem>>, vector<2x16x8xf32>
    %c0_71 = arith.constant 0 : index
    %c0_72 = arith.constant 0 : index
    %c8_73 = arith.constant 8 : index
    %83 = vector.load %arg7[%c0_71, %c0_72, %c8_73] : memref<2x16x24xf32, #tpu.memory_space<vmem>>, vector<2x16x8xf32>
    tpu.vector_store %arg7[%c0_71, %c0_72, %c8_73], %82 {strides = array<i32>} : memref<2x16x24xf32, #tpu.memory_space<vmem>>, vector<2x16x8xf32>,
    %c0_74 = arith.constant 0 : index
    %c10 = arith.constant 10 : index
    %c0_75 = arith.constant 0 : index
    %84 = vector.load %arg6[%c0_74, %c10, %c0_75] : memref<2x32x8xf32, #tpu.memory_space<vmem>>, vector<2x16x8xf32>
    %c0_76 = arith.constant 0 : index
    %c0_77 = arith.constant 0 : index
    %c16_78 = arith.constant 16 : index
    %85 = vector.load %arg7[%c0_76, %c0_77, %c16_78] : memref<2x16x24xf32, #tpu.memory_space<vmem>>, vector<2x16x8xf32>
    tpu.vector_store %arg7[%c0_76, %c0_77, %c16_78], %84 {strides = array<i32>} : memref<2x16x24xf32, #tpu.memory_space<vmem>>, vector<2x16x8xf32>,
    %c0_79 = arith.constant 0 : index
    %c0_80 = arith.constant 0 : index
    %c0_81 = arith.constant 0 : index
    %86 = vector.load %arg7[%c0_79, %c0_80, %c0_81] : memref<2x16x24xf32, #tpu.memory_space<vmem>>, vector<2x16x24xf32>
    %87 = vector.shape_cast %86 : vector<2x16x24xf32> to vector<32x24xf32>
    %c1 = arith.constant 1 : index
    %c0_82 = arith.constant 0 : index
    %c0_83 = arith.constant 0 : index
    %88 = vector.load %arg3[%c1, %c0_82, %c0_83] : memref<6x24x32xf32, #tpu.memory_space<vmem>>, vector<1x24x32xf32>
    %89 = vector.shape_cast %88 : vector<1x24x32xf32> to vector<24x32xf32>
    %cst_84 = arith.constant dense<0.000000e+00> : vector<32x32xf32>
    %90 = tpu.matmul %87, %89, %cst_84 {dimension_numbers = #tpu.dot_dimension_numbers<[1], [0], [0], [1], [0, 0, 1, 1], [], []>} : vector<32x24xf32>, vector<24x32xf32>, vector<32x32xf32> -> vector<32x32xf32>
    %91 = vector.shape_cast %90 : vector<32x32xf32> to vector<2x16x32xf32>
    %cst_85 = arith.constant dense<0.000000e+00> : vector<2x32xf32>
    %92 = vector.multi_reduction <add>, %91, %cst_85 [1] : vector<2x16x32xf32> to vector<2x32xf32>
    %93 = vector.shape_cast %92 : vector<2x32xf32> to vector<2x1x32xf32>
    %cst_86 = arith.constant 1.600000e+01 : f32
    %94 = vector.broadcast %cst_86 : f32 to vector<2x1x32xf32>
    %95 = arith.divf %93, %94 : vector<2x1x32xf32>
    %96 = vector.broadcast %95 : vector<2x1x32xf32> to vector<2x16x32xf32>
    %97 = arith.subf %91, %96 : vector<2x16x32xf32>
    %98 = arith.mulf %97, %97 : vector<2x16x32xf32>
    %cst_87 = arith.constant dense<0.000000e+00> : vector<2x32xf32>
    %99 = vector.multi_reduction <add>, %98, %cst_87 [1] : vector<2x16x32xf32> to vector<2x32xf32>
    %100 = vector.shape_cast %99 : vector<2x32xf32> to vector<2x1x32xf32>
    %cst_88 = arith.constant 1.600000e+01 : f32
    %101 = vector.broadcast %cst_88 : f32 to vector<2x1x32xf32>
    %102 = arith.divf %100, %101 : vector<2x1x32xf32>
    %103 = vector.broadcast %95 : vector<2x1x32xf32> to vector<2x16x32xf32>
    %104 = arith.subf %91, %103 : vector<2x16x32xf32>
    %cst_89 = arith.constant 9.99999974E-6 : f32
    %105 = vector.broadcast %cst_89 : f32 to vector<2x1x32xf32>
    %106 = arith.addf %102, %105 : vector<2x1x32xf32>
    %107 = math.rsqrt %106 : vector<2x1x32xf32>
    %108 = vector.broadcast %107 : vector<2x1x32xf32> to vector<2x16x32xf32>
    %109 = arith.mulf %104, %108 : vector<2x16x32xf32>
    %c0_90 = arith.constant 0 : index
    %c1_91 = arith.constant 1 : index
    %c0_92 = arith.constant 0 : index
    %110 = vector.load %arg1[%c0_90, %c1_91, %c0_92] : memref<2x6x32xf32, #tpu.memory_space<vmem>>, vector<2x1x32xf32>
    %111 = vector.broadcast %110 : vector<2x1x32xf32> to vector<2x16x32xf32>
    %112 = arith.addf %109, %111 : vector<2x16x32xf32>
    %113 = vector.extract_strided_slice %112 {offsets = [0, 0, 16], sizes = [2, 16, 16], strides = [1, 1, 1]} : vector<2x16x32xf32> to vector<2x16x16xf32>
    %114 = arith.negf %113 : vector<2x16x16xf32>
    %115 = math.exp %114 : vector<2x16x16xf32>
    %cst_93 = arith.constant 1.000000e+00 : f32
    %116 = vector.broadcast %cst_93 : f32 to vector<2x16x16xf32>
    %117 = arith.addf %116, %115 : vector<2x16x16xf32>
    %118 = arith.divf %116, %117 : vector<2x16x16xf32>
    %119 = vector.extract_strided_slice %112 {offsets = [0, 0, 0], sizes = [2, 16, 16], strides = [1, 1, 1]} : vector<2x16x32xf32> to vector<2x16x16xf32>
    %120 = math.tanh %119 : vector<2x16x16xf32>
    %121 = arith.mulf %118, %120 : vector<2x16x16xf32>
    %122 = vector.shape_cast %121 : vector<2x16x16xf32> to vector<32x16xf32>
    %c1_94 = arith.constant 1 : index
    %c0_95 = arith.constant 0 : index
    %c0_96 = arith.constant 0 : index
    %123 = vector.load %arg4[%c1_94, %c0_95, %c0_96] : memref<6x16x16xf32, #tpu.memory_space<vmem>>, vector<1x16x16xf32>
    %124 = vector.shape_cast %123 : vector<1x16x16xf32> to vector<16x16xf32>
    %cst_97 = arith.constant dense<0.000000e+00> : vector<32x16xf32>
    %125 = tpu.matmul %122, %124, %cst_97 {dimension_numbers = #tpu.dot_dimension_numbers<[1], [0], [0], [1], [0, 0, 1, 1], [], []>} : vector<32x16xf32>, vector<16x16xf32>, vector<32x16xf32> -> vector<32x16xf32>
    %126 = vector.shape_cast %125 : vector<32x16xf32> to vector<2x16x16xf32>
    %cst_98 = arith.constant dense<0.000000e+00> : vector<2x16xf32>
    %127 = vector.multi_reduction <add>, %126, %cst_98 [1] : vector<2x16x16xf32> to vector<2x16xf32>
    %128 = vector.shape_cast %127 : vector<2x16xf32> to vector<2x1x16xf32>
    %cst_99 = arith.constant 1.600000e+01 : f32
    %129 = vector.broadcast %cst_99 : f32 to vector<2x1x16xf32>
    %130 = arith.divf %128, %129 : vector<2x1x16xf32>
    %131 = vector.broadcast %130 : vector<2x1x16xf32> to vector<2x16x16xf32>
    %132 = arith.subf %126, %131 : vector<2x16x16xf32>
    %133 = arith.mulf %132, %132 : vector<2x16x16xf32>
    %cst_100 = arith.constant dense<0.000000e+00> : vector<2x16xf32>
    %134 = vector.multi_reduction <add>, %133, %cst_100 [1] : vector<2x16x16xf32> to vector<2x16xf32>
    %135 = vector.shape_cast %134 : vector<2x16xf32> to vector<2x1x16xf32>
    %cst_101 = arith.constant 1.600000e+01 : f32
    %136 = vector.broadcast %cst_101 : f32 to vector<2x1x16xf32>
    %137 = arith.divf %135, %136 : vector<2x1x16xf32>
    %138 = vector.broadcast %130 : vector<2x1x16xf32> to vector<2x16x16xf32>
    %139 = arith.subf %126, %138 : vector<2x16x16xf32>
    %cst_102 = arith.constant 9.99999974E-6 : f32
    %140 = vector.broadcast %cst_102 : f32 to vector<2x1x16xf32>
    %141 = arith.addf %137, %140 : vector<2x1x16xf32>
    %142 = math.rsqrt %141 : vector<2x1x16xf32>
    %143 = vector.broadcast %142 : vector<2x1x16xf32> to vector<2x16x16xf32>
    %144 = arith.mulf %139, %143 : vector<2x16x16xf32>
    %145 = vector.extract_strided_slice %144 {offsets = [0, 0, 0], sizes = [2, 16, 8], strides = [1, 1, 1]} : vector<2x16x16xf32> to vector<2x16x8xf32>
    %146 = arith.addf %74, %145 : vector<2x16x8xf32>
    %c0_103 = arith.constant 0 : index
    %c0_104 = arith.constant 0 : index
    %c0_105 = arith.constant 0 : index
    %147 = vector.load %arg8[%c0_103, %c0_104, %c0_105] : memref<2x16x8xf32, #tpu.memory_space<vmem>>, vector<2x16x8xf32>
    %148 = vector.extract_strided_slice %144 {offsets = [0, 0, 8], sizes = [2, 16, 8], strides = [1, 1, 1]} : vector<2x16x16xf32> to vector<2x16x8xf32>
    %149 = arith.addf %147, %148 : vector<2x16x8xf32>
    %c0_106 = arith.constant 0 : index
    %c0_107 = arith.constant 0 : index
    %c0_108 = arith.constant 0 : index
    %150 = vector.load %arg8[%c0_106, %c0_107, %c0_108] : memref<2x16x8xf32, #tpu.memory_space<vmem>>, vector<2x16x8xf32>
    tpu.vector_store %arg8[%c0_106, %c0_107, %c0_108], %149 {strides = array<i32>} : memref<2x16x8xf32, #tpu.memory_space<vmem>>, vector<2x16x8xf32>,
    %c0_109 = arith.constant 0 : index
    %c8_110 = arith.constant 8 : index
    %c0_111 = arith.constant 0 : index
    %151 = vector.load %arg6[%c0_109, %c8_110, %c0_111] : memref<2x32x8xf32, #tpu.memory_space<vmem>>, vector<2x16x8xf32>
    tpu.vector_store %arg6[%c0_109, %c8_110, %c0_111], %146 {strides = array<i32>} : memref<2x32x8xf32, #tpu.memory_space<vmem>>, vector<2x16x8xf32>,
    %c0_112 = arith.constant 0 : index
    %c4 = arith.constant 4 : index
    %c0_113 = arith.constant 0 : index
    %152 = vector.load %arg6[%c0_112, %c4, %c0_113] : memref<2x32x8xf32, #tpu.memory_space<vmem>>, vector<2x16x8xf32>
    %c0_114 = arith.constant 0 : index
    %c0_115 = arith.constant 0 : index
    %c0_116 = arith.constant 0 : index
    %153 = vector.load %arg7[%c0_114, %c0_115, %c0_116] : memref<2x16x24xf32, #tpu.memory_space<vmem>>, vector<2x16x8xf32>
    tpu.vector_store %arg7[%c0_114, %c0_115, %c0_116], %152 {strides = array<i32>} : memref<2x16x24xf32, #tpu.memory_space<vmem>>, vector<2x16x8xf32>,
    %c0_117 = arith.constant 0 : index
    %c8_118 = arith.constant 8 : index
    %c0_119 = arith.constant 0 : index
    %154 = vector.load %arg6[%c0_117, %c8_118, %c0_119] : memref<2x32x8xf32, #tpu.memory_space<vmem>>, vector<2x16x8xf32>
    %c0_120 = arith.constant 0 : index
    %c0_121 = arith.constant 0 : index
    %c8_122 = arith.constant 8 : index
    %155 = vector.load %arg7[%c0_120, %c0_121, %c8_122] : memref<2x16x24xf32, #tpu.memory_space<vmem>>, vector<2x16x8xf32>
    tpu.vector_store %arg7[%c0_120, %c0_121, %c8_122], %154 {strides = array<i32>} : memref<2x16x24xf32, #tpu.memory_space<vmem>>, vector<2x16x8xf32>,
    %c0_123 = arith.constant 0 : index
    %c12 = arith.constant 12 : index
    %c0_124 = arith.constant 0 : index
    %156 = vector.load %arg6[%c0_123, %c12, %c0_124] : memref<2x32x8xf32, #tpu.memory_space<vmem>>, vector<2x16x8xf32>
    %c0_125 = arith.constant 0 : index
    %c0_126 = arith.constant 0 : index
    %c16_127 = arith.constant 16 : index
    %157 = vector.load %arg7[%c0_125, %c0_126, %c16_127] : memref<2x16x24xf32, #tpu.memory_space<vmem>>, vector<2x16x8xf32>
    tpu.vector_store %arg7[%c0_125, %c0_126, %c16_127], %156 {strides = array<i32>} : memref<2x16x24xf32, #tpu.memory_space<vmem>>, vector<2x16x8xf32>,
    %c0_128 = arith.constant 0 : index
    %c0_129 = arith.constant 0 : index
    %c0_130 = arith.constant 0 : index
    %158 = vector.load %arg7[%c0_128, %c0_129, %c0_130] : memref<2x16x24xf32, #tpu.memory_space<vmem>>, vector<2x16x24xf32>
    %159 = vector.shape_cast %158 : vector<2x16x24xf32> to vector<32x24xf32>
    %c2 = arith.constant 2 : index
    %c0_131 = arith.constant 0 : index
    %c0_132 = arith.constant 0 : index
    %160 = vector.load %arg3[%c2, %c0_131, %c0_132] : memref<6x24x32xf32, #tpu.memory_space<vmem>>, vector<1x24x32xf32>
    %161 = vector.shape_cast %160 : vector<1x24x32xf32> to vector<24x32xf32>
    %cst_133 = arith.constant dense<0.000000e+00> : vector<32x32xf32>
    %162 = tpu.matmul %159, %161, %cst_133 {dimension_numbers = #tpu.dot_dimension_numbers<[1], [0], [0], [1], [0, 0, 1, 1], [], []>} : vector<32x24xf32>, vector<24x32xf32>, vector<32x32xf32> -> vector<32x32xf32>
    %163 = vector.shape_cast %162 : vector<32x32xf32> to vector<2x16x32xf32>
    %cst_134 = arith.constant dense<0.000000e+00> : vector<2x32xf32>
    %164 = vector.multi_reduction <add>, %163, %cst_134 [1] : vector<2x16x32xf32> to vector<2x32xf32>
    %165 = vector.shape_cast %164 : vector<2x32xf32> to vector<2x1x32xf32>
    %cst_135 = arith.constant 1.600000e+01 : f32
    %166 = vector.broadcast %cst_135 : f32 to vector<2x1x32xf32>
    %167 = arith.divf %165, %166 : vector<2x1x32xf32>
    %168 = vector.broadcast %167 : vector<2x1x32xf32> to vector<2x16x32xf32>
    %169 = arith.subf %163, %168 : vector<2x16x32xf32>
    %170 = arith.mulf %169, %169 : vector<2x16x32xf32>
    %cst_136 = arith.constant dense<0.000000e+00> : vector<2x32xf32>
    %171 = vector.multi_reduction <add>, %170, %cst_136 [1] : vector<2x16x32xf32> to vector<2x32xf32>
    %172 = vector.shape_cast %171 : vector<2x32xf32> to vector<2x1x32xf32>
    %cst_137 = arith.constant 1.600000e+01 : f32
    %173 = vector.broadcast %cst_137 : f32 to vector<2x1x32xf32>
    %174 = arith.divf %172, %173 : vector<2x1x32xf32>
    %175 = vector.broadcast %167 : vector<2x1x32xf32> to vector<2x16x32xf32>
    %176 = arith.subf %163, %175 : vector<2x16x32xf32>
    %cst_138 = arith.constant 9.99999974E-6 : f32
    %177 = vector.broadcast %cst_138 : f32 to vector<2x1x32xf32>
    %178 = arith.addf %174, %177 : vector<2x1x32xf32>
    %179 = math.rsqrt %178 : vector<2x1x32xf32>
    %180 = vector.broadcast %179 : vector<2x1x32xf32> to vector<2x16x32xf32>
    %181 = arith.mulf %176, %180 : vector<2x16x32xf32>
    %c0_139 = arith.constant 0 : index
    %c2_140 = arith.constant 2 : index
    %c0_141 = arith.constant 0 : index
    %182 = vector.load %arg1[%c0_139, %c2_140, %c0_141] : memref<2x6x32xf32, #tpu.memory_space<vmem>>, vector<2x1x32xf32>
    %183 = vector.broadcast %182 : vector<2x1x32xf32> to vector<2x16x32xf32>
    %184 = arith.addf %181, %183 : vector<2x16x32xf32>
    %185 = vector.extract_strided_slice %184 {offsets = [0, 0, 16], sizes = [2, 16, 16], strides = [1, 1, 1]} : vector<2x16x32xf32> to vector<2x16x16xf32>
    %186 = arith.negf %185 : vector<2x16x16xf32>
    %187 = math.exp %186 : vector<2x16x16xf32>
    %cst_142 = arith.constant 1.000000e+00 : f32
    %188 = vector.broadcast %cst_142 : f32 to vector<2x16x16xf32>
    %189 = arith.addf %188, %187 : vector<2x16x16xf32>
    %190 = arith.divf %188, %189 : vector<2x16x16xf32>
    %191 = vector.extract_strided_slice %184 {offsets = [0, 0, 0], sizes = [2, 16, 16], strides = [1, 1, 1]} : vector<2x16x32xf32> to vector<2x16x16xf32>
    %192 = math.tanh %191 : vector<2x16x16xf32>
    %193 = arith.mulf %190, %192 : vector<2x16x16xf32>
    %194 = vector.shape_cast %193 : vector<2x16x16xf32> to vector<32x16xf32>
    %c2_143 = arith.constant 2 : index
    %c0_144 = arith.constant 0 : index
    %c0_145 = arith.constant 0 : index
    %195 = vector.load %arg4[%c2_143, %c0_144, %c0_145] : memref<6x16x16xf32, #tpu.memory_space<vmem>>, vector<1x16x16xf32>
    %196 = vector.shape_cast %195 : vector<1x16x16xf32> to vector<16x16xf32>
    %cst_146 = arith.constant dense<0.000000e+00> : vector<32x16xf32>
    %197 = tpu.matmul %194, %196, %cst_146 {dimension_numbers = #tpu.dot_dimension_numbers<[1], [0], [0], [1], [0, 0, 1, 1], [], []>} : vector<32x16xf32>, vector<16x16xf32>, vector<32x16xf32> -> vector<32x16xf32>
    %198 = vector.shape_cast %197 : vector<32x16xf32> to vector<2x16x16xf32>
    %cst_147 = arith.constant dense<0.000000e+00> : vector<2x16xf32>
    %199 = vector.multi_reduction <add>, %198, %cst_147 [1] : vector<2x16x16xf32> to vector<2x16xf32>
    %200 = vector.shape_cast %199 : vector<2x16xf32> to vector<2x1x16xf32>
    %cst_148 = arith.constant 1.600000e+01 : f32
    %201 = vector.broadcast %cst_148 : f32 to vector<2x1x16xf32>
    %202 = arith.divf %200, %201 : vector<2x1x16xf32>
    %203 = vector.broadcast %202 : vector<2x1x16xf32> to vector<2x16x16xf32>
    %204 = arith.subf %198, %203 : vector<2x16x16xf32>
    %205 = arith.mulf %204, %204 : vector<2x16x16xf32>
    %cst_149 = arith.constant dense<0.000000e+00> : vector<2x16xf32>
    %206 = vector.multi_reduction <add>, %205, %cst_149 [1] : vector<2x16x16xf32> to vector<2x16xf32>
    %207 = vector.shape_cast %206 : vector<2x16xf32> to vector<2x1x16xf32>
    %cst_150 = arith.constant 1.600000e+01 : f32
    %208 = vector.broadcast %cst_150 : f32 to vector<2x1x16xf32>
    %209 = arith.divf %207, %208 : vector<2x1x16xf32>
    %210 = vector.broadcast %202 : vector<2x1x16xf32> to vector<2x16x16xf32>
    %211 = arith.subf %198, %210 : vector<2x16x16xf32>
    %cst_151 = arith.constant 9.99999974E-6 : f32
    %212 = vector.broadcast %cst_151 : f32 to vector<2x1x16xf32>
    %213 = arith.addf %209, %212 : vector<2x1x16xf32>
    %214 = math.rsqrt %213 : vector<2x1x16xf32>
    %215 = vector.broadcast %214 : vector<2x1x16xf32> to vector<2x16x16xf32>
    %216 = arith.mulf %211, %215 : vector<2x16x16xf32>
    %217 = vector.extract_strided_slice %216 {offsets = [0, 0, 0], sizes = [2, 16, 8], strides = [1, 1, 1]} : vector<2x16x16xf32> to vector<2x16x8xf32>
    %218 = arith.addf %146, %217 : vector<2x16x8xf32>
    %c0_152 = arith.constant 0 : index
    %c0_153 = arith.constant 0 : index
    %c0_154 = arith.constant 0 : index
    %219 = vector.load %arg8[%c0_152, %c0_153, %c0_154] : memref<2x16x8xf32, #tpu.memory_space<vmem>>, vector<2x16x8xf32>
    %220 = vector.extract_strided_slice %216 {offsets = [0, 0, 8], sizes = [2, 16, 8], strides = [1, 1, 1]} : vector<2x16x16xf32> to vector<2x16x8xf32>
    %221 = arith.addf %219, %220 : vector<2x16x8xf32>
    %c0_155 = arith.constant 0 : index
    %c0_156 = arith.constant 0 : index
    %c0_157 = arith.constant 0 : index
    %222 = vector.load %arg8[%c0_155, %c0_156, %c0_157] : memref<2x16x8xf32, #tpu.memory_space<vmem>>, vector<2x16x8xf32>
    tpu.vector_store %arg8[%c0_155, %c0_156, %c0_157], %221 {strides = array<i32>} : memref<2x16x8xf32, #tpu.memory_space<vmem>>, vector<2x16x8xf32>,
    %c0_158 = arith.constant 0 : index
    %c8_159 = arith.constant 8 : index
    %c0_160 = arith.constant 0 : index
    %223 = vector.load %arg6[%c0_158, %c8_159, %c0_160] : memref<2x32x8xf32, #tpu.memory_space<vmem>>, vector<2x16x8xf32>
    tpu.vector_store %arg6[%c0_158, %c8_159, %c0_160], %218 {strides = array<i32>} : memref<2x32x8xf32, #tpu.memory_space<vmem>>, vector<2x16x8xf32>,
    %c0_161 = arith.constant 0 : index
    %c7_162 = arith.constant 7 : index
    %c0_163 = arith.constant 0 : index
    %224 = vector.load %arg6[%c0_161, %c7_162, %c0_163] : memref<2x32x8xf32, #tpu.memory_space<vmem>>, vector<2x16x8xf32>
    %c0_164 = arith.constant 0 : index
    %c0_165 = arith.constant 0 : index
    %c0_166 = arith.constant 0 : index
    %225 = vector.load %arg7[%c0_164, %c0_165, %c0_166] : memref<2x16x24xf32, #tpu.memory_space<vmem>>, vector<2x16x8xf32>
    tpu.vector_store %arg7[%c0_164, %c0_165, %c0_166], %224 {strides = array<i32>} : memref<2x16x24xf32, #tpu.memory_space<vmem>>, vector<2x16x8xf32>,
    %c0_167 = arith.constant 0 : index
    %c8_168 = arith.constant 8 : index
    %c0_169 = arith.constant 0 : index
    %226 = vector.load %arg6[%c0_167, %c8_168, %c0_169] : memref<2x32x8xf32, #tpu.memory_space<vmem>>, vector<2x16x8xf32>
    %c0_170 = arith.constant 0 : index
    %c0_171 = arith.constant 0 : index
    %c8_172 = arith.constant 8 : index
    %227 = vector.load %arg7[%c0_170, %c0_171, %c8_172] : memref<2x16x24xf32, #tpu.memory_space<vmem>>, vector<2x16x8xf32>
    tpu.vector_store %arg7[%c0_170, %c0_171, %c8_172], %226 {strides = array<i32>} : memref<2x16x24xf32, #tpu.memory_space<vmem>>, vector<2x16x8xf32>,
    %c0_173 = arith.constant 0 : index
    %c9_174 = arith.constant 9 : index
    %c0_175 = arith.constant 0 : index
    %228 = vector.load %arg6[%c0_173, %c9_174, %c0_175] : memref<2x32x8xf32, #tpu.memory_space<vmem>>, vector<2x16x8xf32>
    %c0_176 = arith.constant 0 : index
    %c0_177 = arith.constant 0 : index
    %c16_178 = arith.constant 16 : index
    %229 = vector.load %arg7[%c0_176, %c0_177, %c16_178] : memref<2x16x24xf32, #tpu.memory_space<vmem>>, vector<2x16x8xf32>
    tpu.vector_store %arg7[%c0_176, %c0_177, %c16_178], %228 {strides = array<i32>} : memref<2x16x24xf32, #tpu.memory_space<vmem>>, vector<2x16x8xf32>,
    %c0_179 = arith.constant 0 : index
    %c0_180 = arith.constant 0 : index
    %c0_181 = arith.constant 0 : index
    %230 = vector.load %arg7[%c0_179, %c0_180, %c0_181] : memref<2x16x24xf32, #tpu.memory_space<vmem>>, vector<2x16x24xf32>
    %231 = vector.shape_cast %230 : vector<2x16x24xf32> to vector<32x24xf32>
    %c3 = arith.constant 3 : index
    %c0_182 = arith.constant 0 : index
    %c0_183 = arith.constant 0 : index
    %232 = vector.load %arg3[%c3, %c0_182, %c0_183] : memref<6x24x32xf32, #tpu.memory_space<vmem>>, vector<1x24x32xf32>
    %233 = vector.shape_cast %232 : vector<1x24x32xf32> to vector<24x32xf32>
    %cst_184 = arith.constant dense<0.000000e+00> : vector<32x32xf32>
    %234 = tpu.matmul %231, %233, %cst_184 {dimension_numbers = #tpu.dot_dimension_numbers<[1], [0], [0], [1], [0, 0, 1, 1], [], []>} : vector<32x24xf32>, vector<24x32xf32>, vector<32x32xf32> -> vector<32x32xf32>
    %235 = vector.shape_cast %234 : vector<32x32xf32> to vector<2x16x32xf32>
    %cst_185 = arith.constant dense<0.000000e+00> : vector<2x32xf32>
    %236 = vector.multi_reduction <add>, %235, %cst_185 [1] : vector<2x16x32xf32> to vector<2x32xf32>
    %237 = vector.shape_cast %236 : vector<2x32xf32> to vector<2x1x32xf32>
    %cst_186 = arith.constant 1.600000e+01 : f32
    %238 = vector.broadcast %cst_186 : f32 to vector<2x1x32xf32>
    %239 = arith.divf %237, %238 : vector<2x1x32xf32>
    %240 = vector.broadcast %239 : vector<2x1x32xf32> to vector<2x16x32xf32>
    %241 = arith.subf %235, %240 : vector<2x16x32xf32>
    %242 = arith.mulf %241, %241 : vector<2x16x32xf32>
    %cst_187 = arith.constant dense<0.000000e+00> : vector<2x32xf32>
    %243 = vector.multi_reduction <add>, %242, %cst_187 [1] : vector<2x16x32xf32> to vector<2x32xf32>
    %244 = vector.shape_cast %243 : vector<2x32xf32> to vector<2x1x32xf32>
    %cst_188 = arith.constant 1.600000e+01 : f32
    %245 = vector.broadcast %cst_188 : f32 to vector<2x1x32xf32>
    %246 = arith.divf %244, %245 : vector<2x1x32xf32>
    %247 = vector.broadcast %239 : vector<2x1x32xf32> to vector<2x16x32xf32>
    %248 = arith.subf %235, %247 : vector<2x16x32xf32>
    %cst_189 = arith.constant 9.99999974E-6 : f32
    %249 = vector.broadcast %cst_189 : f32 to vector<2x1x32xf32>
    %250 = arith.addf %246, %249 : vector<2x1x32xf32>
    %251 = math.rsqrt %250 : vector<2x1x32xf32>
    %252 = vector.broadcast %251 : vector<2x1x32xf32> to vector<2x16x32xf32>
    %253 = arith.mulf %248, %252 : vector<2x16x32xf32>
    %c0_190 = arith.constant 0 : index
    %c3_191 = arith.constant 3 : index
    %c0_192 = arith.constant 0 : index
    %254 = vector.load %arg1[%c0_190, %c3_191, %c0_192] : memref<2x6x32xf32, #tpu.memory_space<vmem>>, vector<2x1x32xf32>
    %255 = vector.broadcast %254 : vector<2x1x32xf32> to vector<2x16x32xf32>
    %256 = arith.addf %253, %255 : vector<2x16x32xf32>
    %257 = vector.extract_strided_slice %256 {offsets = [0, 0, 16], sizes = [2, 16, 16], strides = [1, 1, 1]} : vector<2x16x32xf32> to vector<2x16x16xf32>
    %258 = arith.negf %257 : vector<2x16x16xf32>
    %259 = math.exp %258 : vector<2x16x16xf32>
    %cst_193 = arith.constant 1.000000e+00 : f32
    %260 = vector.broadcast %cst_193 : f32 to vector<2x16x16xf32>
    %261 = arith.addf %260, %259 : vector<2x16x16xf32>
    %262 = arith.divf %260, %261 : vector<2x16x16xf32>
    %263 = vector.extract_strided_slice %256 {offsets = [0, 0, 0], sizes = [2, 16, 16], strides = [1, 1, 1]} : vector<2x16x32xf32> to vector<2x16x16xf32>
    %264 = math.tanh %263 : vector<2x16x16xf32>
    %265 = arith.mulf %262, %264 : vector<2x16x16xf32>
    %266 = vector.shape_cast %265 : vector<2x16x16xf32> to vector<32x16xf32>
    %c3_194 = arith.constant 3 : index
    %c0_195 = arith.constant 0 : index
    %c0_196 = arith.constant 0 : index
    %267 = vector.load %arg4[%c3_194, %c0_195, %c0_196] : memref<6x16x16xf32, #tpu.memory_space<vmem>>, vector<1x16x16xf32>
    %268 = vector.shape_cast %267 : vector<1x16x16xf32> to vector<16x16xf32>
    %cst_197 = arith.constant dense<0.000000e+00> : vector<32x16xf32>
    %269 = tpu.matmul %266, %268, %cst_197 {dimension_numbers = #tpu.dot_dimension_numbers<[1], [0], [0], [1], [0, 0, 1, 1], [], []>} : vector<32x16xf32>, vector<16x16xf32>, vector<32x16xf32> -> vector<32x16xf32>
    %270 = vector.shape_cast %269 : vector<32x16xf32> to vector<2x16x16xf32>
    %cst_198 = arith.constant dense<0.000000e+00> : vector<2x16xf32>
    %271 = vector.multi_reduction <add>, %270, %cst_198 [1] : vector<2x16x16xf32> to vector<2x16xf32>
    %272 = vector.shape_cast %271 : vector<2x16xf32> to vector<2x1x16xf32>
    %cst_199 = arith.constant 1.600000e+01 : f32
    %273 = vector.broadcast %cst_199 : f32 to vector<2x1x16xf32>
    %274 = arith.divf %272, %273 : vector<2x1x16xf32>
    %275 = vector.broadcast %274 : vector<2x1x16xf32> to vector<2x16x16xf32>
    %276 = arith.subf %270, %275 : vector<2x16x16xf32>
    %277 = arith.mulf %276, %276 : vector<2x16x16xf32>
    %cst_200 = arith.constant dense<0.000000e+00> : vector<2x16xf32>
    %278 = vector.multi_reduction <add>, %277, %cst_200 [1] : vector<2x16x16xf32> to vector<2x16xf32>
    %279 = vector.shape_cast %278 : vector<2x16xf32> to vector<2x1x16xf32>
    %cst_201 = arith.constant 1.600000e+01 : f32
    %280 = vector.broadcast %cst_201 : f32 to vector<2x1x16xf32>
    %281 = arith.divf %279, %280 : vector<2x1x16xf32>
    %282 = vector.broadcast %274 : vector<2x1x16xf32> to vector<2x16x16xf32>
    %283 = arith.subf %270, %282 : vector<2x16x16xf32>
    %cst_202 = arith.constant 9.99999974E-6 : f32
    %284 = vector.broadcast %cst_202 : f32 to vector<2x1x16xf32>
    %285 = arith.addf %281, %284 : vector<2x1x16xf32>
    %286 = math.rsqrt %285 : vector<2x1x16xf32>
    %287 = vector.broadcast %286 : vector<2x1x16xf32> to vector<2x16x16xf32>
    %288 = arith.mulf %283, %287 : vector<2x16x16xf32>
    %289 = vector.extract_strided_slice %288 {offsets = [0, 0, 0], sizes = [2, 16, 8], strides = [1, 1, 1]} : vector<2x16x16xf32> to vector<2x16x8xf32>
    %290 = arith.addf %218, %289 : vector<2x16x8xf32>
    %c0_203 = arith.constant 0 : index
    %c0_204 = arith.constant 0 : index
    %c0_205 = arith.constant 0 : index
    %291 = vector.load %arg8[%c0_203, %c0_204, %c0_205] : memref<2x16x8xf32, #tpu.memory_space<vmem>>, vector<2x16x8xf32>
    %292 = vector.extract_strided_slice %288 {offsets = [0, 0, 8], sizes = [2, 16, 8], strides = [1, 1, 1]} : vector<2x16x16xf32> to vector<2x16x8xf32>
    %293 = arith.addf %291, %292 : vector<2x16x8xf32>
    %c0_206 = arith.constant 0 : index
    %c0_207 = arith.constant 0 : index
    %c0_208 = arith.constant 0 : index
    %294 = vector.load %arg8[%c0_206, %c0_207, %c0_208] : memref<2x16x8xf32, #tpu.memory_space<vmem>>, vector<2x16x8xf32>
    tpu.vector_store %arg8[%c0_206, %c0_207, %c0_208], %293 {strides = array<i32>} : memref<2x16x8xf32, #tpu.memory_space<vmem>>, vector<2x16x8xf32>,
    %c0_209 = arith.constant 0 : index
    %c8_210 = arith.constant 8 : index
    %c0_211 = arith.constant 0 : index
    %295 = vector.load %arg6[%c0_209, %c8_210, %c0_211] : memref<2x32x8xf32, #tpu.memory_space<vmem>>, vector<2x16x8xf32>
    tpu.vector_store %arg6[%c0_209, %c8_210, %c0_211], %290 {strides = array<i32>} : memref<2x32x8xf32, #tpu.memory_space<vmem>>, vector<2x16x8xf32>,
    %c0_212 = arith.constant 0 : index
    %c6_213 = arith.constant 6 : index
    %c0_214 = arith.constant 0 : index
    %296 = vector.load %arg6[%c0_212, %c6_213, %c0_214] : memref<2x32x8xf32, #tpu.memory_space<vmem>>, vector<2x16x8xf32>
    %c0_215 = arith.constant 0 : index
    %c0_216 = arith.constant 0 : index
    %c0_217 = arith.constant 0 : index
    %297 = vector.load %arg7[%c0_215, %c0_216, %c0_217] : memref<2x16x24xf32, #tpu.memory_space<vmem>>, vector<2x16x8xf32>
    tpu.vector_store %arg7[%c0_215, %c0_216, %c0_217], %296 {strides = array<i32>} : memref<2x16x24xf32, #tpu.memory_space<vmem>>, vector<2x16x8xf32>,
    %c0_218 = arith.constant 0 : index
    %c8_219 = arith.constant 8 : index
    %c0_220 = arith.constant 0 : index
    %298 = vector.load %arg6[%c0_218, %c8_219, %c0_220] : memref<2x32x8xf32, #tpu.memory_space<vmem>>, vector<2x16x8xf32>
    %c0_221 = arith.constant 0 : index
    %c0_222 = arith.constant 0 : index
    %c8_223 = arith.constant 8 : index
    %299 = vector.load %arg7[%c0_221, %c0_222, %c8_223] : memref<2x16x24xf32, #tpu.memory_space<vmem>>, vector<2x16x8xf32>
    tpu.vector_store %arg7[%c0_221, %c0_222, %c8_223], %298 {strides = array<i32>} : memref<2x16x24xf32, #tpu.memory_space<vmem>>, vector<2x16x8xf32>,
    %c0_224 = arith.constant 0 : index
    %c10_225 = arith.constant 10 : index
    %c0_226 = arith.constant 0 : index
    %300 = vector.load %arg6[%c0_224, %c10_225, %c0_226] : memref<2x32x8xf32, #tpu.memory_space<vmem>>, vector<2x16x8xf32>
    %c0_227 = arith.constant 0 : index
    %c0_228 = arith.constant 0 : index
    %c16_229 = arith.constant 16 : index
    %301 = vector.load %arg7[%c0_227, %c0_228, %c16_229] : memref<2x16x24xf32, #tpu.memory_space<vmem>>, vector<2x16x8xf32>
    tpu.vector_store %arg7[%c0_227, %c0_228, %c16_229], %300 {strides = array<i32>} : memref<2x16x24xf32, #tpu.memory_space<vmem>>, vector<2x16x8xf32>,
    %c0_230 = arith.constant 0 : index
    %c0_231 = arith.constant 0 : index
    %c0_232 = arith.constant 0 : index
    %302 = vector.load %arg7[%c0_230, %c0_231, %c0_232] : memref<2x16x24xf32, #tpu.memory_space<vmem>>, vector<2x16x24xf32>
    %303 = vector.shape_cast %302 : vector<2x16x24xf32> to vector<32x24xf32>
    %c4_233 = arith.constant 4 : index
    %c0_234 = arith.constant 0 : index
    %c0_235 = arith.constant 0 : index
    %304 = vector.load %arg3[%c4_233, %c0_234, %c0_235] : memref<6x24x32xf32, #tpu.memory_space<vmem>>, vector<1x24x32xf32>
    %305 = vector.shape_cast %304 : vector<1x24x32xf32> to vector<24x32xf32>
    %cst_236 = arith.constant dense<0.000000e+00> : vector<32x32xf32>
    %306 = tpu.matmul %303, %305, %cst_236 {dimension_numbers = #tpu.dot_dimension_numbers<[1], [0], [0], [1], [0, 0, 1, 1], [], []>} : vector<32x24xf32>, vector<24x32xf32>, vector<32x32xf32> -> vector<32x32xf32>
    %307 = vector.shape_cast %306 : vector<32x32xf32> to vector<2x16x32xf32>
    %cst_237 = arith.constant dense<0.000000e+00> : vector<2x32xf32>
    %308 = vector.multi_reduction <add>, %307, %cst_237 [1] : vector<2x16x32xf32> to vector<2x32xf32>
    %309 = vector.shape_cast %308 : vector<2x32xf32> to vector<2x1x32xf32>
    %cst_238 = arith.constant 1.600000e+01 : f32
    %310 = vector.broadcast %cst_238 : f32 to vector<2x1x32xf32>
    %311 = arith.divf %309, %310 : vector<2x1x32xf32>
    %312 = vector.broadcast %311 : vector<2x1x32xf32> to vector<2x16x32xf32>
    %313 = arith.subf %307, %312 : vector<2x16x32xf32>
    %314 = arith.mulf %313, %313 : vector<2x16x32xf32>
    %cst_239 = arith.constant dense<0.000000e+00> : vector<2x32xf32>
    %315 = vector.multi_reduction <add>, %314, %cst_239 [1] : vector<2x16x32xf32> to vector<2x32xf32>
    %316 = vector.shape_cast %315 : vector<2x32xf32> to vector<2x1x32xf32>
    %cst_240 = arith.constant 1.600000e+01 : f32
    %317 = vector.broadcast %cst_240 : f32 to vector<2x1x32xf32>
    %318 = arith.divf %316, %317 : vector<2x1x32xf32>
    %319 = vector.broadcast %311 : vector<2x1x32xf32> to vector<2x16x32xf32>
    %320 = arith.subf %307, %319 : vector<2x16x32xf32>
    %cst_241 = arith.constant 9.99999974E-6 : f32
    %321 = vector.broadcast %cst_241 : f32 to vector<2x1x32xf32>
    %322 = arith.addf %318, %321 : vector<2x1x32xf32>
    %323 = math.rsqrt %322 : vector<2x1x32xf32>
    %324 = vector.broadcast %323 : vector<2x1x32xf32> to vector<2x16x32xf32>
    %325 = arith.mulf %320, %324 : vector<2x16x32xf32>
    %c0_242 = arith.constant 0 : index
    %c4_243 = arith.constant 4 : index
    %c0_244 = arith.constant 0 : index
    %326 = vector.load %arg1[%c0_242, %c4_243, %c0_244] : memref<2x6x32xf32, #tpu.memory_space<vmem>>, vector<2x1x32xf32>
    %327 = vector.broadcast %326 : vector<2x1x32xf32> to vector<2x16x32xf32>
    %328 = arith.addf %325, %327 : vector<2x16x32xf32>
    %329 = vector.extract_strided_slice %328 {offsets = [0, 0, 16], sizes = [2, 16, 16], strides = [1, 1, 1]} : vector<2x16x32xf32> to vector<2x16x16xf32>
    %330 = arith.negf %329 : vector<2x16x16xf32>
    %331 = math.exp %330 : vector<2x16x16xf32>
    %cst_245 = arith.constant 1.000000e+00 : f32
    %332 = vector.broadcast %cst_245 : f32 to vector<2x16x16xf32>
    %333 = arith.addf %332, %331 : vector<2x16x16xf32>
    %334 = arith.divf %332, %333 : vector<2x16x16xf32>
    %335 = vector.extract_strided_slice %328 {offsets = [0, 0, 0], sizes = [2, 16, 16], strides = [1, 1, 1]} : vector<2x16x32xf32> to vector<2x16x16xf32>
    %336 = math.tanh %335 : vector<2x16x16xf32>
    %337 = arith.mulf %334, %336 : vector<2x16x16xf32>
    %338 = vector.shape_cast %337 : vector<2x16x16xf32> to vector<32x16xf32>
    %c4_246 = arith.constant 4 : index
    %c0_247 = arith.constant 0 : index
    %c0_248 = arith.constant 0 : index
    %339 = vector.load %arg4[%c4_246, %c0_247, %c0_248] : memref<6x16x16xf32, #tpu.memory_space<vmem>>, vector<1x16x16xf32>
    %340 = vector.shape_cast %339 : vector<1x16x16xf32> to vector<16x16xf32>
    %cst_249 = arith.constant dense<0.000000e+00> : vector<32x16xf32>
    %341 = tpu.matmul %338, %340, %cst_249 {dimension_numbers = #tpu.dot_dimension_numbers<[1], [0], [0], [1], [0, 0, 1, 1], [], []>} : vector<32x16xf32>, vector<16x16xf32>, vector<32x16xf32> -> vector<32x16xf32>
    %342 = vector.shape_cast %341 : vector<32x16xf32> to vector<2x16x16xf32>
    %cst_250 = arith.constant dense<0.000000e+00> : vector<2x16xf32>
    %343 = vector.multi_reduction <add>, %342, %cst_250 [1] : vector<2x16x16xf32> to vector<2x16xf32>
    %344 = vector.shape_cast %343 : vector<2x16xf32> to vector<2x1x16xf32>
    %cst_251 = arith.constant 1.600000e+01 : f32
    %345 = vector.broadcast %cst_251 : f32 to vector<2x1x16xf32>
    %346 = arith.divf %344, %345 : vector<2x1x16xf32>
    %347 = vector.broadcast %346 : vector<2x1x16xf32> to vector<2x16x16xf32>
    %348 = arith.subf %342, %347 : vector<2x16x16xf32>
    %349 = arith.mulf %348, %348 : vector<2x16x16xf32>
    %cst_252 = arith.constant dense<0.000000e+00> : vector<2x16xf32>
    %350 = vector.multi_reduction <add>, %349, %cst_252 [1] : vector<2x16x16xf32> to vector<2x16xf32>
    %351 = vector.shape_cast %350 : vector<2x16xf32> to vector<2x1x16xf32>
    %cst_253 = arith.constant 1.600000e+01 : f32
    %352 = vector.broadcast %cst_253 : f32 to vector<2x1x16xf32>
    %353 = arith.divf %351, %352 : vector<2x1x16xf32>
    %354 = vector.broadcast %346 : vector<2x1x16xf32> to vector<2x16x16xf32>
    %355 = arith.subf %342, %354 : vector<2x16x16xf32>
    %cst_254 = arith.constant 9.99999974E-6 : f32
    %356 = vector.broadcast %cst_254 : f32 to vector<2x1x16xf32>
    %357 = arith.addf %353, %356 : vector<2x1x16xf32>
    %358 = math.rsqrt %357 : vector<2x1x16xf32>
    %359 = vector.broadcast %358 : vector<2x1x16xf32> to vector<2x16x16xf32>
    %360 = arith.mulf %355, %359 : vector<2x16x16xf32>
    %361 = vector.extract_strided_slice %360 {offsets = [0, 0, 0], sizes = [2, 16, 8], strides = [1, 1, 1]} : vector<2x16x16xf32> to vector<2x16x8xf32>
    %362 = arith.addf %290, %361 : vector<2x16x8xf32>
    %c0_255 = arith.constant 0 : index
    %c0_256 = arith.constant 0 : index
    %c0_257 = arith.constant 0 : index
    %363 = vector.load %arg8[%c0_255, %c0_256, %c0_257] : memref<2x16x8xf32, #tpu.memory_space<vmem>>, vector<2x16x8xf32>
    %364 = vector.extract_strided_slice %360 {offsets = [0, 0, 8], sizes = [2, 16, 8], strides = [1, 1, 1]} : vector<2x16x16xf32> to vector<2x16x8xf32>
    %365 = arith.addf %363, %364 : vector<2x16x8xf32>
    %c0_258 = arith.constant 0 : index
    %c0_259 = arith.constant 0 : index
    %c0_260 = arith.constant 0 : index
    %366 = vector.load %arg8[%c0_258, %c0_259, %c0_260] : memref<2x16x8xf32, #tpu.memory_space<vmem>>, vector<2x16x8xf32>
    tpu.vector_store %arg8[%c0_258, %c0_259, %c0_260], %365 {strides = array<i32>} : memref<2x16x8xf32, #tpu.memory_space<vmem>>, vector<2x16x8xf32>,
    %c0_261 = arith.constant 0 : index
    %c8_262 = arith.constant 8 : index
    %c0_263 = arith.constant 0 : index
    %367 = vector.load %arg6[%c0_261, %c8_262, %c0_263] : memref<2x32x8xf32, #tpu.memory_space<vmem>>, vector<2x16x8xf32>
    tpu.vector_store %arg6[%c0_261, %c8_262, %c0_263], %362 {strides = array<i32>} : memref<2x32x8xf32, #tpu.memory_space<vmem>>, vector<2x16x8xf32>,
    %c0_264 = arith.constant 0 : index
    %c4_265 = arith.constant 4 : index
    %c0_266 = arith.constant 0 : index
    %368 = vector.load %arg6[%c0_264, %c4_265, %c0_266] : memref<2x32x8xf32, #tpu.memory_space<vmem>>, vector<2x16x8xf32>
    %c0_267 = arith.constant 0 : index
    %c0_268 = arith.constant 0 : index
    %c0_269 = arith.constant 0 : index
    %369 = vector.load %arg7[%c0_267, %c0_268, %c0_269] : memref<2x16x24xf32, #tpu.memory_space<vmem>>, vector<2x16x8xf32>
    tpu.vector_store %arg7[%c0_267, %c0_268, %c0_269], %368 {strides = array<i32>} : memref<2x16x24xf32, #tpu.memory_space<vmem>>, vector<2x16x8xf32>,
    %c0_270 = arith.constant 0 : index
    %c8_271 = arith.constant 8 : index
    %c0_272 = arith.constant 0 : index
    %370 = vector.load %arg6[%c0_270, %c8_271, %c0_272] : memref<2x32x8xf32, #tpu.memory_space<vmem>>, vector<2x16x8xf32>
    %c0_273 = arith.constant 0 : index
    %c0_274 = arith.constant 0 : index
    %c8_275 = arith.constant 8 : index
    %371 = vector.load %arg7[%c0_273, %c0_274, %c8_275] : memref<2x16x24xf32, #tpu.memory_space<vmem>>, vector<2x16x8xf32>
    tpu.vector_store %arg7[%c0_273, %c0_274, %c8_275], %370 {strides = array<i32>} : memref<2x16x24xf32, #tpu.memory_space<vmem>>, vector<2x16x8xf32>,
    %c0_276 = arith.constant 0 : index
    %c12_277 = arith.constant 12 : index
    %c0_278 = arith.constant 0 : index
    %372 = vector.load %arg6[%c0_276, %c12_277, %c0_278] : memref<2x32x8xf32, #tpu.memory_space<vmem>>, vector<2x16x8xf32>
    %c0_279 = arith.constant 0 : index
    %c0_280 = arith.constant 0 : index
    %c16_281 = arith.constant 16 : index
    %373 = vector.load %arg7[%c0_279, %c0_280, %c16_281] : memref<2x16x24xf32, #tpu.memory_space<vmem>>, vector<2x16x8xf32>
    tpu.vector_store %arg7[%c0_279, %c0_280, %c16_281], %372 {strides = array<i32>} : memref<2x16x24xf32, #tpu.memory_space<vmem>>, vector<2x16x8xf32>,
    %c0_282 = arith.constant 0 : index
    %c0_283 = arith.constant 0 : index
    %c0_284 = arith.constant 0 : index
    %374 = vector.load %arg7[%c0_282, %c0_283, %c0_284] : memref<2x16x24xf32, #tpu.memory_space<vmem>>, vector<2x16x24xf32>
    %375 = vector.shape_cast %374 : vector<2x16x24xf32> to vector<32x24xf32>
    %c5 = arith.constant 5 : index
    %c0_285 = arith.constant 0 : index
    %c0_286 = arith.constant 0 : index
    %376 = vector.load %arg3[%c5, %c0_285, %c0_286] : memref<6x24x32xf32, #tpu.memory_space<vmem>>, vector<1x24x32xf32>
    %377 = vector.shape_cast %376 : vector<1x24x32xf32> to vector<24x32xf32>
    %cst_287 = arith.constant dense<0.000000e+00> : vector<32x32xf32>
    %378 = tpu.matmul %375, %377, %cst_287 {dimension_numbers = #tpu.dot_dimension_numbers<[1], [0], [0], [1], [0, 0, 1, 1], [], []>} : vector<32x24xf32>, vector<24x32xf32>, vector<32x32xf32> -> vector<32x32xf32>
    %379 = vector.shape_cast %378 : vector<32x32xf32> to vector<2x16x32xf32>
    %cst_288 = arith.constant dense<0.000000e+00> : vector<2x32xf32>
    %380 = vector.multi_reduction <add>, %379, %cst_288 [1] : vector<2x16x32xf32> to vector<2x32xf32>
    %381 = vector.shape_cast %380 : vector<2x32xf32> to vector<2x1x32xf32>
    %cst_289 = arith.constant 1.600000e+01 : f32
    %382 = vector.broadcast %cst_289 : f32 to vector<2x1x32xf32>
    %383 = arith.divf %381, %382 : vector<2x1x32xf32>
    %384 = vector.broadcast %383 : vector<2x1x32xf32> to vector<2x16x32xf32>
    %385 = arith.subf %379, %384 : vector<2x16x32xf32>
    %386 = arith.mulf %385, %385 : vector<2x16x32xf32>
    %cst_290 = arith.constant dense<0.000000e+00> : vector<2x32xf32>
    %387 = vector.multi_reduction <add>, %386, %cst_290 [1] : vector<2x16x32xf32> to vector<2x32xf32>
    %388 = vector.shape_cast %387 : vector<2x32xf32> to vector<2x1x32xf32>
    %cst_291 = arith.constant 1.600000e+01 : f32
    %389 = vector.broadcast %cst_291 : f32 to vector<2x1x32xf32>
    %390 = arith.divf %388, %389 : vector<2x1x32xf32>
    %391 = vector.broadcast %383 : vector<2x1x32xf32> to vector<2x16x32xf32>
    %392 = arith.subf %379, %391 : vector<2x16x32xf32>
    %cst_292 = arith.constant 9.99999974E-6 : f32
    %393 = vector.broadcast %cst_292 : f32 to vector<2x1x32xf32>
    %394 = arith.addf %390, %393 : vector<2x1x32xf32>
    %395 = math.rsqrt %394 : vector<2x1x32xf32>
    %396 = vector.broadcast %395 : vector<2x1x32xf32> to vector<2x16x32xf32>
    %397 = arith.mulf %392, %396 : vector<2x16x32xf32>
    %c0_293 = arith.constant 0 : index
    %c5_294 = arith.constant 5 : index
    %c0_295 = arith.constant 0 : index
    %398 = vector.load %arg1[%c0_293, %c5_294, %c0_295] : memref<2x6x32xf32, #tpu.memory_space<vmem>>, vector<2x1x32xf32>
    %399 = vector.broadcast %398 : vector<2x1x32xf32> to vector<2x16x32xf32>
    %400 = arith.addf %397, %399 : vector<2x16x32xf32>
    %401 = vector.extract_strided_slice %400 {offsets = [0, 0, 16], sizes = [2, 16, 16], strides = [1, 1, 1]} : vector<2x16x32xf32> to vector<2x16x16xf32>
    %402 = arith.negf %401 : vector<2x16x16xf32>
    %403 = math.exp %402 : vector<2x16x16xf32>
    %cst_296 = arith.constant 1.000000e+00 : f32
    %404 = vector.broadcast %cst_296 : f32 to vector<2x16x16xf32>
    %405 = arith.addf %404, %403 : vector<2x16x16xf32>
    %406 = arith.divf %404, %405 : vector<2x16x16xf32>
    %407 = vector.extract_strided_slice %400 {offsets = [0, 0, 0], sizes = [2, 16, 16], strides = [1, 1, 1]} : vector<2x16x32xf32> to vector<2x16x16xf32>
    %408 = math.tanh %407 : vector<2x16x16xf32>
    %409 = arith.mulf %406, %408 : vector<2x16x16xf32>
    %410 = vector.shape_cast %409 : vector<2x16x16xf32> to vector<32x16xf32>
    %c5_297 = arith.constant 5 : index
    %c0_298 = arith.constant 0 : index
    %c0_299 = arith.constant 0 : index
    %411 = vector.load %arg4[%c5_297, %c0_298, %c0_299] : memref<6x16x16xf32, #tpu.memory_space<vmem>>, vector<1x16x16xf32>
    %412 = vector.shape_cast %411 : vector<1x16x16xf32> to vector<16x16xf32>
    %cst_300 = arith.constant dense<0.000000e+00> : vector<32x16xf32>
    %413 = tpu.matmul %410, %412, %cst_300 {dimension_numbers = #tpu.dot_dimension_numbers<[1], [0], [0], [1], [0, 0, 1, 1], [], []>} : vector<32x16xf32>, vector<16x16xf32>, vector<32x16xf32> -> vector<32x16xf32>
    %414 = vector.shape_cast %413 : vector<32x16xf32> to vector<2x16x16xf32>
    %cst_301 = arith.constant dense<0.000000e+00> : vector<2x16xf32>
    %415 = vector.multi_reduction <add>, %414, %cst_301 [1] : vector<2x16x16xf32> to vector<2x16xf32>
    %416 = vector.shape_cast %415 : vector<2x16xf32> to vector<2x1x16xf32>
    %cst_302 = arith.constant 1.600000e+01 : f32
    %417 = vector.broadcast %cst_302 : f32 to vector<2x1x16xf32>
    %418 = arith.divf %416, %417 : vector<2x1x16xf32>
    %419 = vector.broadcast %418 : vector<2x1x16xf32> to vector<2x16x16xf32>
    %420 = arith.subf %414, %419 : vector<2x16x16xf32>
    %421 = arith.mulf %420, %420 : vector<2x16x16xf32>
    %cst_303 = arith.constant dense<0.000000e+00> : vector<2x16xf32>
    %422 = vector.multi_reduction <add>, %421, %cst_303 [1] : vector<2x16x16xf32> to vector<2x16xf32>
    %423 = vector.shape_cast %422 : vector<2x16xf32> to vector<2x1x16xf32>
    %cst_304 = arith.constant 1.600000e+01 : f32
    %424 = vector.broadcast %cst_304 : f32 to vector<2x1x16xf32>
    %425 = arith.divf %423, %424 : vector<2x1x16xf32>
    %426 = vector.broadcast %418 : vector<2x1x16xf32> to vector<2x16x16xf32>
    %427 = arith.subf %414, %426 : vector<2x16x16xf32>
    %cst_305 = arith.constant 9.99999974E-6 : f32
    %428 = vector.broadcast %cst_305 : f32 to vector<2x1x16xf32>
    %429 = arith.addf %425, %428 : vector<2x1x16xf32>
    %430 = math.rsqrt %429 : vector<2x1x16xf32>
    %431 = vector.broadcast %430 : vector<2x1x16xf32> to vector<2x16x16xf32>
    %432 = arith.mulf %427, %431 : vector<2x16x16xf32>
    %c0_306 = arith.constant 0 : index
    %c0_307 = arith.constant 0 : index
    %c0_308 = arith.constant 0 : index
    %433 = vector.load %arg8[%c0_306, %c0_307, %c0_308] : memref<2x16x8xf32, #tpu.memory_space<vmem>>, vector<2x16x8xf32>
    %434 = vector.extract_strided_slice %432 {offsets = [0, 0, 8], sizes = [2, 16, 8], strides = [1, 1, 1]} : vector<2x16x16xf32> to vector<2x16x8xf32>
    %435 = arith.addf %433, %434 : vector<2x16x8xf32>
    %c0_309 = arith.constant 0 : index
    %c0_310 = arith.constant 0 : index
    %c0_311 = arith.constant 0 : index
    %436 = vector.load %arg8[%c0_309, %c0_310, %c0_311] : memref<2x16x8xf32, #tpu.memory_space<vmem>>, vector<2x16x8xf32>
    tpu.vector_store %arg8[%c0_309, %c0_310, %c0_311], %435 {strides = array<i32>} : memref<2x16x8xf32, #tpu.memory_space<vmem>>, vector<2x16x8xf32>,
    %c0_312 = arith.constant 0 : index
    %c0_313 = arith.constant 0 : index
    %c0_314 = arith.constant 0 : index
    %437 = vector.load %arg8[%c0_312, %c0_313, %c0_314] : memref<2x16x8xf32, #tpu.memory_space<vmem>>, vector<2x16x8xf32>
    %438 = tpu.transpose %437, [0, 2, 1] : vector<2x16x8xf32> -> vector<2x8x16xf32>
    %c0_315 = arith.constant 0 : index
    %c0_316 = arith.constant 0 : index
    %c0_317 = arith.constant 0 : index
    %439 = vector.load %arg5[%c0_315, %c0_316, %c0_317] : memref<2x8x16xf32, #tpu.memory_space<vmem>>, vector<2x8x16xf32>
    tpu.vector_store %arg5[%c0_315, %c0_316, %c0_317], %438 {strides = array<i32>} : memref<2x8x16xf32, #tpu.memory_space<vmem>>, vector<2x8x16xf32>,
    return
  }
  func.func @transform_0(%arg0: i32) -> (i32, i32, i32) {
    %c0_i32 = arith.constant 0 : i32
    %c0_i32_0 = arith.constant 0 : i32
    %c0_i32_1 = arith.constant 0 : i32
    return %arg0, %c0_i32, %c0_i32_0 : i32, i32, i32
  }
  func.func @transform_1(%arg0: i32) -> (i32, i32, i32) {
    %c0_i32 = arith.constant 0 : i32
    %c0_i32_0 = arith.constant 0 : i32
    %c0_i32_1 = arith.constant 0 : i32
    return %arg0, %c0_i32, %c0_i32_0 : i32, i32, i32
  }
  func.func @transform_2(%arg0: i32) -> (i32, i32, i32) {
    %c0_i32 = arith.constant 0 : i32
    %c0_i32_0 = arith.constant 0 : i32
    %c0_i32_1 = arith.constant 0 : i32
    %c0_i32_2 = arith.constant 0 : i32
    return %c0_i32, %c0_i32_0, %c0_i32_1 : i32, i32, i32
  }
  func.func @transform_3(%arg0: i32) -> (i32, i32, i32) {
    %c0_i32 = arith.constant 0 : i32
    %c0_i32_0 = arith.constant 0 : i32
    %c0_i32_1 = arith.constant 0 : i32
    %c0_i32_2 = arith.constant 0 : i32
    return %c0_i32, %c0_i32_0, %c0_i32_1 : i32, i32, i32
  }
  func.func @transform_4(%arg0: i32) -> (i32, i32, i32) {
    %c0_i32 = arith.constant 0 : i32
    %c0_i32_0 = arith.constant 0 : i32
    %c0_i32_1 = arith.constant 0 : i32
    return %arg0, %c0_i32, %c0_i32_0 : i32, i32, i32
  }
}

</mosaic_0001>

<llo_original>
// kernel: wavenet_like_stack.1
$region0: #{wavenet_like_stack.1}
  #allocation0 [shape = 'u32[]', space=smem, size = 0x4, offset = 0x4, fixed_abs, tag = 'smem constant byte address 0x4 - core index']
  #allocation1 [shape = 'u32[72,128]{1,0:T(1,128)}', space=vmem, size = 0x9000, scoped, tag = 'internal scratch']
  #allocation2 [shape = 'f32[2,32,8]{2,1,0:T(8,128)}', space=vmem, size = 0x8000, scoped, tag = 'scratch operand']
  #allocation3 [shape = 'f32[2,16,24]{2,1,0:T(8,128)}', space=vmem, size = 0x4000, scoped, tag = 'scratch operand']
  #allocation4 [shape = 'f32[2,16,8]{2,1,0:T(8,128)}', space=vmem, size = 0x4000, scoped, tag = 'scratch operand']
  %s0 = inlined_call_operand.vmem [shape: f32[4,6,32], index: 0, kind: input, shape index: {}]
  %s1 = inlined_call_operand.vmem [shape: f32[4,16,8], index: 1, kind: input, shape index: {}]
  %s2 = inlined_call_operand.vmem [shape: f32[6,24,32], index: 2, kind: input, shape index: {}]
  %s3 = inlined_call_operand.vmem [shape: f32[6,16,16], index: 3, kind: input, shape index: {}]
  %s4 = inlined_call_operand.hbm [shape: f32[4,8,16], index: 4, kind: output, shape index: {}]
  %s5 = sld [smem:[#allocation0]]
  $region49: #{wavenet_like_stack.1} parent=0
    _
  %s7 = ssub.s32 1, %s5
  %s8 = scalar_select 0, %s7, %s5
  $region1: #{wavenet_like_stack.1} parent=0
    #allocation5 [shape = 'u8[16384]{0}', space=vmem, size = 0x4000, scoped, tag = 'output window, operand 0']
    #allocation6 [shape = 's32[2]{0}', space=sflag, size = 0x8, scoped, tag = 'scoped memory for wavenet_like_stack.1']
    %9 = vsyncpa [#allocation6], 0
    %s10 = scalar_lea.sflag [#allocation6], 1
    %11 = vsyncpa %s10, 0
    loop: start=0, step=1, limit=4
    $region2: #{wavenet_like_stack.1} parent=1 // loop_pre_header
      _
    $region3: #{wavenet_like_stack.1} parent=1 // loop_header
      %s13 = sphi 0, %s17
      %p14 = scmp.ge.s32.totalorder %s13, 4
      %s23 = sphi 0, %s25
      %s26 = sphi 0, %s23
      %s27 = sphi 0, %s26
      %s43 = sphi 0, %s27
      %s49 = sphi 0, %s51
      %s52 = sphi 0, %s49
      %s53 = sphi 0, %s52
      %s69 = sphi 0, %s53
      %s73 = sphi 0, %s73
      %s75 = sphi 0, %s73
      %s76 = sphi 0, %s75
      %s90 = sphi 0, %s76
      %s94 = sphi 0, %s94
      %s96 = sphi 0, %s94
      %s97 = sphi 0, %s96
      %s111 = sphi 0, %s97
      %s117 = sphi 0, %s119
      %s120 = sphi 0, %s117
      %s121 = sphi 0, %s120
      %s137 = sphi 0, %s121
    $region4: #{wavenet_like_stack.1} parent=1 // loop_header_branch
      %16 = sbr.rel (%p14) target = $region8
    $region5: #{wavenet_like_stack.1} parent=1 // loop_body
      %s18 = ssub.s32 %s13, 1
      %s19 = ssub.s32 %s13, 2
      %s20 = sadd.s32 %s13, 1
      %s21 = ssub.s32 %s13, %s20
      %p22 = scmp.eq.s32.totalorder %s21, 0
      %s24 = sadd.s32 %s23, 1
      %s25 = scalar_select %p22, %s23, %s24
      %p28 = pneg %p22
      %p29 = scmp.eq.s32.totalorder %s13, 1
      %p30 = por %p28, %p29
      %p31 = scmp.ne.s32.totalorder %s23, %s26
      %p32 = scmp.eq.s32.totalorder %s13, 0
      %p33 = por %p31, %p32
      %p34 = scmp.ne.s32.totalorder %s23, %s26
      %p35 = scmp.eq.s32.totalorder %s18, 1
      %p36 = por %p34, %p35
      %p37 = scmp.ne.s32.totalorder %s26, %s27
      %p38 = scmp.eq.s32.totalorder %s18, 0
      %p39 = por %p37, %p38
      %p40 = scmp.ne.s32.totalorder %s26, %s27
      %p41 = scmp.eq.s32.totalorder %s19, 1
      %p42 = por %p40, %p41
      %p44 = scmp.ne.s32.totalorder %s27, %s43
      %p45 = scmp.eq.s32.totalorder %s19, 0
      %p46 = por %p44, %p45
      %s47 = ssub.s32 %s13, %s20
      %p48 = scmp.eq.s32.totalorder %s47, 0
      %s50 = sadd.s32 %s49, 1
      %s51 = scalar_select %p48, %s49, %s50
      %p54 = pneg %p48
      %p55 = scmp.eq.s32.totalorder %s13, 1
      %p56 = por %p54, %p55
      %p57 = scmp.ne.s32.totalorder %s49, %s52
      %p58 = scmp.eq.s32.totalorder %s13, 0
      %p59 = por %p57, %p58
      %p60 = scmp.ne.s32.totalorder %s49, %s52
      %p61 = scmp.eq.s32.totalorder %s18, 1
      %p62 = por %p60, %p61
      %p63 = scmp.ne.s32.totalorder %s52, %s53
      %p64 = scmp.eq.s32.totalorder %s18, 0
      %p65 = por %p63, %p64
      %p66 = scmp.ne.s32.totalorder %s52, %s53
      %p67 = scmp.eq.s32.totalorder %s19, 1
      %p68 = por %p66, %p67
      %p70 = scmp.ne.s32.totalorder %s53, %s69
      %p71 = scmp.eq.s32.totalorder %s19, 0
      %p72 = por %p70, %p71
      %s74 = sadd.s32 %s73, 1
      %p77 = scmp.eq.s32.totalorder %s13, 1
      %p78 = scmp.ne.s32.totalorder %s73, %s75
      %p79 = scmp.eq.s32.totalorder %s13, 0
      %p80 = por %p78, %p79
      %p81 = scmp.ne.s32.totalorder %s73, %s75
      %p82 = scmp.eq.s32.totalorder %s18, 1
      %p83 = por %p81, %p82
      %p84 = scmp.ne.s32.totalorder %s75, %s76
      %p85 = scmp.eq.s32.totalorder %s18, 0
      %p86 = por %p84, %p85
      %p87 = scmp.ne.s32.totalorder %s75, %s76
      %p88 = scmp.eq.s32.totalorder %s19, 1
      %p89 = por %p87, %p88
      %p91 = scmp.ne.s32.totalorder %s76, %s90
      %p92 = scmp.eq.s32.totalorder %s19, 0
      %p93 = por %p91, %p92
      %s95 = sadd.s32 %s94, 1
      %p98 = scmp.eq.s32.totalorder %s13, 1
      %p99 = scmp.ne.s32.totalorder %s94, %s96
      %p100 = scmp.eq.s32.totalorder %s13, 0
      %p101 = por %p99, %p100
      %p102 = scmp.ne.s32.totalorder %s94, %s96
      %p103 = scmp.eq.s32.totalorder %s18, 1
      %p104 = por %p102, %p103
      %p105 = scmp.ne.s32.totalorder %s96, %s97
      %p106 = scmp.eq.s32.totalorder %s18, 0
      %p107 = por %p105, %p106
      %p108 = scmp.ne.s32.totalorder %s96, %s97
      %p109 = scmp.eq.s32.totalorder %s19, 1
      %p110 = por %p108, %p109
      %p112 = scmp.ne.s32.totalorder %s97, %s111
      %p113 = scmp.eq.s32.totalorder %s19, 0
      %p114 = por %p112, %p113
      %s115 = ssub.s32 %s13, %s20
      %p116 = scmp.eq.s32.totalorder %s115, 0
      %s118 = sadd.s32 %s117, 1
      %s119 = scalar_select %p116, %s117, %s118
      %p122 = pneg %p116
      %p123 = scmp.eq.s32.totalorder %s13, 1
      %p124 = por %p122, %p123
      %p125 = scmp.ne.s32.totalorder %s117, %s120
      %p126 = scmp.eq.s32.totalorder %s13, 0
      %p127 = por %p125, %p126
      %p128 = scmp.ne.s32.totalorder %s117, %s120
      %p129 = scmp.eq.s32.totalorder %s18, 1
      %p130 = por %p128, %p129
      %p131 = scmp.ne.s32.totalorder %s120, %s121
      %p132 = scmp.eq.s32.totalorder %s18, 0
      %p133 = por %p131, %p132
      %p134 = scmp.ne.s32.totalorder %s120, %s121
      %p135 = scmp.eq.s32.totalorder %s19, 1
      %p136 = por %p134, %p135
      %p138 = scmp.ne.s32.totalorder %s121, %s137
      %p139 = scmp.eq.s32.totalorder %s19, 0
      %p140 = por %p138, %p139
      %p141 = scmp.le.s32.totalorder 1, %s13
      %p142 = scmp.lt.s32.totalorder %s13, 3
      %p143 = pnand %p141, %p142
      %p144 = pneg %p143
      // Predicated region
      $region9: #{wavenet_like_stack.1} parent=5 // pred_check
        _
      $region10: #{wavenet_like_stack.1} parent=5 // pred_check_branch
        %146 = sbr.rel (%p143) target = $region12
      $region11: #{wavenet_like_stack.1} parent=5 // pred_region
        %s147 = ssub.s32 %s13, 1
        // Predicated region
        $region13: #{wavenet_like_stack.1} parent=11 // pred_check
          %p148 = pneg %p86
        $region14: #{wavenet_like_stack.1} parent=11 // pred_check_branch
          %150 = sbr.rel (%p148) target = $region16
        $region15: #{wavenet_like_stack.1} parent=11 // pred_region
          _
        $region16: #{wavenet_like_stack.1} parent=11 // pred_fallthru
          _
        // Predicated region
        $region17: #{wavenet_like_stack.1} parent=11 // pred_check
          %p151 = pneg %p107
        $region18: #{wavenet_like_stack.1} parent=11 // pred_check_branch
          %153 = sbr.rel (%p151) target = $region20
        $region19: #{wavenet_like_stack.1} parent=11 // pred_region
          _
        $region20: #{wavenet_like_stack.1} parent=11 // pred_fallthru
          _
      $region12: #{wavenet_like_stack.1} parent=5 // pred_fallthru
        _
      %p154 = scmp.lt.s32.totalorder %s13, 2
      // Predicated region
      $region21: #{wavenet_like_stack.1} parent=5 // pred_check
        %p155 = pneg %p154
      $region22: #{wavenet_like_stack.1} parent=5 // pred_check_branch
        %157 = sbr.rel (%p155) target = $region24
      $region23: #{wavenet_like_stack.1} parent=5 // pred_region
        // Predicated region
        $region25: #{wavenet_like_stack.1} parent=23 // pred_check
          %p158 = pneg %p33
        $region26: #{wavenet_like_stack.1} parent=23 // pred_check_branch
          %160 = sbr.rel (%p158) target = $region28
        $region27: #{wavenet_like_stack.1} parent=23 // pred_region
          %s161 = smul.u32 2, %s13
          %p162 = scmp.lt.s32.totalorder %s161, 3
          %s163 = scalar_select %p162, %s161, 3
          %s164 = smul.addr %s163, 8
          %s165 = scalar_lea.vmem %s0, %s164
          %s166 = smul.u32 2, %s13
        $region28: #{wavenet_like_stack.1} parent=23 // pred_fallthru
          _
        // Predicated region
        $region29: #{wavenet_like_stack.1} parent=23 // pred_check
          %p167 = pneg %p59
        $region30: #{wavenet_like_stack.1} parent=23 // pred_check_branch
          %169 = sbr.rel (%p167) target = $region32
        $region31: #{wavenet_like_stack.1} parent=23 // pred_region
          %s170 = smul.u32 2, %s13
          %p171 = scmp.lt.s32.totalorder %s170, 3
          %s172 = scalar_select %p171, %s170, 3
          %s173 = smul.addr %s172, 2
          %s174 = smul.addr %s173, 8
          %s175 = scalar_lea.vmem %s1, %s174
          %s176 = smul.u32 2, %s13
        $region32: #{wavenet_like_stack.1} parent=23 // pred_fallthru
          _
      $region24: #{wavenet_like_stack.1} parent=5 // pred_fallthru
        _
      %p177 = scmp.le.s32.totalorder 1, %s13
      %p178 = scmp.lt.s32.totalorder %s13, 3
      %p179 = pnand %p177, %p178
      %p180 = pneg %p179
      // Predicated region
      $region33: #{wavenet_like_stack.1} parent=5 // pred_check
        _
      $region34: #{wavenet_like_stack.1} parent=5 // pred_check_branch
        %182 = sbr.rel (%p179) target = $region36
      $region35: #{wavenet_like_stack.1} parent=5 // pred_region
        %s183 = ssub.s32 %s13, 1
        %s184 = smul.u32 2, %s18
        %p185 = scmp.lt.s32.totalorder %s184, 3
        %s186 = scalar_select %p185, %s184, 3
        %s187 = smul.addr %s186, 8
        %s188 = scalar_lea.vmem %s0, %s187
        %p189 = pneg %p39
        %p190 = pneg %p36
        %s191 = smul.u32 2, %s18
        %p192 = scmp.lt.s32.totalorder %s191, 3
        %s193 = scalar_select %p192, %s191, 3
        %s194 = smul.addr %s193, 2
        %s195 = smul.addr %s194, 8
        %s196 = scalar_lea.vmem %s1, %s195
        %p197 = pneg %p65
        %p198 = pneg %p62
        %p199 = pneg %p86
        %p200 = pneg %p83
        %p201 = pneg %p107
        %p202 = pneg %p104
        %p203 = pneg %p133
        %p204 = pneg %p130
        %s205 = sand.u32 %s120, 1
        %s206 = scalar_lea.sflag [#allocation6], %s205
        %s207 = sand.u32 %s120, 1
        %s208 = smul.addr %s207, 16
        %s209 = scalar_lea.vmem [#allocation5], %s208
        %s210 = smul.u32 2, %s18
        %p211 = scmp.lt.s32.totalorder %s210, 3
        %s212 = scalar_select %p211, %s210, 3
        %s213 = smul.addr %s212, 8
        %s214 = scalar_lea.vmem %s0, %s213
        %s215 = smul.u32 2, %s18
        %s216 = smul.u32 2, %s18
        %p217 = scmp.lt.s32.totalorder %s216, 3
        %s218 = scalar_select %p217, %s216, 3
        %s219 = smul.addr %s218, 2
        %s220 = smul.addr %s219, 8
        %s221 = scalar_lea.vmem %s1, %s220
        %s222 = smul.u32 2, %s18
        %s223 = smul.u32 2, %s18
        %vm224 = vcmask 64512
        %225 = vst.msk [vmem:[#allocation2] sm:$0xff] %vm224, 0.0
        %226 = vst.msk [vmem:[#allocation2 + $0x20] sm:$0xff] %vm224, 0.0
        %227 = vst.msk [vmem:[#allocation2 + $0x18] sm:$0xff] %vm224, 0.0
        %228 = vst.msk [vmem:[#allocation2 + $0x38] sm:$0xff] %vm224, 0.0
        %229 = vst.msk [vmem:[#allocation4] sm:$0xff] %vm224, 0.0
        %230 = vst.msk [vmem:[#allocation4 + $0x8] sm:$0xff] %vm224, 0.0
        %231 = vst.msk [vmem:[#allocation4 + $0x10] sm:$0xff] %vm224, 0.0
        %232 = vst.msk [vmem:[#allocation4 + $0x18] sm:$0xff] %vm224, 0.0
        %v233 = vld [vmem:[%s221] sm:$0xff]
        %v234 = vld [vmem:[%s221 + $0x8] sm:$0xff]
        %v235 = vld [vmem:[%s221 + $0x10] sm:$0xff]
        %v236 = vld [vmem:[%s221 + $0x18] sm:$0xff]
        %237 = vst.msk [vmem:[#allocation2 + $0x8] sm:$0xff] %vm224, %v233
        %238 = vst.msk [vmem:[#allocation2 + $0x10] sm:$0xff] %vm224, %v234
        %239 = vst.msk [vmem:[#allocation2 + $0x28] sm:$0xff] %vm224, %v235
        %240 = vst.msk [vmem:[#allocation2 + $0x30] sm:$0xff] %vm224, %v236
        %v241 = vld [vmem:[#allocation2 + $0x7] sm:$0xff]
        %v242 = vld [vmem:[#allocation2 + $0xf] sm:$0xff]
        %v243 = vld [vmem:[#allocation2 + $0x27] sm:$0xff]
        %v244 = vld [vmem:[#allocation2 + $0x2f] sm:$0xff]
        %245 = vst.msk [vmem:[#allocation3] sm:$0xff] %vm224, %v241
        %246 = vst.msk [vmem:[#allocation3 + $0x8] sm:$0xff] %vm224, %v242
        %247 = vst.msk [vmem:[#allocation3 + $0x10] sm:$0xff] %vm224, %v243
        %248 = vst.msk [vmem:[#allocation3 + $0x18] sm:$0xff] %vm224, %v244
        %v249 = vld [vmem:[#allocation2 + $0x8] sm:$0xff]
        %v250 = vld [vmem:[#allocation2 + $0x10] sm:$0xff]
        %v251 = vld [vmem:[#allocation2 + $0x28] sm:$0xff]
        %v252 = vld [vmem:[#allocation2 + $0x30] sm:$0xff]
        %257 = vrot.lane.b32.xlu0 %v249, 8
        %v258 = vpop.permute.xlu0 %257
        %259 = vrot.lane.b32.xlu0 %v250, 8
        %v260 = vpop.permute.xlu0 %259
        %261 = vrot.lane.b32.xlu0 %v251, 8
        %v262 = vpop.permute.xlu0 %261
        %263 = vrot.lane.b32.xlu0 %v252, 8
        %v264 = vpop.permute.xlu0 %263
        %vm269 = vcmask 130112
        %270 = vst.msk [vmem:[#allocation3] sm:$0xff] %vm269, %v258
        %271 = vst.msk [vmem:[#allocation3 + $0x8] sm:$0xff] %vm269, %v260
        %272 = vst.msk [vmem:[#allocation3 + $0x10] sm:$0xff] %vm269, %v262
        %273 = vst.msk [vmem:[#allocation3 + $0x18] sm:$0xff] %vm269, %v264
        %v274 = vld [vmem:[#allocation2 + $0x9] sm:$0xff]
        %v275 = vld [vmem:[#allocation2 + $0x11] sm:$0xff]
        %v276 = vld [vmem:[#allocation2 + $0x29] sm:$0xff]
        %v277 = vld [vmem:[#allocation2 + $0x31] sm:$0xff]
        %282 = vrot.lane.b32.xlu0 %v274, 16
        %v283 = vpop.permute.xlu0 %282
        %284 = vrot.lane.b32.xlu0 %v275, 16
        %v285 = vpop.permute.xlu0 %284
        %286 = vrot.lane.b32.xlu0 %v276, 16
        %v287 = vpop.permute.xlu0 %286
        %288 = vrot.lane.b32.xlu0 %v277, 16
        %v289 = vpop.permute.xlu0 %288
        %vm294 = vcmask 195712
        %295 = vst.msk [vmem:[#allocation3] sm:$0xff] %vm294, %v283
        %296 = vst.msk [vmem:[#allocation3 + $0x8] sm:$0xff] %vm294, %v285
        %297 = vst.msk [vmem:[#allocation3 + $0x10] sm:$0xff] %vm294, %v287
        %298 = vst.msk [vmem:[#allocation3 + $0x18] sm:$0xff] %vm294, %v289
        %v299 = vld [vmem:[#allocation3] sm:$0xff]
        %v300 = vld [vmem:[#allocation3 + $0x8] sm:$0xff]
        %v301 = vld [vmem:[#allocation3 + $0x10] sm:$0xff]
        %v302 = vld [vmem:[#allocation3 + $0x18] sm:$0xff]
        %v303 = vld [vmem:[%s2] sm:$0xff]
        %v304 = vld [vmem:[%s2 + $0x8] sm:$0xff]
        %v305 = vld [vmem:[%s2 + $0x10] sm:$0xff]
        %vm306 = vcmask 195584
        %v308 = vsel %vm306, %v299, 0
        %v311 = vsel %vm306, %v300, 0
        %v314 = vsel %vm306, %v301, 0
        %v317 = vsel %vm306, %v302, 0
        %319 = vmatpush.msra.mxu0 0.0
        %320 = vmatpush.msra.mxu0 0.0
        %321 = vmatpush.msra.mxu0 0.0
        %322 = vmatpush.msra.mxu0 0.0
        %323 = vmatpush.msra.mxu0 0.0
        %324 = vmatpush.msra.mxu0 0.0
        %325 = vmatpush.msra.mxu0 0.0
        %326 = vmatpush.msra.mxu0 0.0
        %327 = vmatpush.msra.mxu0 0.0
        %328 = vmatpush.msra.mxu0 0.0
        %329 = vmatpush.msra.mxu0 0.0
        %330 = vmatpush.msra.mxu0 0.0
        %331 = vmatpush.msra.mxu0 0.0
        %332 = vmatpush.msra.mxu0 %v305
        %333 = vmatpush.msra.mxu0 %v304
        %334 = vmatpush.msra.mxu0 %v303
        %335 = vmatmul.f32.gmra.mxu0 %v308
        %v336 = vpop.f32.mrf.mxu0
        %v337 = vadd.f32 0.0, %v336
        %338 = vmatmul.f32.gmra.mxu0 %v311
        %v339 = vpop.f32.mrf.mxu0
        %v340 = vadd.f32 0.0, %v339
        %341 = vmatmul.f32.gmra.mxu0 %v314
        %v342 = vpop.f32.mrf.mxu0
        %v343 = vadd.f32 0.0, %v342
        %344 = vmatmul.f32.gmra.mxu0 %v317
        %v345 = vpop.f32.mrf.mxu0
        %v346 = vadd.f32 0.0, %v345
        %347 = vdwg.mxu0
        %vm348 = vcmask 261120
        %v349 = vsel %vm348, %v337, 0.0
        %v350 = vsel %vm348, %v340, 0.0
        %v351 = vadd.f32 %v349, %v350
        %v352 = vrot.slane %v351, 4
        %v353 = vadd.f32 %v351, %v352
        %v354 = vrot.slane %v353, 2
        %v355 = vadd.f32 %v353, %v354
        %v356 = vrot.slane %v355, 1
        %v357 = vadd.f32 %v355, %v356
        %v358 = vsel %vm348, %v343, 0.0
        %v359 = vsel %vm348, %v346, 0.0
        %v360 = vadd.f32 %v358, %v359
        %v361 = vrot.slane %v360, 4
        %v362 = vadd.f32 %v360, %v361
        %v363 = vrot.slane %v362, 2
        %v364 = vadd.f32 %v362, %v363
        %v365 = vrot.slane %v364, 1
        %v366 = vadd.f32 %v364, %v365
        %v367 = vrcp.pop 16.0
        %v368 = vmul.f32 16.0, %v367
        %v369 = vsub.f32 1.0, %v368
        %v370 = vmul.f32 %v367, %v369
        %v371 = vadd.f32 %v367, %v370
        %vm372 = vweird.f32 %v367
        %v373 = vsel %vm372, %v367, %v371
        %v374 = vmul.f32 %v357, %v373
        %v375 = vmul.f32 %v366, %v373
        %v376 = vsub.f32 %v337, %v374
        %v377 = vsub.f32 %v340, %v374
        %v378 = vsub.f32 %v343, %v375
        %v379 = vsub.f32 %v346, %v375
        %v380 = vmul.f32 %v376, %v376
        %v381 = vmul.f32 %v377, %v377
        %v382 = vmul.f32 %v378, %v378
        %v383 = vmul.f32 %v379, %v379
        %v384 = vsel %vm348, %v380, 0.0
        %v385 = vsel %vm348, %v381, 0.0
        %v386 = vadd.f32 %v384, %v385
        %v387 = vrot.slane %v386, 4
        %v388 = vadd.f32 %v386, %v387
        %v389 = vrot.slane %v388, 2
        %v390 = vadd.f32 %v388, %v389
        %v391 = vrot.slane %v390, 1
        %v392 = vadd.f32 %v390, %v391
        %v393 = vsel %vm348, %v382, 0.0
        %v394 = vsel %vm348, %v383, 0.0
        %v395 = vadd.f32 %v393, %v394
        %v396 = vrot.slane %v395, 4
        %v397 = vadd.f32 %v395, %v396
        %v398 = vrot.slane %v397, 2
        %v399 = vadd.f32 %v397, %v398
        %v400 = vrot.slane %v399, 1
        %v401 = vadd.f32 %v399, %v400
        %v402 = vmul.f32 %v392, %v373
        %v403 = vmul.f32 %v401, %v373
        %v404 = vadd.f32 %v402, 1e-05
        %v405 = vadd.f32 %v403, 1e-05
        %v406 = vrsqrt.pop %v404
        %v407 = vmul.f32 %v406, %v404
        %v408 = vmul.f32 %v407, %v406
        %v409 = vmul.f32 0.5, %v408
        %v410 = vsub.f32 1.5, %v409
        %v411 = vmul.f32 %v406, %v410
        %vm412 = vweird.f32 %v404
        %vm413 = vweird.f32 %v406
        %vm414 = vmor %vm412, %vm413
        %v415 = vsel %vm414, %v406, %v411
        %v416 = vrsqrt.pop %v405
        %v417 = vmul.f32 %v416, %v405
        %v418 = vmul.f32 %v417, %v416
        %v419 = vmul.f32 0.5, %v418
        %v420 = vsub.f32 1.5, %v419
        %v421 = vmul.f32 %v416, %v420
        %vm422 = vweird.f32 %v405
        %vm423 = vweird.f32 %v416
        %vm424 = vmor %vm422, %vm423
        %v425 = vsel %vm424, %v416, %v421
        %v426 = vmul.f32 %v376, %v415
        %v427 = vmul.f32 %v377, %v415
        %v428 = vmul.f32 %v378, %v425
        %v429 = vmul.f32 %v379, %v425
        %v430 = vld [vmem:[%s214] sm:$0x1]
        %v431 = vld [vmem:[%s214 + $0x8] sm:$0x1]
        %v432 = vperm.slane %v430, 0
        %v433 = vperm.slane %v431, 0
        %v434 = vadd.f32 %v426, %v432
        %v435 = vadd.f32 %v427, %v432
        %v436 = vadd.f32 %v428, %v433
        %v437 = vadd.f32 %v429, %v433
        %v438 = vxor.u32 %v434, 2147483648
        %v439 = vxor.u32 %v435, 2147483648
        %v440 = vxor.u32 %v436, 2147483648
        %v441 = vxor.u32 %v437, 2147483648
        %v442 = vmul.f32 %v438, 1.442695
        %v443 = vpow.pop %v442
        %v444 = vmul.f32 %v439, 1.442695
        %v445 = vpow.pop %v444
        %v446 = vmul.f32 %v440, 1.442695
        %v447 = vpow.pop %v446
        %v448 = vmul.f32 %v441, 1.442695
        %v449 = vpow.pop %v448
        %v450 = vadd.f32 %v443, 1.0
        %v451 = vadd.f32 %v445, 1.0
        %v452 = vadd.f32 %v447, 1.0
        %v453 = vadd.f32 %v449, 1.0
        %v454 = vrcp.pop %v450
        %v455 = vmul.f32 %v450, %v454
        %v456 = vsub.f32 1.0, %v455
        %v457 = vmul.f32 %v454, %v456
        %v458 = vadd.f32 %v454, %v457
        %vm459 = vweird.f32 %v450
        %vm460 = vweird.f32 %v454
        %vm461 = vmor %vm459, %vm460
        %v462 = vsel %vm461, %v454, %v458
        %v463 = vand.u32 2147483647, %v450
        %vm464 = vcmp.eq.f32.partialorder %v463, 8.507059e+37
        %v465 = vand.u32 %v450, 2147483648
        %v466 = vor.u32 1.1754944e-38, %v465
        %v467 = vsel %vm464, %v466, %v462
        %v468 = vmul.f32 1.0, %v467
        %v469 = vrcp.pop %v451
        %v470 = vmul.f32 %v451, %v469
        %v471 = vsub.f32 1.0, %v470
        %v472 = vmul.f32 %v469, %v471
        %v473 = vadd.f32 %v469, %v472
        %vm474 = vweird.f32 %v451
        %vm475 = vweird.f32 %v469
        %vm476 = vmor %vm474, %vm475
        %v477 = vsel %vm476, %v469, %v473
        %v478 = vand.u32 2147483647, %v451
        %vm479 = vcmp.eq.f32.partialorder %v478, 8.507059e+37
        %v480 = vand.u32 %v451, 2147483648
        %v481 = vor.u32 1.1754944e-38, %v480
        %v482 = vsel %vm479, %v481, %v477
        %v483 = vmul.f32 1.0, %v482
        %v484 = vrcp.pop %v452
        %v485 = vmul.f32 %v452, %v484
        %v486 = vsub.f32 1.0, %v485
        %v487 = vmul.f32 %v484, %v486
        %v488 = vadd.f32 %v484, %v487
        %vm489 = vweird.f32 %v452
        %vm490 = vweird.f32 %v484
        %vm491 = vmor %vm489, %vm490
        %v492 = vsel %vm491, %v484, %v488
        %v493 = vand.u32 2147483647, %v452
        %vm494 = vcmp.eq.f32.partialorder %v493, 8.507059e+37
        %v495 = vand.u32 %v452, 2147483648
        %v496 = vor.u32 1.1754944e-38, %v495
        %v497 = vsel %vm494, %v496, %v492
        %v498 = vmul.f32 1.0, %v497
        %v499 = vrcp.pop %v453
        %v500 = vmul.f32 %v453, %v499
        %v501 = vsub.f32 1.0, %v500
        %v502 = vmul.f32 %v499, %v501
        %v503 = vadd.f32 %v499, %v502
        %vm504 = vweird.f32 %v453
        %vm505 = vweird.f32 %v499
        %vm506 = vmor %vm504, %vm505
        %v507 = vsel %vm506, %v499, %v503
        %v508 = vand.u32 2147483647, %v453
        %vm509 = vcmp.eq.f32.partialorder %v508, 8.507059e+37
        %v510 = vand.u32 %v453, 2147483648
        %v511 = vor.u32 1.1754944e-38, %v510
        %v512 = vsel %vm509, %v511, %v507
        %v513 = vmul.f32 1.0, %v512
        %v514 = vtanh.pop %v434
        %v515 = vtanh.pop %v435
        %v516 = vtanh.pop %v436
        %v517 = vtanh.pop %v437
        %522 = vrot.lane.b32.xlu0 %v514, 16
        %v523 = vpop.permute.xlu0 %522
        %524 = vrot.lane.b32.xlu0 %v515, 16
        %v525 = vpop.permute.xlu0 %524
        %526 = vrot.lane.b32.xlu0 %v516, 16
        %v527 = vpop.permute.xlu0 %526
        %528 = vrot.lane.b32.xlu0 %v517, 16
        %v529 = vpop.permute.xlu0 %528
        %v534 = vmul.f32 %v468, %v523
        %v535 = vmul.f32 %v483, %v525
        %v536 = vmul.f32 %v498, %v527
        %v537 = vmul.f32 %v513, %v529
        %v538 = vld [vmem:[%s3] sm:$0xff]
        %v539 = vld [vmem:[%s3 + $0x8] sm:$0xff]
        %544 = vrot.lane.b32.xlu0 %v534, 112
        %v545 = vpop.permute.xlu0 %544
        %546 = vrot.lane.b32.xlu0 %v535, 112
        %v547 = vpop.permute.xlu0 %546
        %548 = vrot.lane.b32.xlu0 %v536, 112
        %v549 = vpop.permute.xlu0 %548
        %550 = vrot.lane.b32.xlu0 %v537, 112
        %v551 = vpop.permute.xlu0 %550
        %vm552 = vcmask 130048
        %v553 = vsel %vm552, %v545, 0
        %v555 = vsel %vm552, %v547, 0
        %v557 = vsel %vm552, %v549, 0
        %v559 = vsel %vm552, %v551, 0
        %561 = vmatpush.msra.mxu0 0.0
        %562 = vmatpush.msra.mxu0 0.0
        %563 = vmatpush.msra.mxu0 0.0
        %564 = vmatpush.msra.mxu0 0.0
        %565 = vmatpush.msra.mxu0 0.0
        %566 = vmatpush.msra.mxu0 0.0
        %567 = vmatpush.msra.mxu0 0.0
        %568 = vmatpush.msra.mxu0 0.0
        %569 = vmatpush.msra.mxu0 0.0
        %570 = vmatpush.msra.mxu0 0.0
        %571 = vmatpush.msra.mxu0 0.0
        %572 = vmatpush.msra.mxu0 0.0
        %573 = vmatpush.msra.mxu0 0.0
        %574 = vmatpush.msra.mxu0 0.0
        %575 = vmatpush.msra.mxu0 %v539
        %576 = vmatpush.msra.mxu0 %v538
        %577 = vmatmul.f32.gmra.mxu0 %v553
        %v578 = vpop.f32.mrf.mxu0
        %v579 = vadd.f32 0.0, %v578
        %580 = vmatmul.f32.gmra.mxu0 %v555
        %v581 = vpop.f32.mrf.mxu0
        %v582 = vadd.f32 0.0, %v581
        %583 = vmatmul.f32.gmra.mxu0 %v557
        %v584 = vpop.f32.mrf.mxu0
        %v585 = vadd.f32 0.0, %v584
        %586 = vmatmul.f32.gmra.mxu0 %v559
        %v587 = vpop.f32.mrf.mxu0
        %v588 = vadd.f32 0.0, %v587
        %589 = vdwg.mxu0
        %v590 = vsel %vm552, %v579, 0.0
        %v591 = vsel %vm552, %v582, 0.0
        %v592 = vadd.f32 %v590, %v591
        %v593 = vrot.slane %v592, 4
        %v594 = vadd.f32 %v592, %v593
        %v595 = vrot.slane %v594, 2
        %v596 = vadd.f32 %v594, %v595
        %v597 = vrot.slane %v596, 1
        %v598 = vadd.f32 %v596, %v597
        %v599 = vsel %vm552, %v585, 0.0
        %v600 = vsel %vm552, %v588, 0.0
        %v601 = vadd.f32 %v599, %v600
        %v602 = vrot.slane %v601, 4
        %v603 = vadd.f32 %v601, %v602
        %v604 = vrot.slane %v603, 2
        %v605 = vadd.f32 %v603, %v604
        %v606 = vrot.slane %v605, 1
        %v607 = vadd.f32 %v605, %v606
        %v608 = vmul.f32 %v598, %v373
        %v609 = vmul.f32 %v607, %v373
        %v610 = vsub.f32 %v579, %v608
        %v611 = vsub.f32 %v582, %v608
        %v612 = vsub.f32 %v585, %v609
        %v613 = vsub.f32 %v588, %v609
        %v614 = vmul.f32 %v610, %v610
        %v615 = vmul.f32 %v611, %v611
        %v616 = vmul.f32 %v612, %v612
        %v617 = vmul.f32 %v613, %v613
        %v618 = vsel %vm552, %v614, 0.0
        %v619 = vsel %vm552, %v615, 0.0
        %v620 = vadd.f32 %v618, %v619
        %v621 = vrot.slane %v620, 4
        %v622 = vadd.f32 %v620, %v621
        %v623 = vrot.slane %v622, 2
        %v624 = vadd.f32 %v622, %v623
        %v625 = vrot.slane %v624, 1
        %v626 = vadd.f32 %v624, %v625
        %v627 = vsel %vm552, %v616, 0.0
        %v628 = vsel %vm552, %v617, 0.0
        %v629 = vadd.f32 %v627, %v628
        %v630 = vrot.slane %v629, 4
        %v631 = vadd.f32 %v629, %v630
        %v632 = vrot.slane %v631, 2
        %v633 = vadd.f32 %v631, %v632
        %v634 = vrot.slane %v633, 1
        %v635 = vadd.f32 %v633, %v634
        %v636 = vmul.f32 %v626, %v373
        %v637 = vmul.f32 %v635, %v373
        %v638 = vadd.f32 %v636, 1e-05
        %v639 = vadd.f32 %v637, 1e-05
        %v640 = vrsqrt.pop %v638
        %v641 = vmul.f32 %v640, %v638
        %v642 = vmul.f32 %v641, %v640
        %v643 = vmul.f32 0.5, %v642
        %v644 = vsub.f32 1.5, %v643
        %v645 = vmul.f32 %v640, %v644
        %vm646 = vweird.f32 %v638
        %vm647 = vweird.f32 %v640
        %vm648 = vmor %vm646, %vm647
        %v649 = vsel %vm648, %v640, %v645
        %v650 = vrsqrt.pop %v639
        %v651 = vmul.f32 %v650, %v639
        %v652 = vmul.f32 %v651, %v650
        %v653 = vmul.f32 0.5, %v652
        %v654 = vsub.f32 1.5, %v653
        %v655 = vmul.f32 %v650, %v654
        %vm656 = vweird.f32 %v639
        %vm657 = vweird.f32 %v650
        %vm658 = vmor %vm656, %vm657
        %v659 = vsel %vm658, %v650, %v655
        %v660 = vmul.f32 %v610, %v649
        %v661 = vmul.f32 %v611, %v649
        %v662 = vmul.f32 %v612, %v659
        %v663 = vmul.f32 %v613, %v659
        %v664 = vadd.f32 %v233, %v660
        %v665 = vadd.f32 %v234, %v661
        %v666 = vadd.f32 %v235, %v662
        %v667 = vadd.f32 %v236, %v663
        %v668 = vld [vmem:[#allocation4] sm:$0xff]
        %v669 = vld [vmem:[#allocation4 + $0x8] sm:$0xff]
        %v670 = vld [vmem:[#allocation4 + $0x10] sm:$0xff]
        %v671 = vld [vmem:[#allocation4 + $0x18] sm:$0xff]
        %676 = vrot.lane.b32.xlu0 %v660, 120
        %v677 = vpop.permute.xlu0 %676
        %678 = vrot.lane.b32.xlu0 %v661, 120
        %v679 = vpop.permute.xlu0 %678
        %680 = vrot.lane.b32.xlu0 %v662, 120
        %v681 = vpop.permute.xlu0 %680
        %682 = vrot.lane.b32.xlu0 %v663, 120
        %v683 = vpop.permute.xlu0 %682
        %v688 = vadd.f32 %v668, %v677
        %v689 = vadd.f32 %v669, %v679
        %v690 = vadd.f32 %v670, %v681
        %v691 = vadd.f32 %v671, %v683
        %692 = vst.msk [vmem:[#allocation4] sm:$0xff] %vm224, %v688
        %693 = vst.msk [vmem:[#allocation4 + $0x8] sm:$0xff] %vm224, %v689
        %694 = vst.msk [vmem:[#allocation4 + $0x10] sm:$0xff] %vm224, %v690
        %695 = vst.msk [vmem:[#allocation4 + $0x18] sm:$0xff] %vm224, %v691
        %696 = vst.msk [vmem:[#allocation2 + $0x8] sm:$0xff] %vm224, %v664
        %697 = vst.msk [vmem:[#allocation2 + $0x10] sm:$0xff] %vm224, %v665
        %698 = vst.msk [vmem:[#allocation2 + $0x28] sm:$0xff] %vm224, %v666
        %699 = vst.msk [vmem:[#allocation2 + $0x30] sm:$0xff] %vm224, %v667
        %v700 = vld [vmem:[#allocation2 + $0x6] sm:$0xff]
        %v701 = vld [vmem:[#allocation2 + $0xe] sm:$0xff]
        %v702 = vld [vmem:[#allocation2 + $0x26] sm:$0xff]
        %v703 = vld [vmem:[#allocation2 + $0x2e] sm:$0xff]
        %704 = vst.msk [vmem:[#allocation3] sm:$0xff] %vm224, %v700
        %705 = vst.msk [vmem:[#allocation3 + $0x8] sm:$0xff] %vm224, %v701
        %706 = vst.msk [vmem:[#allocation3 + $0x10] sm:$0xff] %vm224, %v702
        %707 = vst.msk [vmem:[#allocation3 + $0x18] sm:$0xff] %vm224, %v703
        %v708 = vld [vmem:[#allocation2 + $0x8] sm:$0xff]
        %v709 = vld [vmem:[#allocation2 + $0x10] sm:$0xff]
        %v710 = vld [vmem:[#allocation2 + $0x28] sm:$0xff]
        %v711 = vld [vmem:[#allocation2 + $0x30] sm:$0xff]
        %716 = vrot.lane.b32.xlu0 %v708, 8
        %v717 = vpop.permute.xlu0 %716
        %718 = vrot.lane.b32.xlu0 %v709, 8
        %v719 = vpop.permute.xlu0 %718
        %720 = vrot.lane.b32.xlu0 %v710, 8
        %v721 = vpop.permute.xlu0 %720
        %722 = vrot.lane.b32.xlu0 %v711, 8
        %v723 = vpop.permute.xlu0 %722
        %728 = vst.msk [vmem:[#allocation3] sm:$0xff] %vm269, %v717
        %729 = vst.msk [vmem:[#allocation3 + $0x8] sm:$0xff] %vm269, %v719
        %730 = vst.msk [vmem:[#allocation3 + $0x10] sm:$0xff] %vm269, %v721
        %731 = vst.msk [vmem:[#allocation3 + $0x18] sm:$0xff] %vm269, %v723
        %v732 = vld [vmem:[#allocation2 + $0xa] sm:$0xff]
        %v733 = vld [vmem:[#allocation2 + $0x12] sm:$0xff]
        %v734 = vld [vmem:[#allocation2 + $0x2a] sm:$0xff]
        %v735 = vld [vmem:[#allocation2 + $0x32] sm:$0xff]
        %740 = vrot.lane.b32.xlu0 %v732, 16
        %v741 = vpop.permute.xlu0 %740
        %742 = vrot.lane.b32.xlu0 %v733, 16
        %v743 = vpop.permute.xlu0 %742
        %744 = vrot.lane.b32.xlu0 %v734, 16
        %v745 = vpop.permute.xlu0 %744
        %746 = vrot.lane.b32.xlu0 %v735, 16
        %v747 = vpop.permute.xlu0 %746
        %752 = vst.msk [vmem:[#allocation3] sm:$0xff] %vm294, %v741
        %753 = vst.msk [vmem:[#allocation3 + $0x8] sm:$0xff] %vm294, %v743
        %754 = vst.msk [vmem:[#allocation3 + $0x10] sm:$0xff] %vm294, %v745
        %755 = vst.msk [vmem:[#allocation3 + $0x18] sm:$0xff] %vm294, %v747
        %v756 = vld [vmem:[#allocation3] sm:$0xff]
        %v757 = vld [vmem:[#allocation3 + $0x8] sm:$0xff]
        %v758 = vld [vmem:[#allocation3 + $0x10] sm:$0xff]
        %v759 = vld [vmem:[#allocation3 + $0x18] sm:$0xff]
        %s760 = scalar_lea.vmem %s2, 24
        %v761 = vld [vmem:[%s760] sm:$0xff]
        %v762 = vld [vmem:[%s760 + $0x8] sm:$0xff]
        %v763 = vld [vmem:[%s760 + $0x10] sm:$0xff]
        %v765 = vsel %vm306, %v756, 0
        %v768 = vsel %vm306, %v757, 0
        %v771 = vsel %vm306, %v758, 0
        %v774 = vsel %vm306, %v759, 0
        %776 = vmatpush.msra.mxu0 0.0
        %777 = vmatpush.msra.mxu0 0.0
        %778 = vmatpush.msra.mxu0 0.0
        %779 = vmatpush.msra.mxu0 0.0
        %780 = vmatpush.msra.mxu0 0.0
        %781 = vmatpush.msra.mxu0 0.0
        %782 = vmatpush.msra.mxu0 0.0
        %783 = vmatpush.msra.mxu0 0.0
        %784 = vmatpush.msra.mxu0 0.0
        %785 = vmatpush.msra.mxu0 0.0
        %786 = vmatpush.msra.mxu0 0.0
        %787 = vmatpush.msra.mxu0 0.0
        %788 = vmatpush.msra.mxu0 0.0
        %789 = vmatpush.msra.mxu0 %v763
        %790 = vmatpush.msra.mxu0 %v762
        %791 = vmatpush.msra.mxu0 %v761
        %792 = vmatmul.f32.gmra.mxu0 %v765
        %v793 = vpop.f32.mrf.mxu0
        %v794 = vadd.f32 0.0, %v793
        %795 = vmatmul.f32.gmra.mxu0 %v768
        %v796 = vpop.f32.mrf.mxu0
        %v797 = vadd.f32 0.0, %v796
        %798 = vmatmul.f32.gmra.mxu0 %v771
        %v799 = vpop.f32.mrf.mxu0
        %v800 = vadd.f32 0.0, %v799
        %801 = vmatmul.f32.gmra.mxu0 %v774
        %v802 = vpop.f32.mrf.mxu0
        %v803 = vadd.f32 0.0, %v802
        %804 = vdwg.mxu0
        %v805 = vsel %vm348, %v794, 0.0
        %v806 = vsel %vm348, %v797, 0.0
        %v807 = vadd.f32 %v805, %v806
        %v808 = vrot.slane %v807, 4
        %v809 = vadd.f32 %v807, %v808
        %v810 = vrot.slane %v809, 2
        %v811 = vadd.f32 %v809, %v810
        %v812 = vrot.slane %v811, 1
        %v813 = vadd.f32 %v811, %v812
        %v814 = vsel %vm348, %v800, 0.0
        %v815 = vsel %vm348, %v803, 0.0
        %v816 = vadd.f32 %v814, %v815
        %v817 = vrot.slane %v816, 4
        %v818 = vadd.f32 %v816, %v817
        %v819 = vrot.slane %v818, 2
        %v820 = vadd.f32 %v818, %v819
        %v821 = vrot.slane %v820, 1
        %v822 = vadd.f32 %v820, %v821
        %v823 = vmul.f32 %v813, %v373
        %v824 = vmul.f32 %v822, %v373
        %v825 = vsub.f32 %v794, %v823
        %v826 = vsub.f32 %v797, %v823
        %v827 = vsub.f32 %v800, %v824
        %v828 = vsub.f32 %v803, %v824
        %v829 = vmul.f32 %v825, %v825
        %v830 = vmul.f32 %v826, %v826
        %v831 = vmul.f32 %v827, %v827
        %v832 = vmul.f32 %v828, %v828
        %v833 = vsel %vm348, %v829, 0.0
        %v834 = vsel %vm348, %v830, 0.0
        %v835 = vadd.f32 %v833, %v834
        %v836 = vrot.slane %v835, 4
        %v837 = vadd.f32 %v835, %v836
        %v838 = vrot.slane %v837, 2
        %v839 = vadd.f32 %v837, %v838
        %v840 = vrot.slane %v839, 1
        %v841 = vadd.f32 %v839, %v840
        %v842 = vsel %vm348, %v831, 0.0
        %v843 = vsel %vm348, %v832, 0.0
        %v844 = vadd.f32 %v842, %v843
        %v845 = vrot.slane %v844, 4
        %v846 = vadd.f32 %v844, %v845
        %v847 = vrot.slane %v846, 2
        %v848 = vadd.f32 %v846, %v847
        %v849 = vrot.slane %v848, 1
        %v850 = vadd.f32 %v848, %v849
        %v851 = vmul.f32 %v841, %v373
        %v852 = vmul.f32 %v850, %v373
        %v853 = vadd.f32 %v851, 1e-05
        %v854 = vadd.f32 %v852, 1e-05
        %v855 = vrsqrt.pop %v853
        %v856 = vmul.f32 %v855, %v853
        %v857 = vmul.f32 %v856, %v855
        %v858 = vmul.f32 0.5, %v857
        %v859 = vsub.f32 1.5, %v858
        %v860 = vmul.f32 %v855, %v859
        %vm861 = vweird.f32 %v853
        %vm862 = vweird.f32 %v855
        %vm863 = vmor %vm861, %vm862
        %v864 = vsel %vm863, %v855, %v860
        %v865 = vrsqrt.pop %v854
        %v866 = vmul.f32 %v865, %v854
        %v867 = vmul.f32 %v866, %v865
        %v868 = vmul.f32 0.5, %v867
        %v869 = vsub.f32 1.5, %v868
        %v870 = vmul.f32 %v865, %v869
        %vm871 = vweird.f32 %v854
        %vm872 = vweird.f32 %v865
        %vm873 = vmor %vm871, %vm872
        %v874 = vsel %vm873, %v865, %v870
        %v875 = vmul.f32 %v825, %v864
        %v876 = vmul.f32 %v826, %v864
        %v877 = vmul.f32 %v827, %v874
        %v878 = vmul.f32 %v828, %v874
        %v879 = vld [vmem:[%s214 + $0x1] sm:$0x1]
        %v880 = vld [vmem:[%s214 + $0x9] sm:$0x1]
        %v881 = vperm.slane %v879, 0
        %v882 = vperm.slane %v880, 0
        %v883 = vadd.f32 %v875, %v881
        %v884 = vadd.f32 %v876, %v881
        %v885 = vadd.f32 %v877, %v882
        %v886 = vadd.f32 %v878, %v882
        %v887 = vxor.u32 %v883, 2147483648
        %v888 = vxor.u32 %v884, 2147483648
        %v889 = vxor.u32 %v885, 2147483648
        %v890 = vxor.u32 %v886, 2147483648
        %v891 = vmul.f32 %v887, 1.442695
        %v892 = vpow.pop %v891
        %v893 = vmul.f32 %v888, 1.442695
        %v894 = vpow.pop %v893
        %v895 = vmul.f32 %v889, 1.442695
        %v896 = vpow.pop %v895
        %v897 = vmul.f32 %v890, 1.442695
        %v898 = vpow.pop %v897
        %v899 = vadd.f32 %v892, 1.0
        %v900 = vadd.f32 %v894, 1.0
        %v901 = vadd.f32 %v896, 1.0
        %v902 = vadd.f32 %v898, 1.0
        %v903 = vrcp.pop %v899
        %v904 = vmul.f32 %v899, %v903
        %v905 = vsub.f32 1.0, %v904
        %v906 = vmul.f32 %v903, %v905
        %v907 = vadd.f32 %v903, %v906
        %vm908 = vweird.f32 %v899
        %vm909 = vweird.f32 %v903
        %vm910 = vmor %vm908, %vm909
        %v911 = vsel %vm910, %v903, %v907
        %v912 = vand.u32 2147483647, %v899
        %vm913 = vcmp.eq.f32.partialorder %v912, 8.507059e+37
        %v914 = vand.u32 %v899, 2147483648
        %v915 = vor.u32 1.1754944e-38, %v914
        %v916 = vsel %vm913, %v915, %v911
        %v917 = vmul.f32 1.0, %v916
        %v918 = vrcp.pop %v900
        %v919 = vmul.f32 %v900, %v918
        %v920 = vsub.f32 1.0, %v919
        %v921 = vmul.f32 %v918, %v920
        %v922 = vadd.f32 %v918, %v921
        %vm923 = vweird.f32 %v900
        %vm924 = vweird.f32 %v918
        %vm925 = vmor %vm923, %vm924
        %v926 = vsel %vm925, %v918, %v922
        %v927 = vand.u32 2147483647, %v900
        %vm928 = vcmp.eq.f32.partialorder %v927, 8.507059e+37
        %v929 = vand.u32 %v900, 2147483648
        %v930 = vor.u32 1.1754944e-38, %v929
        %v931 = vsel %vm928, %v930, %v926
        %v932 = vmul.f32 1.0, %v931
        %v933 = vrcp.pop %v901
        %v934 = vmul.f32 %v901, %v933
        %v935 = vsub.f32 1.0, %v934
        %v936 = vmul.f32 %v933, %v935
        %v937 = vadd.f32 %v933, %v936
        %vm938 = vweird.f32 %v901
        %vm939 = vweird.f32 %v933
        %vm940 = vmor %vm938, %vm939
        %v941 = vsel %vm940, %v933, %v937
        %v942 = vand.u32 2147483647, %v901
        %vm943 = vcmp.eq.f32.partialorder %v942, 8.507059e+37
        %v944 = vand.u32 %v901, 2147483648
        %v945 = vor.u32 1.1754944e-38, %v944
        %v946 = vsel %vm943, %v945, %v941
        %v947 = vmul.f32 1.0, %v946
        %v948 = vrcp.pop %v902
        %v949 = vmul.f32 %v902, %v948
        %v950 = vsub.f32 1.0, %v949
        %v951 = vmul.f32 %v948, %v950
        %v952 = vadd.f32 %v948, %v951
        %vm953 = vweird.f32 %v902
        %vm954 = vweird.f32 %v948
        %vm955 = vmor %vm953, %vm954
        %v956 = vsel %vm955, %v948, %v952
        %v957 = vand.u32 2147483647, %v902
        %vm958 = vcmp.eq.f32.partialorder %v957, 8.507059e+37
        %v959 = vand.u32 %v902, 2147483648
        %v960 = vor.u32 1.1754944e-38, %v959
        %v961 = vsel %vm958, %v960, %v956
        %v962 = vmul.f32 1.0, %v961
        %v963 = vtanh.pop %v883
        %v964 = vtanh.pop %v884
        %v965 = vtanh.pop %v885
        %v966 = vtanh.pop %v886
        %971 = vrot.lane.b32.xlu0 %v963, 16
        %v972 = vpop.permute.xlu0 %971
        %973 = vrot.lane.b32.xlu0 %v964, 16
        %v974 = vpop.permute.xlu0 %973
        %975 = vrot.lane.b32.xlu0 %v965, 16
        %v976 = vpop.permute.xlu0 %975
        %977 = vrot.lane.b32.xlu0 %v966, 16
        %v978 = vpop.permute.xlu0 %977
        %v983 = vmul.f32 %v917, %v972
        %v984 = vmul.f32 %v932, %v974
        %v985 = vmul.f32 %v947, %v976
        %v986 = vmul.f32 %v962, %v978
        %s987 = scalar_lea.vmem %s3, 16
        %v988 = vld [vmem:[%s987] sm:$0xff]
        %v989 = vld [vmem:[%s987 + $0x8] sm:$0xff]
        %994 = vrot.lane.b32.xlu0 %v983, 112
        %v995 = vpop.permute.xlu0 %994
        %996 = vrot.lane.b32.xlu0 %v984, 112
        %v997 = vpop.permute.xlu0 %996
        %998 = vrot.lane.b32.xlu0 %v985, 112
        %v999 = vpop.permute.xlu0 %998
        %1000 = vrot.lane.b32.xlu0 %v986, 112
        %v1001 = vpop.permute.xlu0 %1000
        %v1002 = vsel %vm552, %v995, 0
        %v1004 = vsel %vm552, %v997, 0
        %v1006 = vsel %vm552, %v999, 0
        %v1008 = vsel %vm552, %v1001, 0
        %1010 = vmatpush.msra.mxu0 0.0
        %1011 = vmatpush.msra.mxu0 0.0
        %1012 = vmatpush.msra.mxu0 0.0
        %1013 = vmatpush.msra.mxu0 0.0
        %1014 = vmatpush.msra.mxu0 0.0
        %1015 = vmatpush.msra.mxu0 0.0
        %1016 = vmatpush.msra.mxu0 0.0
        %1017 = vmatpush.msra.mxu0 0.0
        %1018 = vmatpush.msra.mxu0 0.0
        %1019 = vmatpush.msra.mxu0 0.0
        %1020 = vmatpush.msra.mxu0 0.0
        %1021 = vmatpush.msra.mxu0 0.0
        %1022 = vmatpush.msra.mxu0 0.0
        %1023 = vmatpush.msra.mxu0 0.0
        %1024 = vmatpush.msra.mxu0 %v989
        %1025 = vmatpush.msra.mxu0 %v988
        %1026 = vmatmul.f32.gmra.mxu0 %v1002
        %v1027 = vpop.f32.mrf.mxu0
        %v1028 = vadd.f32 0.0, %v1027
        %1029 = vmatmul.f32.gmra.mxu0 %v1004
        %v1030 = vpop.f32.mrf.mxu0
        %v1031 = vadd.f32 0.0, %v1030
        %1032 = vmatmul.f32.gmra.mxu0 %v1006
        %v1033 = vpop.f32.mrf.mxu0
        %v1034 = vadd.f32 0.0, %v1033
        %1035 = vmatmul.f32.gmra.mxu0 %v1008
        %v1036 = vpop.f32.mrf.mxu0
        %v1037 = vadd.f32 0.0, %v1036
        %1038 = vdwg.mxu0
        %v1039 = vsel %vm552, %v1028, 0.0
        %v1040 = vsel %vm552, %v1031, 0.0
        %v1041 = vadd.f32 %v1039, %v1040
        %v1042 = vrot.slane %v1041, 4
        %v1043 = vadd.f32 %v1041, %v1042
        %v1044 = vrot.slane %v1043, 2
        %v1045 = vadd.f32 %v1043, %v1044
        %v1046 = vrot.slane %v1045, 1
        %v1047 = vadd.f32 %v1045, %v1046
        %v1048 = vsel %vm552, %v1034, 0.0
        %v1049 = vsel %vm552, %v1037, 0.0
        %v1050 = vadd.f32 %v1048, %v1049
        %v1051 = vrot.slane %v1050, 4
        %v1052 = vadd.f32 %v1050, %v1051
        %v1053 = vrot.slane %v1052, 2
        %v1054 = vadd.f32 %v1052, %v1053
        %v1055 = vrot.slane %v1054, 1
        %v1056 = vadd.f32 %v1054, %v1055
        %v1057 = vmul.f32 %v1047, %v373
        %v1058 = vmul.f32 %v1056, %v373
        %v1059 = vsub.f32 %v1028, %v1057
        %v1060 = vsub.f32 %v1031, %v1057
        %v1061 = vsub.f32 %v1034, %v1058
        %v1062 = vsub.f32 %v1037, %v1058
        %v1063 = vmul.f32 %v1059, %v1059
        %v1064 = vmul.f32 %v1060, %v1060
        %v1065 = vmul.f32 %v1061, %v1061
        %v1066 = vmul.f32 %v1062, %v1062
        %v1067 = vsel %vm552, %v1063, 0.0
        %v1068 = vsel %vm552, %v1064, 0.0
        %v1069 = vadd.f32 %v1067, %v1068
        %v1070 = vrot.slane %v1069, 4
        %v1071 = vadd.f32 %v1069, %v1070
        %v1072 = vrot.slane %v1071, 2
        %v1073 = vadd.f32 %v1071, %v1072
        %v1074 = vrot.slane %v1073, 1
        %v1075 = vadd.f32 %v1073, %v1074
        %v1076 = vsel %vm552, %v1065, 0.0
        %v1077 = vsel %vm552, %v1066, 0.0
        %v1078 = vadd.f32 %v1076, %v1077
        %v1079 = vrot.slane %v1078, 4
        %v1080 = vadd.f32 %v1078, %v1079
        %v1081 = vrot.slane %v1080, 2
        %v1082 = vadd.f32 %v1080, %v1081
        %v1083 = vrot.slane %v1082, 1
        %v1084 = vadd.f32 %v1082, %v1083
        %v1085 = vmul.f32 %v1075, %v373
        %v1086 = vmul.f32 %v1084, %v373
        %v1087 = vadd.f32 %v1085, 1e-05
        %v1088 = vadd.f32 %v1086, 1e-05
        %v1089 = vrsqrt.pop %v1087
        %v1090 = vmul.f32 %v1089, %v1087
        %v1091 = vmul.f32 %v1090, %v1089
        %v1092 = vmul.f32 0.5, %v1091
        %v1093 = vsub.f32 1.5, %v1092
        %v1094 = vmul.f32 %v1089, %v1093
        %vm1095 = vweird.f32 %v1087
        %vm1096 = vweird.f32 %v1089
        %vm1097 = vmor %vm1095, %vm1096
        %v1098 = vsel %vm1097, %v1089, %v1094
        %v1099 = vrsqrt.pop %v1088
        %v1100 = vmul.f32 %v1099, %v1088
        %v1101 = vmul.f32 %v1100, %v1099
        %v1102 = vmul.f32 0.5, %v1101
        %v1103 = vsub.f32 1.5, %v1102
        %v1104 = vmul.f32 %v1099, %v1103
        %vm1105 = vweird.f32 %v1088
        %vm1106 = vweird.f32 %v1099
        %vm1107 = vmor %vm1105, %vm1106
        %v1108 = vsel %vm1107, %v1099, %v1104
        %v1109 = vmul.f32 %v1059, %v1098
        %v1110 = vmul.f32 %v1060, %v1098
        %v1111 = vmul.f32 %v1061, %v1108
        %v1112 = vmul.f32 %v1062, %v1108
        %v1113 = vadd.f32 %v664, %v1109
        %v1114 = vadd.f32 %v665, %v1110
        %v1115 = vadd.f32 %v666, %v1111
        %v1116 = vadd.f32 %v667, %v1112
        %v1117 = vld [vmem:[#allocation4] sm:$0xff]
        %v1118 = vld [vmem:[#allocation4 + $0x8] sm:$0xff]
        %v1119 = vld [vmem:[#allocation4 + $0x10] sm:$0xff]
        %v1120 = vld [vmem:[#allocation4 + $0x18] sm:$0xff]
        %1125 = vrot.lane.b32.xlu0 %v1109, 120
        %v1126 = vpop.permute.xlu0 %1125
        %1127 = vrot.lane.b32.xlu0 %v1110, 120
        %v1128 = vpop.permute.xlu0 %1127
        %1129 = vrot.lane.b32.xlu0 %v1111, 120
        %v1130 = vpop.permute.xlu0 %1129
        %1131 = vrot.lane.b32.xlu0 %v1112, 120
        %v1132 = vpop.permute.xlu0 %1131
        %v1137 = vadd.f32 %v1117, %v1126
        %v1138 = vadd.f32 %v1118, %v1128
        %v1139 = vadd.f32 %v1119, %v1130
        %v1140 = vadd.f32 %v1120, %v1132
        %1141 = vst.msk [vmem:[#allocation4] sm:$0xff] %vm224, %v1137
        %1142 = vst.msk [vmem:[#allocation4 + $0x8] sm:$0xff] %vm224, %v1138
        %1143 = vst.msk [vmem:[#allocation4 + $0x10] sm:$0xff] %vm224, %v1139
        %1144 = vst.msk [vmem:[#allocation4 + $0x18] sm:$0xff] %vm224, %v1140
        %1145 = vst.msk [vmem:[#allocation2 + $0x8] sm:$0xff] %vm224, %v1113
        %1146 = vst.msk [vmem:[#allocation2 + $0x10] sm:$0xff] %vm224, %v1114
        %1147 = vst.msk [vmem:[#allocation2 + $0x28] sm:$0xff] %vm224, %v1115
        %1148 = vst.msk [vmem:[#allocation2 + $0x30] sm:$0xff] %vm224, %v1116
        %v1149 = vld [vmem:[#allocation2 + $0x4] sm:$0xff]
        %v1150 = vld [vmem:[#allocation2 + $0xc] sm:$0xff]
        %v1151 = vld [vmem:[#allocation2 + $0x24] sm:$0xff]
        %v1152 = vld [vmem:[#allocation2 + $0x2c] sm:$0xff]
        %1153 = vst.msk [vmem:[#allocation3] sm:$0xff] %vm224, %v1149
        %1154 = vst.msk [vmem:[#allocation3 + $0x8] sm:$0xff] %vm224, %v1150
        %1155 = vst.msk [vmem:[#allocation3 + $0x10] sm:$0xff] %vm224, %v1151
        %1156 = vst.msk [vmem:[#allocation3 + $0x18] sm:$0xff] %vm224, %v1152
        %v1157 = vld [vmem:[#allocation2 + $0x8] sm:$0xff]
        %v1158 = vld [vmem:[#allocation2 + $0x10] sm:$0xff]
        %v1159 = vld [vmem:[#allocation2 + $0x28] sm:$0xff]
        %v1160 = vld [vmem:[#allocation2 + $0x30] sm:$0xff]
        %1165 = vrot.lane.b32.xlu0 %v1157, 8
        %v1166 = vpop.permute.xlu0 %1165
        %1167 = vrot.lane.b32.xlu0 %v1158, 8
        %v1168 = vpop.permute.xlu0 %1167
        %1169 = vrot.lane.b32.xlu0 %v1159, 8
        %v1170 = vpop.permute.xlu0 %1169
        %1171 = vrot.lane.b32.xlu0 %v1160, 8
        %v1172 = vpop.permute.xlu0 %1171
        %1177 = vst.msk [vmem:[#allocation3] sm:$0xff] %vm269, %v1166
        %1178 = vst.msk [vmem:[#allocation3 + $0x8] sm:$0xff] %vm269, %v1168
        %1179 = vst.msk [vmem:[#allocation3 + $0x10] sm:$0xff] %vm269, %v1170
        %1180 = vst.msk [vmem:[#allocation3 + $0x18] sm:$0xff] %vm269, %v1172
        %v1181 = vld [vmem:[#allocation2 + $0xc] sm:$0xff]
        %v1182 = vld [vmem:[#allocation2 + $0x14] sm:$0xff]
        %v1183 = vld [vmem:[#allocation2 + $0x2c] sm:$0xff]
        %v1184 = vld [vmem:[#allocation2 + $0x34] sm:$0xff]
        %1189 = vrot.lane.b32.xlu0 %v1181, 16
        %v1190 = vpop.permute.xlu0 %1189
        %1191 = vrot.lane.b32.xlu0 %v1182, 16
        %v1192 = vpop.permute.xlu0 %1191
        %1193 = vrot.lane.b32.xlu0 %v1183, 16
        %v1194 = vpop.permute.xlu0 %1193
        %1195 = vrot.lane.b32.xlu0 %v1184, 16
        %v1196 = vpop.permute.xlu0 %1195
        %1201 = vst.msk [vmem:[#allocation3] sm:$0xff] %vm294, %v1190
        %1202 = vst.msk [vmem:[#allocation3 + $0x8] sm:$0xff] %vm294, %v1192
        %1203 = vst.msk [vmem:[#allocation3 + $0x10] sm:$0xff] %vm294, %v1194
        %1204 = vst.msk [vmem:[#allocation3 + $0x18] sm:$0xff] %vm294, %v1196
        %v1205 = vld [vmem:[#allocation3] sm:$0xff]
        %v1206 = vld [vmem:[#allocation3 + $0x8] sm:$0xff]
        %v1207 = vld [vmem:[#allocation3 + $0x10] sm:$0xff]
        %v1208 = vld [vmem:[#allocation3 + $0x18] sm:$0xff]
        %s1209 = scalar_lea.vmem %s2, 48
        %v1210 = vld [vmem:[%s1209] sm:$0xff]
        %v1211 = vld [vmem:[%s1209 + $0x8] sm:$0xff]
        %v1212 = vld [vmem:[%s1209 + $0x10] sm:$0xff]
        %v1214 = vsel %vm306, %v1205, 0
        %v1217 = vsel %vm306, %v1206, 0
        %v1220 = vsel %vm306, %v1207, 0
        %v1223 = vsel %vm306, %v1208, 0
        %1225 = vmatpush.msra.mxu0 0.0
        %1226 = vmatpush.msra.mxu0 0.0
        %1227 = vmatpush.msra.mxu0 0.0
        %1228 = vmatpush.msra.mxu0 0.0
        %1229 = vmatpush.msra.mxu0 0.0
        %1230 = vmatpush.msra.mxu0 0.0
        %1231 = vmatpush.msra.mxu0 0.0
        %1232 = vmatpush.msra.mxu0 0.0
        %1233 = vmatpush.msra.mxu0 0.0
        %1234 = vmatpush.msra.mxu0 0.0
        %1235 = vmatpush.msra.mxu0 0.0
        %1236 = vmatpush.msra.mxu0 0.0
        %1237 = vmatpush.msra.mxu0 0.0
        %1238 = vmatpush.msra.mxu0 %v1212
        %1239 = vmatpush.msra.mxu0 %v1211
        %1240 = vmatpush.msra.mxu0 %v1210
        %1241 = vmatmul.f32.gmra.mxu0 %v1214
        %v1242 = vpop.f32.mrf.mxu0
        %v1243 = vadd.f32 0.0, %v1242
        %1244 = vmatmul.f32.gmra.mxu0 %v1217
        %v1245 = vpop.f32.mrf.mxu0
        %v1246 = vadd.f32 0.0, %v1245
        %1247 = vmatmul.f32.gmra.mxu0 %v1220
        %v1248 = vpop.f32.mrf.mxu0
        %v1249 = vadd.f32 0.0, %v1248
        %1250 = vmatmul.f32.gmra.mxu0 %v1223
        %v1251 = vpop.f32.mrf.mxu0
        %v1252 = vadd.f32 0.0, %v1251
        %1253 = vdwg.mxu0
        %v1254 = vsel %vm348, %v1243, 0.0
        %v1255 = vsel %vm348, %v1246, 0.0
        %v1256 = vadd.f32 %v1254, %v1255
        %v1257 = vrot.slane %v1256, 4
        %v1258 = vadd.f32 %v1256, %v1257
        %v1259 = vrot.slane %v1258, 2
        %v1260 = vadd.f32 %v1258, %v1259
        %v1261 = vrot.slane %v1260, 1
        %v1262 = vadd.f32 %v1260, %v1261
        %v1263 = vsel %vm348, %v1249, 0.0
        %v1264 = vsel %vm348, %v1252, 0.0
        %v1265 = vadd.f32 %v1263, %v1264
        %v1266 = vrot.slane %v1265, 4
        %v1267 = vadd.f32 %v1265, %v1266
        %v1268 = vrot.slane %v1267, 2
        %v1269 = vadd.f32 %v1267, %v1268
        %v1270 = vrot.slane %v1269, 1
        %v1271 = vadd.f32 %v1269, %v1270
        %v1272 = vmul.f32 %v1262, %v373
        %v1273 = vmul.f32 %v1271, %v373
        %v1274 = vsub.f32 %v1243, %v1272
        %v1275 = vsub.f32 %v1246, %v1272
        %v1276 = vsub.f32 %v1249, %v1273
        %v1277 = vsub.f32 %v1252, %v1273
        %v1278 = vmul.f32 %v1274, %v1274
        %v1279 = vmul.f32 %v1275, %v1275
        %v1280 = vmul.f32 %v1276, %v1276
        %v1281 = vmul.f32 %v1277, %v1277
        %v1282 = vsel %vm348, %v1278, 0.0
        %v1283 = vsel %vm348, %v1279, 0.0
        %v1284 = vadd.f32 %v1282, %v1283
        %v1285 = vrot.slane %v1284, 4
        %v1286 = vadd.f32 %v1284, %v1285
        %v1287 = vrot.slane %v1286, 2
        %v1288 = vadd.f32 %v1286, %v1287
        %v1289 = vrot.slane %v1288, 1
        %v1290 = vadd.f32 %v1288, %v1289
        %v1291 = vsel %vm348, %v1280, 0.0
        %v1292 = vsel %vm348, %v1281, 0.0
        %v1293 = vadd.f32 %v1291, %v1292
        %v1294 = vrot.slane %v1293, 4
        %v1295 = vadd.f32 %v1293, %v1294
        %v1296 = vrot.slane %v1295, 2
        %v1297 = vadd.f32 %v1295, %v1296
        %v1298 = vrot.slane %v1297, 1
        %v1299 = vadd.f32 %v1297, %v1298
        %v1300 = vmul.f32 %v1290, %v373
        %v1301 = vmul.f32 %v1299, %v373
        %v1302 = vadd.f32 %v1300, 1e-05
        %v1303 = vadd.f32 %v1301, 1e-05
        %v1304 = vrsqrt.pop %v1302
        %v1305 = vmul.f32 %v1304, %v1302
        %v1306 = vmul.f32 %v1305, %v1304
        %v1307 = vmul.f32 0.5, %v1306
        %v1308 = vsub.f32 1.5, %v1307
        %v1309 = vmul.f32 %v1304, %v1308
        %vm1310 = vweird.f32 %v1302
        %vm1311 = vweird.f32 %v1304
        %vm1312 = vmor %vm1310, %vm1311
        %v1313 = vsel %vm1312, %v1304, %v1309
        %v1314 = vrsqrt.pop %v1303
        %v1315 = vmul.f32 %v1314, %v1303
        %v1316 = vmul.f32 %v1315, %v1314
        %v1317 = vmul.f32 0.5, %v1316
        %v1318 = vsub.f32 1.5, %v1317
        %v1319 = vmul.f32 %v1314, %v1318
        %vm1320 = vweird.f32 %v1303
        %vm1321 = vweird.f32 %v1314
        %vm1322 = vmor %vm1320, %vm1321
        %v1323 = vsel %vm1322, %v1314, %v1319
        %v1324 = vmul.f32 %v1274, %v1313
        %v1325 = vmul.f32 %v1275, %v1313
        %v1326 = vmul.f32 %v1276, %v1323
        %v1327 = vmul.f32 %v1277, %v1323
        %v1328 = vld [vmem:[%s214 + $0x2] sm:$0x1]
        %v1329 = vld [vmem:[%s214 + $0xa] sm:$0x1]
        %v1330 = vperm.slane %v1328, 0
        %v1331 = vperm.slane %v1329, 0
        %v1332 = vadd.f32 %v1324, %v1330
        %v1333 = vadd.f32 %v1325, %v1330
        %v1334 = vadd.f32 %v1326, %v1331
        %v1335 = vadd.f32 %v1327, %v1331
        %v1336 = vxor.u32 %v1332, 2147483648
        %v1337 = vxor.u32 %v1333, 2147483648
        %v1338 = vxor.u32 %v1334, 2147483648
        %v1339 = vxor.u32 %v1335, 2147483648
        %v1340 = vmul.f32 %v1336, 1.442695
        %v1341 = vpow.pop %v1340
        %v1342 = vmul.f32 %v1337, 1.442695
        %v1343 = vpow.pop %v1342
        %v1344 = vmul.f32 %v1338, 1.442695
        %v1345 = vpow.pop %v1344
        %v1346 = vmul.f32 %v1339, 1.442695
        %v1347 = vpow.pop %v1346
        %v1348 = vadd.f32 %v1341, 1.0
        %v1349 = vadd.f32 %v1343, 1.0
        %v1350 = vadd.f32 %v1345, 1.0
        %v1351 = vadd.f32 %v1347, 1.0
        %v1352 = vrcp.pop %v1348
        %v1353 = vmul.f32 %v1348, %v1352
        %v1354 = vsub.f32 1.0, %v1353
        %v1355 = vmul.f32 %v1352, %v1354
        %v1356 = vadd.f32 %v1352, %v1355
        %vm1357 = vweird.f32 %v1348
        %vm1358 = vweird.f32 %v1352
        %vm1359 = vmor %vm1357, %vm1358
        %v1360 = vsel %vm1359, %v1352, %v1356
        %v1361 = vand.u32 2147483647, %v1348
        %vm1362 = vcmp.eq.f32.partialorder %v1361, 8.507059e+37
        %v1363 = vand.u32 %v1348, 2147483648
        %v1364 = vor.u32 1.1754944e-38, %v1363
        %v1365 = vsel %vm1362, %v1364, %v1360
        %v1366 = vmul.f32 1.0, %v1365
        %v1367 = vrcp.pop %v1349
        %v1368 = vmul.f32 %v1349, %v1367
        %v1369 = vsub.f32 1.0, %v1368
        %v1370 = vmul.f32 %v1367, %v1369
        %v1371 = vadd.f32 %v1367, %v1370
        %vm1372 = vweird.f32 %v1349
        %vm1373 = vweird.f32 %v1367
        %vm1374 = vmor %vm1372, %vm1373
        %v1375 = vsel %vm1374, %v1367, %v1371
        %v1376 = vand.u32 2147483647, %v1349
        %vm1377 = vcmp.eq.f32.partialorder %v1376, 8.507059e+37
        %v1378 = vand.u32 %v1349, 2147483648
        %v1379 = vor.u32 1.1754944e-38, %v1378
        %v1380 = vsel %vm1377, %v1379, %v1375
        %v1381 = vmul.f32 1.0, %v1380
        %v1382 = vrcp.pop %v1350
        %v1383 = vmul.f32 %v1350, %v1382
        %v1384 = vsub.f32 1.0, %v1383
        %v1385 = vmul.f32 %v1382, %v1384
        %v1386 = vadd.f32 %v1382, %v1385
        %vm1387 = vweird.f32 %v1350
        %vm1388 = vweird.f32 %v1382
        %vm1389 = vmor %vm1387, %vm1388
        %v1390 = vsel %vm1389, %v1382, %v1386
        %v1391 = vand.u32 2147483647, %v1350
        %vm1392 = vcmp.eq.f32.partialorder %v1391, 8.507059e+37
        %v1393 = vand.u32 %v1350, 2147483648
        %v1394 = vor.u32 1.1754944e-38, %v1393
        %v1395 = vsel %vm1392, %v1394, %v1390
        %v1396 = vmul.f32 1.0, %v1395
        %v1397 = vrcp.pop %v1351
        %v1398 = vmul.f32 %v1351, %v1397
        %v1399 = vsub.f32 1.0, %v1398
        %v1400 = vmul.f32 %v1397, %v1399
        %v1401 = vadd.f32 %v1397, %v1400
        %vm1402 = vweird.f32 %v1351
        %vm1403 = vweird.f32 %v1397
        %vm1404 = vmor %vm1402, %vm1403
        %v1405 = vsel %vm1404, %v1397, %v1401
        %v1406 = vand.u32 2147483647, %v1351
        %vm1407 = vcmp.eq.f32.partialorder %v1406, 8.507059e+37
        %v1408 = vand.u32 %v1351, 2147483648
        %v1409 = vor.u32 1.1754944e-38, %v1408
        %v1410 = vsel %vm1407, %v1409, %v1405
        %v1411 = vmul.f32 1.0, %v1410
        %v1412 = vtanh.pop %v1332
        %v1413 = vtanh.pop %v1333
        %v1414 = vtanh.pop %v1334
        %v1415 = vtanh.pop %v1335
        %1420 = vrot.lane.b32.xlu0 %v1412, 16
        %v1421 = vpop.permute.xlu0 %1420
        %1422 = vrot.lane.b32.xlu0 %v1413, 16
        %v1423 = vpop.permute.xlu0 %1422
        %1424 = vrot.lane.b32.xlu0 %v1414, 16
        %v1425 = vpop.permute.xlu0 %1424
        %1426 = vrot.lane.b32.xlu0 %v1415, 16
        %v1427 = vpop.permute.xlu0 %1426
        %v1432 = vmul.f32 %v1366, %v1421
        %v1433 = vmul.f32 %v1381, %v1423
        %v1434 = vmul.f32 %v1396, %v1425
        %v1435 = vmul.f32 %v1411, %v1427
        %s1436 = scalar_lea.vmem %s3, 32
        %v1437 = vld [vmem:[%s1436] sm:$0xff]
        %v1438 = vld [vmem:[%s1436 + $0x8] sm:$0xff]
        %1443 = vrot.lane.b32.xlu0 %v1432, 112
        %v1444 = vpop.permute.xlu0 %1443
        %1445 = vrot.lane.b32.xlu0 %v1433, 112
        %v1446 = vpop.permute.xlu0 %1445
        %1447 = vrot.lane.b32.xlu0 %v1434, 112
        %v1448 = vpop.permute.xlu0 %1447
        %1449 = vrot.lane.b32.xlu0 %v1435, 112
        %v1450 = vpop.permute.xlu0 %1449
        %v1451 = vsel %vm552, %v1444, 0
        %v1453 = vsel %vm552, %v1446, 0
        %v1455 = vsel %vm552, %v1448, 0
        %v1457 = vsel %vm552, %v1450, 0
        %1459 = vmatpush.msra.mxu0 0.0
        %1460 = vmatpush.msra.mxu0 0.0
        %1461 = vmatpush.msra.mxu0 0.0
        %1462 = vmatpush.msra.mxu0 0.0
        %1463 = vmatpush.msra.mxu0 0.0
        %1464 = vmatpush.msra.mxu0 0.0
        %1465 = vmatpush.msra.mxu0 0.0
        %1466 = vmatpush.msra.mxu0 0.0
        %1467 = vmatpush.msra.mxu0 0.0
        %1468 = vmatpush.msra.mxu0 0.0
        %1469 = vmatpush.msra.mxu0 0.0
        %1470 = vmatpush.msra.mxu0 0.0
        %1471 = vmatpush.msra.mxu0 0.0
        %1472 = vmatpush.msra.mxu0 0.0
        %1473 = vmatpush.msra.mxu0 %v1438
        %1474 = vmatpush.msra.mxu0 %v1437
        %1475 = vmatmul.f32.gmra.mxu0 %v1451
        %v1476 = vpop.f32.mrf.mxu0
        %v1477 = vadd.f32 0.0, %v1476
        %1478 = vmatmul.f32.gmra.mxu0 %v1453
        %v1479 = vpop.f32.mrf.mxu0
        %v1480 = vadd.f32 0.0, %v1479
        %1481 = vmatmul.f32.gmra.mxu0 %v1455
        %v1482 = vpop.f32.mrf.mxu0
        %v1483 = vadd.f32 0.0, %v1482
        %1484 = vmatmul.f32.gmra.mxu0 %v1457
        %v1485 = vpop.f32.mrf.mxu0
        %v1486 = vadd.f32 0.0, %v1485
        %1487 = vdwg.mxu0
        %v1488 = vsel %vm552, %v1477, 0.0
        %v1489 = vsel %vm552, %v1480, 0.0
        %v1490 = vadd.f32 %v1488, %v1489
        %v1491 = vrot.slane %v1490, 4
        %v1492 = vadd.f32 %v1490, %v1491
        %v1493 = vrot.slane %v1492, 2
        %v1494 = vadd.f32 %v1492, %v1493
        %v1495 = vrot.slane %v1494, 1
        %v1496 = vadd.f32 %v1494, %v1495
        %v1497 = vsel %vm552, %v1483, 0.0
        %v1498 = vsel %vm552, %v1486, 0.0
        %v1499 = vadd.f32 %v1497, %v1498
        %v1500 = vrot.slane %v1499, 4
        %v1501 = vadd.f32 %v1499, %v1500
        %v1502 = vrot.slane %v1501, 2
        %v1503 = vadd.f32 %v1501, %v1502
        %v1504 = vrot.slane %v1503, 1
        %v1505 = vadd.f32 %v1503, %v1504
        %v1506 = vmul.f32 %v1496, %v373
        %v1507 = vmul.f32 %v1505, %v373
        %v1508 = vsub.f32 %v1477, %v1506
        %v1509 = vsub.f32 %v1480, %v1506
        %v1510 = vsub.f32 %v1483, %v1507
        %v1511 = vsub.f32 %v1486, %v1507
        %v1512 = vmul.f32 %v1508, %v1508
        %v1513 = vmul.f32 %v1509, %v1509
        %v1514 = vmul.f32 %v1510, %v1510
        %v1515 = vmul.f32 %v1511, %v1511
        %v1516 = vsel %vm552, %v1512, 0.0
        %v1517 = vsel %vm552, %v1513, 0.0
        %v1518 = vadd.f32 %v1516, %v1517
        %v1519 = vrot.slane %v1518, 4
        %v1520 = vadd.f32 %v1518, %v1519
        %v1521 = vrot.slane %v1520, 2
        %v1522 = vadd.f32 %v1520, %v1521
        %v1523 = vrot.slane %v1522, 1
        %v1524 = vadd.f32 %v1522, %v1523
        %v1525 = vsel %vm552, %v1514, 0.0
        %v1526 = vsel %vm552, %v1515, 0.0
        %v1527 = vadd.f32 %v1525, %v1526
        %v1528 = vrot.slane %v1527, 4
        %v1529 = vadd.f32 %v1527, %v1528
        %v1530 = vrot.slane %v1529, 2
        %v1531 = vadd.f32 %v1529, %v1530
        %v1532 = vrot.slane %v1531, 1
        %v1533 = vadd.f32 %v1531, %v1532
        %v1534 = vmul.f32 %v1524, %v373
        %v1535 = vmul.f32 %v1533, %v373
        %v1536 = vadd.f32 %v1534, 1e-05
        %v1537 = vadd.f32 %v1535, 1e-05
        %v1538 = vrsqrt.pop %v1536
        %v1539 = vmul.f32 %v1538, %v1536
        %v1540 = vmul.f32 %v1539, %v1538
        %v1541 = vmul.f32 0.5, %v1540
        %v1542 = vsub.f32 1.5, %v1541
        %v1543 = vmul.f32 %v1538, %v1542
        %vm1544 = vweird.f32 %v1536
        %vm1545 = vweird.f32 %v1538
        %vm1546 = vmor %vm1544, %vm1545
        %v1547 = vsel %vm1546, %v1538, %v1543
        %v1548 = vrsqrt.pop %v1537
        %v1549 = vmul.f32 %v1548, %v1537
        %v1550 = vmul.f32 %v1549, %v1548
        %v1551 = vmul.f32 0.5, %v1550
        %v1552 = vsub.f32 1.5, %v1551
        %v1553 = vmul.f32 %v1548, %v1552
        %vm1554 = vweird.f32 %v1537
        %vm1555 = vweird.f32 %v1548
        %vm1556 = vmor %vm1554, %vm1555
        %v1557 = vsel %vm1556, %v1548, %v1553
        %v1558 = vmul.f32 %v1508, %v1547
        %v1559 = vmul.f32 %v1509, %v1547
        %v1560 = vmul.f32 %v1510, %v1557
        %v1561 = vmul.f32 %v1511, %v1557
        %v1562 = vadd.f32 %v1113, %v1558
        %v1563 = vadd.f32 %v1114, %v1559
        %v1564 = vadd.f32 %v1115, %v1560
        %v1565 = vadd.f32 %v1116, %v1561
        %v1566 = vld [vmem:[#allocation4] sm:$0xff]
        %v1567 = vld [vmem:[#allocation4 + $0x8] sm:$0xff]
        %v1568 = vld [vmem:[#allocation4 + $0x10] sm:$0xff]
        %v1569 = vld [vmem:[#allocation4 + $0x18] sm:$0xff]
        %1574 = vrot.lane.b32.xlu0 %v1558, 120
        %v1575 = vpop.permute.xlu0 %1574
        %1576 = vrot.lane.b32.xlu0 %v1559, 120
        %v1577 = vpop.permute.xlu0 %1576
        %1578 = vrot.lane.b32.xlu0 %v1560, 120
        %v1579 = vpop.permute.xlu0 %1578
        %1580 = vrot.lane.b32.xlu0 %v1561, 120
        %v1581 = vpop.permute.xlu0 %1580
        %v1586 = vadd.f32 %v1566, %v1575
        %v1587 = vadd.f32 %v1567, %v1577
        %v1588 = vadd.f32 %v1568, %v1579
        %v1589 = vadd.f32 %v1569, %v1581
        %1590 = vst.msk [vmem:[#allocation4] sm:$0xff] %vm224, %v1586
        %1591 = vst.msk [vmem:[#allocation4 + $0x8] sm:$0xff] %vm224, %v1587
        %1592 = vst.msk [vmem:[#allocation4 + $0x10] sm:$0xff] %vm224, %v1588
        %1593 = vst.msk [vmem:[#allocation4 + $0x18] sm:$0xff] %vm224, %v1589
        %1594 = vst.msk [vmem:[#allocation2 + $0x8] sm:$0xff] %vm224, %v1562
        %1595 = vst.msk [vmem:[#allocation2 + $0x10] sm:$0xff] %vm224, %v1563
        %1596 = vst.msk [vmem:[#allocation2 + $0x28] sm:$0xff] %vm224, %v1564
        %1597 = vst.msk [vmem:[#allocation2 + $0x30] sm:$0xff] %vm224, %v1565
        %v1598 = vld [vmem:[#allocation2 + $0x7] sm:$0xff]
        %v1599 = vld [vmem:[#allocation2 + $0xf] sm:$0xff]
        %v1600 = vld [vmem:[#allocation2 + $0x27] sm:$0xff]
        %v1601 = vld [vmem:[#allocation2 + $0x2f] sm:$0xff]
        %1602 = vst.msk [vmem:[#allocation3] sm:$0xff] %vm224, %v1598
        %1603 = vst.msk [vmem:[#allocation3 + $0x8] sm:$0xff] %vm224, %v1599
        %1604 = vst.msk [vmem:[#allocation3 + $0x10] sm:$0xff] %vm224, %v1600
        %1605 = vst.msk [vmem:[#allocation3 + $0x18] sm:$0xff] %vm224, %v1601
        %v1606 = vld [vmem:[#allocation2 + $0x8] sm:$0xff]
        %v1607 = vld [vmem:[#allocation2 + $0x10] sm:$0xff]
        %v1608 = vld [vmem:[#allocation2 + $0x28] sm:$0xff]
        %v1609 = vld [vmem:[#allocation2 + $0x30] sm:$0xff]
        %1614 = vrot.lane.b32.xlu0 %v1606, 8
        %v1615 = vpop.permute.xlu0 %1614
        %1616 = vrot.lane.b32.xlu0 %v1607, 8
        %v1617 = vpop.permute.xlu0 %1616
        %1618 = vrot.lane.b32.xlu0 %v1608, 8
        %v1619 = vpop.permute.xlu0 %1618
        %1620 = vrot.lane.b32.xlu0 %v1609, 8
        %v1621 = vpop.permute.xlu0 %1620
        %1626 = vst.msk [vmem:[#allocation3] sm:$0xff] %vm269, %v1615
        %1627 = vst.msk [vmem:[#allocation3 + $0x8] sm:$0xff] %vm269, %v1617
        %1628 = vst.msk [vmem:[#allocation3 + $0x10] sm:$0xff] %vm269, %v1619
        %1629 = vst.msk [vmem:[#allocation3 + $0x18] sm:$0xff] %vm269, %v1621
        %v1630 = vld [vmem:[#allocation2 + $0x9] sm:$0xff]
        %v1631 = vld [vmem:[#allocation2 + $0x11] sm:$0xff]
        %v1632 = vld [vmem:[#allocation2 + $0x29] sm:$0xff]
        %v1633 = vld [vmem:[#allocation2 + $0x31] sm:$0xff]
        %1638 = vrot.lane.b32.xlu0 %v1630, 16
        %v1639 = vpop.permute.xlu0 %1638
        %1640 = vrot.lane.b32.xlu0 %v1631, 16
        %v1641 = vpop.permute.xlu0 %1640
        %1642 = vrot.lane.b32.xlu0 %v1632, 16
        %v1643 = vpop.permute.xlu0 %1642
        %1644 = vrot.lane.b32.xlu0 %v1633, 16
        %v1645 = vpop.permute.xlu0 %1644
        %1650 = vst.msk [vmem:[#allocation3] sm:$0xff] %vm294, %v1639
        %1651 = vst.msk [vmem:[#allocation3 + $0x8] sm:$0xff] %vm294, %v1641
        %1652 = vst.msk [vmem:[#allocation3 + $0x10] sm:$0xff] %vm294, %v1643
        %1653 = vst.msk [vmem:[#allocation3 + $0x18] sm:$0xff] %vm294, %v1645
        %v1654 = vld [vmem:[#allocation3] sm:$0xff]
        %v1655 = vld [vmem:[#allocation3 + $0x8] sm:$0xff]
        %v1656 = vld [vmem:[#allocation3 + $0x10] sm:$0xff]
        %v1657 = vld [vmem:[#allocation3 + $0x18] sm:$0xff]
        %s1658 = scalar_lea.vmem %s2, 72
        %v1659 = vld [vmem:[%s1658] sm:$0xff]
        %v1660 = vld [vmem:[%s1658 + $0x8] sm:$0xff]
        %v1661 = vld [vmem:[%s1658 + $0x10] sm:$0xff]
        %v1663 = vsel %vm306, %v1654, 0
        %v1666 = vsel %vm306, %v1655, 0
        %v1669 = vsel %vm306, %v1656, 0
        %v1672 = vsel %vm306, %v1657, 0
        %1674 = vmatpush.msra.mxu0 0.0
        %1675 = vmatpush.msra.mxu0 0.0
        %1676 = vmatpush.msra.mxu0 0.0
        %1677 = vmatpush.msra.mxu0 0.0
        %1678 = vmatpush.msra.mxu0 0.0
        %1679 = vmatpush.msra.mxu0 0.0
        %1680 = vmatpush.msra.mxu0 0.0
        %1681 = vmatpush.msra.mxu0 0.0
        %1682 = vmatpush.msra.mxu0 0.0
        %1683 = vmatpush.msra.mxu0 0.0
        %1684 = vmatpush.msra.mxu0 0.0
        %1685 = vmatpush.msra.mxu0 0.0
        %1686 = vmatpush.msra.mxu0 0.0
        %1687 = vmatpush.msra.mxu0 %v1661
        %1688 = vmatpush.msra.mxu0 %v1660
        %1689 = vmatpush.msra.mxu0 %v1659
        %1690 = vmatmul.f32.gmra.mxu0 %v1663
        %v1691 = vpop.f32.mrf.mxu0
        %v1692 = vadd.f32 0.0, %v1691
        %1693 = vmatmul.f32.gmra.mxu0 %v1666
        %v1694 = vpop.f32.mrf.mxu0
        %v1695 = vadd.f32 0.0, %v1694
        %1696 = vmatmul.f32.gmra.mxu0 %v1669
        %v1697 = vpop.f32.mrf.mxu0
        %v1698 = vadd.f32 0.0, %v1697
        %1699 = vmatmul.f32.gmra.mxu0 %v1672
        %v1700 = vpop.f32.mrf.mxu0
        %v1701 = vadd.f32 0.0, %v1700
        %1702 = vdwg.mxu0
        %v1703 = vsel %vm348, %v1692, 0.0
        %v1704 = vsel %vm348, %v1695, 0.0
        %v1705 = vadd.f32 %v1703, %v1704
        %v1706 = vrot.slane %v1705, 4
        %v1707 = vadd.f32 %v1705, %v1706
        %v1708 = vrot.slane %v1707, 2
        %v1709 = vadd.f32 %v1707, %v1708
        %v1710 = vrot.slane %v1709, 1
        %v1711 = vadd.f32 %v1709, %v1710
        %v1712 = vsel %vm348, %v1698, 0.0
        %v1713 = vsel %vm348, %v1701, 0.0
        %v1714 = vadd.f32 %v1712, %v1713
        %v1715 = vrot.slane %v1714, 4
        %v1716 = vadd.f32 %v1714, %v1715
        %v1717 = vrot.slane %v1716, 2
        %v1718 = vadd.f32 %v1716, %v1717
        %v1719 = vrot.slane %v1718, 1
        %v1720 = vadd.f32 %v1718, %v1719
        %v1721 = vmul.f32 %v1711, %v373
        %v1722 = vmul.f32 %v1720, %v373
        %v1723 = vsub.f32 %v1692, %v1721
        %v1724 = vsub.f32 %v1695, %v1721
        %v1725 = vsub.f32 %v1698, %v1722
        %v1726 = vsub.f32 %v1701, %v1722
        %v1727 = vmul.f32 %v1723, %v1723
        %v1728 = vmul.f32 %v1724, %v1724
        %v1729 = vmul.f32 %v1725, %v1725
        %v1730 = vmul.f32 %v1726, %v1726
        %v1731 = vsel %vm348, %v1727, 0.0
        %v1732 = vsel %vm348, %v1728, 0.0
        %v1733 = vadd.f32 %v1731, %v1732
        %v1734 = vrot.slane %v1733, 4
        %v1735 = vadd.f32 %v1733, %v1734
        %v1736 = vrot.slane %v1735, 2
        %v1737 = vadd.f32 %v1735, %v1736
        %v1738 = vrot.slane %v1737, 1
        %v1739 = vadd.f32 %v1737, %v1738
        %v1740 = vsel %vm348, %v1729, 0.0
        %v1741 = vsel %vm348, %v1730, 0.0
        %v1742 = vadd.f32 %v1740, %v1741
        %v1743 = vrot.slane %v1742, 4
        %v1744 = vadd.f32 %v1742, %v1743
        %v1745 = vrot.slane %v1744, 2
        %v1746 = vadd.f32 %v1744, %v1745
        %v1747 = vrot.slane %v1746, 1
        %v1748 = vadd.f32 %v1746, %v1747
        %v1749 = vmul.f32 %v1739, %v373
        %v1750 = vmul.f32 %v1748, %v373
        %v1751 = vadd.f32 %v1749, 1e-05
        %v1752 = vadd.f32 %v1750, 1e-05
        %v1753 = vrsqrt.pop %v1751
        %v1754 = vmul.f32 %v1753, %v1751
        %v1755 = vmul.f32 %v1754, %v1753
        %v1756 = vmul.f32 0.5, %v1755
        %v1757 = vsub.f32 1.5, %v1756
        %v1758 = vmul.f32 %v1753, %v1757
        %vm1759 = vweird.f32 %v1751
        %vm1760 = vweird.f32 %v1753
        %vm1761 = vmor %vm1759, %vm1760
        %v1762 = vsel %vm1761, %v1753, %v1758
        %v1763 = vrsqrt.pop %v1752
        %v1764 = vmul.f32 %v1763, %v1752
        %v1765 = vmul.f32 %v1764, %v1763
        %v1766 = vmul.f32 0.5, %v1765
        %v1767 = vsub.f32 1.5, %v1766
        %v1768 = vmul.f32 %v1763, %v1767
        %vm1769 = vweird.f32 %v1752
        %vm1770 = vweird.f32 %v1763
        %vm1771 = vmor %vm1769, %vm1770
        %v1772 = vsel %vm1771, %v1763, %v1768
        %v1773 = vmul.f32 %v1723, %v1762
        %v1774 = vmul.f32 %v1724, %v1762
        %v1775 = vmul.f32 %v1725, %v1772
        %v1776 = vmul.f32 %v1726, %v1772
        %v1777 = vld [vmem:[%s214 + $0x3] sm:$0x1]
        %v1778 = vld [vmem:[%s214 + $0xb] sm:$0x1]
        %v1779 = vperm.slane %v1777, 0
        %v1780 = vperm.slane %v1778, 0
        %v1781 = vadd.f32 %v1773, %v1779
        %v1782 = vadd.f32 %v1774, %v1779
        %v1783 = vadd.f32 %v1775, %v1780
        %v1784 = vadd.f32 %v1776, %v1780
        %v1785 = vxor.u32 %v1781, 2147483648
        %v1786 = vxor.u32 %v1782, 2147483648
        %v1787 = vxor.u32 %v1783, 2147483648
        %v1788 = vxor.u32 %v1784, 2147483648
        %v1789 = vmul.f32 %v1785, 1.442695
        %v1790 = vpow.pop %v1789
        %v1791 = vmul.f32 %v1786, 1.442695
        %v1792 = vpow.pop %v1791
        %v1793 = vmul.f32 %v1787, 1.442695
        %v1794 = vpow.pop %v1793
        %v1795 = vmul.f32 %v1788, 1.442695
        %v1796 = vpow.pop %v1795
        %v1797 = vadd.f32 %v1790, 1.0
        %v1798 = vadd.f32 %v1792, 1.0
        %v1799 = vadd.f32 %v1794, 1.0
        %v1800 = vadd.f32 %v1796, 1.0
        %v1801 = vrcp.pop %v1797
        %v1802 = vmul.f32 %v1797, %v1801
        %v1803 = vsub.f32 1.0, %v1802
        %v1804 = vmul.f32 %v1801, %v1803
        %v1805 = vadd.f32 %v1801, %v1804
        %vm1806 = vweird.f32 %v1797
        %vm1807 = vweird.f32 %v1801
        %vm1808 = vmor %vm1806, %vm1807
        %v1809 = vsel %vm1808, %v1801, %v1805
        %v1810 = vand.u32 2147483647, %v1797
        %vm1811 = vcmp.eq.f32.partialorder %v1810, 8.507059e+37
        %v1812 = vand.u32 %v1797, 2147483648
        %v1813 = vor.u32 1.1754944e-38, %v1812
        %v1814 = vsel %vm1811, %v1813, %v1809
        %v1815 = vmul.f32 1.0, %v1814
        %v1816 = vrcp.pop %v1798
        %v1817 = vmul.f32 %v1798, %v1816
        %v1818 = vsub.f32 1.0, %v1817
        %v1819 = vmul.f32 %v1816, %v1818
        %v1820 = vadd.f32 %v1816, %v1819
        %vm1821 = vweird.f32 %v1798
        %vm1822 = vweird.f32 %v1816
        %vm1823 = vmor %vm1821, %vm1822
        %v1824 = vsel %vm1823, %v1816, %v1820
        %v1825 = vand.u32 2147483647, %v1798
        %vm1826 = vcmp.eq.f32.partialorder %v1825, 8.507059e+37
        %v1827 = vand.u32 %v1798, 2147483648
        %v1828 = vor.u32 1.1754944e-38, %v1827
        %v1829 = vsel %vm1826, %v1828, %v1824
        %v1830 = vmul.f32 1.0, %v1829
        %v1831 = vrcp.pop %v1799
        %v1832 = vmul.f32 %v1799, %v1831
        %v1833 = vsub.f32 1.0, %v1832
        %v1834 = vmul.f32 %v1831, %v1833
        %v1835 = vadd.f32 %v1831, %v1834
        %vm1836 = vweird.f32 %v1799
        %vm1837 = vweird.f32 %v1831
        %vm1838 = vmor %vm1836, %vm1837
        %v1839 = vsel %vm1838, %v1831, %v1835
        %v1840 = vand.u32 2147483647, %v1799
        %vm1841 = vcmp.eq.f32.partialorder %v1840, 8.507059e+37
        %v1842 = vand.u32 %v1799, 2147483648
        %v1843 = vor.u32 1.1754944e-38, %v1842
        %v1844 = vsel %vm1841, %v1843, %v1839
        %v1845 = vmul.f32 1.0, %v1844
        %v1846 = vrcp.pop %v1800
        %v1847 = vmul.f32 %v1800, %v1846
        %v1848 = vsub.f32 1.0, %v1847
        %v1849 = vmul.f32 %v1846, %v1848
        %v1850 = vadd.f32 %v1846, %v1849
        %vm1851 = vweird.f32 %v1800
        %vm1852 = vweird.f32 %v1846
        %vm1853 = vmor %vm1851, %vm1852
        %v1854 = vsel %vm1853, %v1846, %v1850
        %v1855 = vand.u32 2147483647, %v1800
        %vm1856 = vcmp.eq.f32.partialorder %v1855, 8.507059e+37
        %v1857 = vand.u32 %v1800, 2147483648
        %v1858 = vor.u32 1.1754944e-38, %v1857
        %v1859 = vsel %vm1856, %v1858, %v1854
        %v1860 = vmul.f32 1.0, %v1859
        %v1861 = vtanh.pop %v1781
        %v1862 = vtanh.pop %v1782
        %v1863 = vtanh.pop %v1783
        %v1864 = vtanh.pop %v1784
        %1869 = vrot.lane.b32.xlu0 %v1861, 16
        %v1870 = vpop.permute.xlu0 %1869
        %1871 = vrot.lane.b32.xlu0 %v1862, 16
        %v1872 = vpop.permute.xlu0 %1871
        %1873 = vrot.lane.b32.xlu0 %v1863, 16
        %v1874 = vpop.permute.xlu0 %1873
        %1875 = vrot.lane.b32.xlu0 %v1864, 16
        %v1876 = vpop.permute.xlu0 %1875
        %v1881 = vmul.f32 %v1815, %v1870
        %v1882 = vmul.f32 %v1830, %v1872
        %v1883 = vmul.f32 %v1845, %v1874
        %v1884 = vmul.f32 %v1860, %v1876
        %s1885 = scalar_lea.vmem %s3, 48
        %v1886 = vld [vmem:[%s1885] sm:$0xff]
        %v1887 = vld [vmem:[%s1885 + $0x8] sm:$0xff]
        %1892 = vrot.lane.b32.xlu0 %v1881, 112
        %v1893 = vpop.permute.xlu0 %1892
        %1894 = vrot.lane.b32.xlu0 %v1882, 112
        %v1895 = vpop.permute.xlu0 %1894
        %1896 = vrot.lane.b32.xlu0 %v1883, 112
        %v1897 = vpop.permute.xlu0 %1896
        %1898 = vrot.lane.b32.xlu0 %v1884, 112
        %v1899 = vpop.permute.xlu0 %1898
        %v1900 = vsel %vm552, %v1893, 0
        %v1902 = vsel %vm552, %v1895, 0
        %v1904 = vsel %vm552, %v1897, 0
        %v1906 = vsel %vm552, %v1899, 0
        %1908 = vmatpush.msra.mxu0 0.0
        %1909 = vmatpush.msra.mxu0 0.0
        %1910 = vmatpush.msra.mxu0 0.0
        %1911 = vmatpush.msra.mxu0 0.0
        %1912 = vmatpush.msra.mxu0 0.0
        %1913 = vmatpush.msra.mxu0 0.0
        %1914 = vmatpush.msra.mxu0 0.0
        %1915 = vmatpush.msra.mxu0 0.0
        %1916 = vmatpush.msra.mxu0 0.0
        %1917 = vmatpush.msra.mxu0 0.0
        %1918 = vmatpush.msra.mxu0 0.0
        %1919 = vmatpush.msra.mxu0 0.0
        %1920 = vmatpush.msra.mxu0 0.0
        %1921 = vmatpush.msra.mxu0 0.0
        %1922 = vmatpush.msra.mxu0 %v1887
        %1923 = vmatpush.msra.mxu0 %v1886
        %1924 = vmatmul.f32.gmra.mxu0 %v1900
        %v1925 = vpop.f32.mrf.mxu0
        %v1926 = vadd.f32 0.0, %v1925
        %1927 = vmatmul.f32.gmra.mxu0 %v1902
        %v1928 = vpop.f32.mrf.mxu0
        %v1929 = vadd.f32 0.0, %v1928
        %1930 = vmatmul.f32.gmra.mxu0 %v1904
        %v1931 = vpop.f32.mrf.mxu0
        %v1932 = vadd.f32 0.0, %v1931
        %1933 = vmatmul.f32.gmra.mxu0 %v1906
        %v1934 = vpop.f32.mrf.mxu0
        %v1935 = vadd.f32 0.0, %v1934
        %1936 = vdwg.mxu0
        %v1937 = vsel %vm552, %v1926, 0.0
        %v1938 = vsel %vm552, %v1929, 0.0
        %v1939 = vadd.f32 %v1937, %v1938
        %v1940 = vrot.slane %v1939, 4
        %v1941 = vadd.f32 %v1939, %v1940
        %v1942 = vrot.slane %v1941, 2
        %v1943 = vadd.f32 %v1941, %v1942
        %v1944 = vrot.slane %v1943, 1
        %v1945 = vadd.f32 %v1943, %v1944
        %v1946 = vsel %vm552, %v1932, 0.0
        %v1947 = vsel %vm552, %v1935, 0.0
        %v1948 = vadd.f32 %v1946, %v1947
        %v1949 = vrot.slane %v1948, 4
        %v1950 = vadd.f32 %v1948, %v1949
        %v1951 = vrot.slane %v1950, 2
        %v1952 = vadd.f32 %v1950, %v1951
        %v1953 = vrot.slane %v1952, 1
        %v1954 = vadd.f32 %v1952, %v1953
        %v1955 = vmul.f32 %v1945, %v373
        %v1956 = vmul.f32 %v1954, %v373
        %v1957 = vsub.f32 %v1926, %v1955
        %v1958 = vsub.f32 %v1929, %v1955
        %v1959 = vsub.f32 %v1932, %v1956
        %v1960 = vsub.f32 %v1935, %v1956
        %v1961 = vmul.f32 %v1957, %v1957
        %v1962 = vmul.f32 %v1958, %v1958
        %v1963 = vmul.f32 %v1959, %v1959
        %v1964 = vmul.f32 %v1960, %v1960
        %v1965 = vsel %vm552, %v1961, 0.0
        %v1966 = vsel %vm552, %v1962, 0.0
        %v1967 = vadd.f32 %v1965, %v1966
        %v1968 = vrot.slane %v1967, 4
        %v1969 = vadd.f32 %v1967, %v1968
        %v1970 = vrot.slane %v1969, 2
        %v1971 = vadd.f32 %v1969, %v1970
        %v1972 = vrot.slane %v1971, 1
        %v1973 = vadd.f32 %v1971, %v1972
        %v1974 = vsel %vm552, %v1963, 0.0
        %v1975 = vsel %vm552, %v1964, 0.0
        %v1976 = vadd.f32 %v1974, %v1975
        %v1977 = vrot.slane %v1976, 4
        %v1978 = vadd.f32 %v1976, %v1977
        %v1979 = vrot.slane %v1978, 2
        %v1980 = vadd.f32 %v1978, %v1979
        %v1981 = vrot.slane %v1980, 1
        %v1982 = vadd.f32 %v1980, %v1981
        %v1983 = vmul.f32 %v1973, %v373
        %v1984 = vmul.f32 %v1982, %v373
        %v1985 = vadd.f32 %v1983, 1e-05
        %v1986 = vadd.f32 %v1984, 1e-05
        %v1987 = vrsqrt.pop %v1985
        %v1988 = vmul.f32 %v1987, %v1985
        %v1989 = vmul.f32 %v1988, %v1987
        %v1990 = vmul.f32 0.5, %v1989
        %v1991 = vsub.f32 1.5, %v1990
        %v1992 = vmul.f32 %v1987, %v1991
        %vm1993 = vweird.f32 %v1985
        %vm1994 = vweird.f32 %v1987
        %vm1995 = vmor %vm1993, %vm1994
        %v1996 = vsel %vm1995, %v1987, %v1992
        %v1997 = vrsqrt.pop %v1986
        %v1998 = vmul.f32 %v1997, %v1986
        %v1999 = vmul.f32 %v1998, %v1997
        %v2000 = vmul.f32 0.5, %v1999
        %v2001 = vsub.f32 1.5, %v2000
        %v2002 = vmul.f32 %v1997, %v2001
        %vm2003 = vweird.f32 %v1986
        %vm2004 = vweird.f32 %v1997
        %vm2005 = vmor %vm2003, %vm2004
        %v2006 = vsel %vm2005, %v1997, %v2002
        %v2007 = vmul.f32 %v1957, %v1996
        %v2008 = vmul.f32 %v1958, %v1996
        %v2009 = vmul.f32 %v1959, %v2006
        %v2010 = vmul.f32 %v1960, %v2006
        %v2011 = vadd.f32 %v1562, %v2007
        %v2012 = vadd.f32 %v1563, %v2008
        %v2013 = vadd.f32 %v1564, %v2009
        %v2014 = vadd.f32 %v1565, %v2010
        %v2015 = vld [vmem:[#allocation4] sm:$0xff]
        %v2016 = vld [vmem:[#allocation4 + $0x8] sm:$0xff]
        %v2017 = vld [vmem:[#allocation4 + $0x10] sm:$0xff]
        %v2018 = vld [vmem:[#allocation4 + $0x18] sm:$0xff]
        %2023 = vrot.lane.b32.xlu0 %v2007, 120
        %v2024 = vpop.permute.xlu0 %2023
        %2025 = vrot.lane.b32.xlu0 %v2008, 120
        %v2026 = vpop.permute.xlu0 %2025
        %2027 = vrot.lane.b32.xlu0 %v2009, 120
        %v2028 = vpop.permute.xlu0 %2027
        %2029 = vrot.lane.b32.xlu0 %v2010, 120
        %v2030 = vpop.permute.xlu0 %2029
        %v2035 = vadd.f32 %v2015, %v2024
        %v2036 = vadd.f32 %v2016, %v2026
        %v2037 = vadd.f32 %v2017, %v2028
        %v2038 = vadd.f32 %v2018, %v2030
        %2039 = vst.msk [vmem:[#allocation4] sm:$0xff] %vm224, %v2035
        %2040 = vst.msk [vmem:[#allocation4 + $0x8] sm:$0xff] %vm224, %v2036
        %2041 = vst.msk [vmem:[#allocation4 + $0x10] sm:$0xff] %vm224, %v2037
        %2042 = vst.msk [vmem:[#allocation4 + $0x18] sm:$0xff] %vm224, %v2038
        %2043 = vst.msk [vmem:[#allocation2 + $0x8] sm:$0xff] %vm224, %v2011
        %2044 = vst.msk [vmem:[#allocation2 + $0x10] sm:$0xff] %vm224, %v2012
        %2045 = vst.msk [vmem:[#allocation2 + $0x28] sm:$0xff] %vm224, %v2013
        %2046 = vst.msk [vmem:[#allocation2 + $0x30] sm:$0xff] %vm224, %v2014
        %v2047 = vld [vmem:[#allocation2 + $0x6] sm:$0xff]
        %v2048 = vld [vmem:[#allocation2 + $0xe] sm:$0xff]
        %v2049 = vld [vmem:[#allocation2 + $0x26] sm:$0xff]
        %v2050 = vld [vmem:[#allocation2 + $0x2e] sm:$0xff]
        %2051 = vst.msk [vmem:[#allocation3] sm:$0xff] %vm224, %v2047
        %2052 = vst.msk [vmem:[#allocation3 + $0x8] sm:$0xff] %vm224, %v2048
        %2053 = vst.msk [vmem:[#allocation3 + $0x10] sm:$0xff] %vm224, %v2049
        %2054 = vst.msk [vmem:[#allocation3 + $0x18] sm:$0xff] %vm224, %v2050
        %v2055 = vld [vmem:[#allocation2 + $0x8] sm:$0xff]
        %v2056 = vld [vmem:[#allocation2 + $0x10] sm:$0xff]
        %v2057 = vld [vmem:[#allocation2 + $0x28] sm:$0xff]
        %v2058 = vld [vmem:[#allocation2 + $0x30] sm:$0xff]
        %2063 = vrot.lane.b32.xlu0 %v2055, 8
        %v2064 = vpop.permute.xlu0 %2063
        %2065 = vrot.lane.b32.xlu0 %v2056, 8
        %v2066 = vpop.permute.xlu0 %2065
        %2067 = vrot.lane.b32.xlu0 %v2057, 8
        %v2068 = vpop.permute.xlu0 %2067
        %2069 = vrot.lane.b32.xlu0 %v2058, 8
        %v2070 = vpop.permute.xlu0 %2069
        %2075 = vst.msk [vmem:[#allocation3] sm:$0xff] %vm269, %v2064
        %2076 = vst.msk [vmem:[#allocation3 + $0x8] sm:$0xff] %vm269, %v2066
        %2077 = vst.msk [vmem:[#allocation3 + $0x10] sm:$0xff] %vm269, %v2068
        %2078 = vst.msk [vmem:[#allocation3 + $0x18] sm:$0xff] %vm269, %v2070
        %v2079 = vld [vmem:[#allocation2 + $0xa] sm:$0xff]
        %v2080 = vld [vmem:[#allocation2 + $0x12] sm:$0xff]
        %v2081 = vld [vmem:[#allocation2 + $0x2a] sm:$0xff]
        %v2082 = vld [vmem:[#allocation2 + $0x32] sm:$0xff]
        %2087 = vrot.lane.b32.xlu0 %v2079, 16
        %v2088 = vpop.permute.xlu0 %2087
        %2089 = vrot.lane.b32.xlu0 %v2080, 16
        %v2090 = vpop.permute.xlu0 %2089
        %2091 = vrot.lane.b32.xlu0 %v2081, 16
        %v2092 = vpop.permute.xlu0 %2091
        %2093 = vrot.lane.b32.xlu0 %v2082, 16
        %v2094 = vpop.permute.xlu0 %2093
        %2099 = vst.msk [vmem:[#allocation3] sm:$0xff] %vm294, %v2088
        %2100 = vst.msk [vmem:[#allocation3 + $0x8] sm:$0xff] %vm294, %v2090
        %2101 = vst.msk [vmem:[#allocation3 + $0x10] sm:$0xff] %vm294, %v2092
        %2102 = vst.msk [vmem:[#allocation3 + $0x18] sm:$0xff] %vm294, %v2094
        %v2103 = vld [vmem:[#allocation3] sm:$0xff]
        %v2104 = vld [vmem:[#allocation3 + $0x8] sm:$0xff]
        %v2105 = vld [vmem:[#allocation3 + $0x10] sm:$0xff]
        %v2106 = vld [vmem:[#allocation3 + $0x18] sm:$0xff]
        %s2107 = scalar_lea.vmem %s2, 96
        %v2108 = vld [vmem:[%s2107] sm:$0xff]
        %v2109 = vld [vmem:[%s2107 + $0x8] sm:$0xff]
        %v2110 = vld [vmem:[%s2107 + $0x10] sm:$0xff]
        %v2112 = vsel %vm306, %v2103, 0
        %v2115 = vsel %vm306, %v2104, 0
        %v2118 = vsel %vm306, %v2105, 0
        %v2121 = vsel %vm306, %v2106, 0
        %2123 = vmatpush.msra.mxu0 0.0
        %2124 = vmatpush.msra.mxu0 0.0
        %2125 = vmatpush.msra.mxu0 0.0
        %2126 = vmatpush.msra.mxu0 0.0
        %2127 = vmatpush.msra.mxu0 0.0
        %2128 = vmatpush.msra.mxu0 0.0
        %2129 = vmatpush.msra.mxu0 0.0
        %2130 = vmatpush.msra.mxu0 0.0
        %2131 = vmatpush.msra.mxu0 0.0
        %2132 = vmatpush.msra.mxu0 0.0
        %2133 = vmatpush.msra.mxu0 0.0
        %2134 = vmatpush.msra.mxu0 0.0
        %2135 = vmatpush.msra.mxu0 0.0
        %2136 = vmatpush.msra.mxu0 %v2110
        %2137 = vmatpush.msra.mxu0 %v2109
        %2138 = vmatpush.msra.mxu0 %v2108
        %2139 = vmatmul.f32.gmra.mxu0 %v2112
        %v2140 = vpop.f32.mrf.mxu0
        %v2141 = vadd.f32 0.0, %v2140
        %2142 = vmatmul.f32.gmra.mxu0 %v2115
        %v2143 = vpop.f32.mrf.mxu0
        %v2144 = vadd.f32 0.0, %v2143
        %2145 = vmatmul.f32.gmra.mxu0 %v2118
        %v2146 = vpop.f32.mrf.mxu0
        %v2147 = vadd.f32 0.0, %v2146
        %2148 = vmatmul.f32.gmra.mxu0 %v2121
        %v2149 = vpop.f32.mrf.mxu0
        %v2150 = vadd.f32 0.0, %v2149
        %2151 = vdwg.mxu0
        %v2152 = vsel %vm348, %v2141, 0.0
        %v2153 = vsel %vm348, %v2144, 0.0
        %v2154 = vadd.f32 %v2152, %v2153
        %v2155 = vrot.slane %v2154, 4
        %v2156 = vadd.f32 %v2154, %v2155
        %v2157 = vrot.slane %v2156, 2
        %v2158 = vadd.f32 %v2156, %v2157
        %v2159 = vrot.slane %v2158, 1
        %v2160 = vadd.f32 %v2158, %v2159
        %v2161 = vsel %vm348, %v2147, 0.0
        %v2162 = vsel %vm348, %v2150, 0.0
        %v2163 = vadd.f32 %v2161, %v2162
        %v2164 = vrot.slane %v2163, 4
        %v2165 = vadd.f32 %v2163, %v2164
        %v2166 = vrot.slane %v2165, 2
        %v2167 = vadd.f32 %v2165, %v2166
        %v2168 = vrot.slane %v2167, 1
        %v2169 = vadd.f32 %v2167, %v2168
        %v2170 = vmul.f32 %v2160, %v373
        %v2171 = vmul.f32 %v2169, %v373
        %v2172 = vsub.f32 %v2141, %v2170
        %v2173 = vsub.f32 %v2144, %v2170
        %v2174 = vsub.f32 %v2147, %v2171
        %v2175 = vsub.f32 %v2150, %v2171
        %v2176 = vmul.f32 %v2172, %v2172
        %v2177 = vmul.f32 %v2173, %v2173
        %v2178 = vmul.f32 %v2174, %v2174
        %v2179 = vmul.f32 %v2175, %v2175
        %v2180 = vsel %vm348, %v2176, 0.0
        %v2181 = vsel %vm348, %v2177, 0.0
        %v2182 = vadd.f32 %v2180, %v2181
        %v2183 = vrot.slane %v2182, 4
        %v2184 = vadd.f32 %v2182, %v2183
        %v2185 = vrot.slane %v2184, 2
        %v2186 = vadd.f32 %v2184, %v2185
        %v2187 = vrot.slane %v2186, 1
        %v2188 = vadd.f32 %v2186, %v2187
        %v2189 = vsel %vm348, %v2178, 0.0
        %v2190 = vsel %vm348, %v2179, 0.0
        %v2191 = vadd.f32 %v2189, %v2190
        %v2192 = vrot.slane %v2191, 4
        %v2193 = vadd.f32 %v2191, %v2192
        %v2194 = vrot.slane %v2193, 2
        %v2195 = vadd.f32 %v2193, %v2194
        %v2196 = vrot.slane %v2195, 1
        %v2197 = vadd.f32 %v2195, %v2196
        %v2198 = vmul.f32 %v2188, %v373
        %v2199 = vmul.f32 %v2197, %v373
        %v2200 = vadd.f32 %v2198, 1e-05
        %v2201 = vadd.f32 %v2199, 1e-05
        %v2202 = vrsqrt.pop %v2200
        %v2203 = vmul.f32 %v2202, %v2200
        %v2204 = vmul.f32 %v2203, %v2202
        %v2205 = vmul.f32 0.5, %v2204
        %v2206 = vsub.f32 1.5, %v2205
        %v2207 = vmul.f32 %v2202, %v2206
        %vm2208 = vweird.f32 %v2200
        %vm2209 = vweird.f32 %v2202
        %vm2210 = vmor %vm2208, %vm2209
        %v2211 = vsel %vm2210, %v2202, %v2207
        %v2212 = vrsqrt.pop %v2201
        %v2213 = vmul.f32 %v2212, %v2201
        %v2214 = vmul.f32 %v2213, %v2212
        %v2215 = vmul.f32 0.5, %v2214
        %v2216 = vsub.f32 1.5, %v2215
        %v2217 = vmul.f32 %v2212, %v2216
        %vm2218 = vweird.f32 %v2201
        %vm2219 = vweird.f32 %v2212
        %vm2220 = vmor %vm2218, %vm2219
        %v2221 = vsel %vm2220, %v2212, %v2217
        %v2222 = vmul.f32 %v2172, %v2211
        %v2223 = vmul.f32 %v2173, %v2211
        %v2224 = vmul.f32 %v2174, %v2221
        %v2225 = vmul.f32 %v2175, %v2221
        %v2226 = vld [vmem:[%s214 + $0x4] sm:$0x1]
        %v2227 = vld [vmem:[%s214 + $0xc] sm:$0x1]
        %v2228 = vperm.slane %v2226, 0
        %v2229 = vperm.slane %v2227, 0
        %v2230 = vadd.f32 %v2222, %v2228
        %v2231 = vadd.f32 %v2223, %v2228
        %v2232 = vadd.f32 %v2224, %v2229
        %v2233 = vadd.f32 %v2225, %v2229
        %v2234 = vxor.u32 %v2230, 2147483648
        %v2235 = vxor.u32 %v2231, 2147483648
        %v2236 = vxor.u32 %v2232, 2147483648
        %v2237 = vxor.u32 %v2233, 2147483648
        %v2238 = vmul.f32 %v2234, 1.442695
        %v2239 = vpow.pop %v2238
        %v2240 = vmul.f32 %v2235, 1.442695
        %v2241 = vpow.pop %v2240
        %v2242 = vmul.f32 %v2236, 1.442695
        %v2243 = vpow.pop %v2242
        %v2244 = vmul.f32 %v2237, 1.442695
        %v2245 = vpow.pop %v2244
        %v2246 = vadd.f32 %v2239, 1.0
        %v2247 = vadd.f32 %v2241, 1.0
        %v2248 = vadd.f32 %v2243, 1.0
        %v2249 = vadd.f32 %v2245, 1.0
        %v2250 = vrcp.pop %v2246
        %v2251 = vmul.f32 %v2246, %v2250
        %v2252 = vsub.f32 1.0, %v2251
        %v2253 = vmul.f32 %v2250, %v2252
        %v2254 = vadd.f32 %v2250, %v2253
        %vm2255 = vweird.f32 %v2246
        %vm2256 = vweird.f32 %v2250
        %vm2257 = vmor %vm2255, %vm2256
        %v2258 = vsel %vm2257, %v2250, %v2254
        %v2259 = vand.u32 2147483647, %v2246
        %vm2260 = vcmp.eq.f32.partialorder %v2259, 8.507059e+37
        %v2261 = vand.u32 %v2246, 2147483648
        %v2262 = vor.u32 1.1754944e-38, %v2261
        %v2263 = vsel %vm2260, %v2262, %v2258
        %v2264 = vmul.f32 1.0, %v2263
        %v2265 = vrcp.pop %v2247
        %v2266 = vmul.f32 %v2247, %v2265
        %v2267 = vsub.f32 1.0, %v2266
        %v2268 = vmul.f32 %v2265, %v2267
        %v2269 = vadd.f32 %v2265, %v2268
        %vm2270 = vweird.f32 %v2247
        %vm2271 = vweird.f32 %v2265
        %vm2272 = vmor %vm2270, %vm2271
        %v2273 = vsel %vm2272, %v2265, %v2269
        %v2274 = vand.u32 2147483647, %v2247
        %vm2275 = vcmp.eq.f32.partialorder %v2274, 8.507059e+37
        %v2276 = vand.u32 %v2247, 2147483648
        %v2277 = vor.u32 1.1754944e-38, %v2276
        %v2278 = vsel %vm2275, %v2277, %v2273
        %v2279 = vmul.f32 1.0, %v2278
        %v2280 = vrcp.pop %v2248
        %v2281 = vmul.f32 %v2248, %v2280
        %v2282 = vsub.f32 1.0, %v2281
        %v2283 = vmul.f32 %v2280, %v2282
        %v2284 = vadd.f32 %v2280, %v2283
        %vm2285 = vweird.f32 %v2248
        %vm2286 = vweird.f32 %v2280
        %vm2287 = vmor %vm2285, %vm2286
        %v2288 = vsel %vm2287, %v2280, %v2284
        %v2289 = vand.u32 2147483647, %v2248
        %vm2290 = vcmp.eq.f32.partialorder %v2289, 8.507059e+37
        %v2291 = vand.u32 %v2248, 2147483648
        %v2292 = vor.u32 1.1754944e-38, %v2291
        %v2293 = vsel %vm2290, %v2292, %v2288
        %v2294 = vmul.f32 1.0, %v2293
        %v2295 = vrcp.pop %v2249
        %v2296 = vmul.f32 %v2249, %v2295
        %v2297 = vsub.f32 1.0, %v2296
        %v2298 = vmul.f32 %v2295, %v2297
        %v2299 = vadd.f32 %v2295, %v2298
        %vm2300 = vweird.f32 %v2249
        %vm2301 = vweird.f32 %v2295
        %vm2302 = vmor %vm2300, %vm2301
        %v2303 = vsel %vm2302, %v2295, %v2299
        %v2304 = vand.u32 2147483647, %v2249
        %vm2305 = vcmp.eq.f32.partialorder %v2304, 8.507059e+37
        %v2306 = vand.u32 %v2249, 2147483648
        %v2307 = vor.u32 1.1754944e-38, %v2306
        %v2308 = vsel %vm2305, %v2307, %v2303
        %v2309 = vmul.f32 1.0, %v2308
        %v2310 = vtanh.pop %v2230
        %v2311 = vtanh.pop %v2231
        %v2312 = vtanh.pop %v2232
        %v2313 = vtanh.pop %v2233
        %2318 = vrot.lane.b32.xlu0 %v2310, 16
        %v2319 = vpop.permute.xlu0 %2318
        %2320 = vrot.lane.b32.xlu0 %v2311, 16
        %v2321 = vpop.permute.xlu0 %2320
        %2322 = vrot.lane.b32.xlu0 %v2312, 16
        %v2323 = vpop.permute.xlu0 %2322
        %2324 = vrot.lane.b32.xlu0 %v2313, 16
        %v2325 = vpop.permute.xlu0 %2324
        %v2330 = vmul.f32 %v2264, %v2319
        %v2331 = vmul.f32 %v2279, %v2321
        %v2332 = vmul.f32 %v2294, %v2323
        %v2333 = vmul.f32 %v2309, %v2325
        %s2334 = scalar_lea.vmem %s3, 64
        %v2335 = vld [vmem:[%s2334] sm:$0xff]
        %v2336 = vld [vmem:[%s2334 + $0x8] sm:$0xff]
        %2341 = vrot.lane.b32.xlu0 %v2330, 112
        %v2342 = vpop.permute.xlu0 %2341
        %2343 = vrot.lane.b32.xlu0 %v2331, 112
        %v2344 = vpop.permute.xlu0 %2343
        %2345 = vrot.lane.b32.xlu0 %v2332, 112
        %v2346 = vpop.permute.xlu0 %2345
        %2347 = vrot.lane.b32.xlu0 %v2333, 112
        %v2348 = vpop.permute.xlu0 %2347
        %v2349 = vsel %vm552, %v2342, 0
        %v2351 = vsel %vm552, %v2344, 0
        %v2353 = vsel %vm552, %v2346, 0
        %v2355 = vsel %vm552, %v2348, 0
        %2357 = vmatpush.msra.mxu0 0.0
        %2358 = vmatpush.msra.mxu0 0.0
        %2359 = vmatpush.msra.mxu0 0.0
        %2360 = vmatpush.msra.mxu0 0.0
        %2361 = vmatpush.msra.mxu0 0.0
        %2362 = vmatpush.msra.mxu0 0.0
        %2363 = vmatpush.msra.mxu0 0.0
        %2364 = vmatpush.msra.mxu0 0.0
        %2365 = vmatpush.msra.mxu0 0.0
        %2366 = vmatpush.msra.mxu0 0.0
        %2367 = vmatpush.msra.mxu0 0.0
        %2368 = vmatpush.msra.mxu0 0.0
        %2369 = vmatpush.msra.mxu0 0.0
        %2370 = vmatpush.msra.mxu0 0.0
        %2371 = vmatpush.msra.mxu0 %v2336
        %2372 = vmatpush.msra.mxu0 %v2335
        %2373 = vmatmul.f32.gmra.mxu0 %v2349
        %v2374 = vpop.f32.mrf.mxu0
        %v2375 = vadd.f32 0.0, %v2374
        %2376 = vmatmul.f32.gmra.mxu0 %v2351
        %v2377 = vpop.f32.mrf.mxu0
        %v2378 = vadd.f32 0.0, %v2377
        %2379 = vmatmul.f32.gmra.mxu0 %v2353
        %v2380 = vpop.f32.mrf.mxu0
        %v2381 = vadd.f32 0.0, %v2380
        %2382 = vmatmul.f32.gmra.mxu0 %v2355
        %v2383 = vpop.f32.mrf.mxu0
        %v2384 = vadd.f32 0.0, %v2383
        %2385 = vdwg.mxu0
        %v2386 = vsel %vm552, %v2375, 0.0
        %v2387 = vsel %vm552, %v2378, 0.0
        %v2388 = vadd.f32 %v2386, %v2387
        %v2389 = vrot.slane %v2388, 4
        %v2390 = vadd.f32 %v2388, %v2389
        %v2391 = vrot.slane %v2390, 2
        %v2392 = vadd.f32 %v2390, %v2391
        %v2393 = vrot.slane %v2392, 1
        %v2394 = vadd.f32 %v2392, %v2393
        %v2395 = vsel %vm552, %v2381, 0.0
        %v2396 = vsel %vm552, %v2384, 0.0
        %v2397 = vadd.f32 %v2395, %v2396
        %v2398 = vrot.slane %v2397, 4
        %v2399 = vadd.f32 %v2397, %v2398
        %v2400 = vrot.slane %v2399, 2
        %v2401 = vadd.f32 %v2399, %v2400
        %v2402 = vrot.slane %v2401, 1
        %v2403 = vadd.f32 %v2401, %v2402
        %v2404 = vmul.f32 %v2394, %v373
        %v2405 = vmul.f32 %v2403, %v373
        %v2406 = vsub.f32 %v2375, %v2404
        %v2407 = vsub.f32 %v2378, %v2404
        %v2408 = vsub.f32 %v2381, %v2405
        %v2409 = vsub.f32 %v2384, %v2405
        %v2410 = vmul.f32 %v2406, %v2406
        %v2411 = vmul.f32 %v2407, %v2407
        %v2412 = vmul.f32 %v2408, %v2408
        %v2413 = vmul.f32 %v2409, %v2409
        %v2414 = vsel %vm552, %v2410, 0.0
        %v2415 = vsel %vm552, %v2411, 0.0
        %v2416 = vadd.f32 %v2414, %v2415
        %v2417 = vrot.slane %v2416, 4
        %v2418 = vadd.f32 %v2416, %v2417
        %v2419 = vrot.slane %v2418, 2
        %v2420 = vadd.f32 %v2418, %v2419
        %v2421 = vrot.slane %v2420, 1
        %v2422 = vadd.f32 %v2420, %v2421
        %v2423 = vsel %vm552, %v2412, 0.0
        %v2424 = vsel %vm552, %v2413, 0.0
        %v2425 = vadd.f32 %v2423, %v2424
        %v2426 = vrot.slane %v2425, 4
        %v2427 = vadd.f32 %v2425, %v2426
        %v2428 = vrot.slane %v2427, 2
        %v2429 = vadd.f32 %v2427, %v2428
        %v2430 = vrot.slane %v2429, 1
        %v2431 = vadd.f32 %v2429, %v2430
        %v2432 = vmul.f32 %v2422, %v373
        %v2433 = vmul.f32 %v2431, %v373
        %v2434 = vadd.f32 %v2432, 1e-05
        %v2435 = vadd.f32 %v2433, 1e-05
        %v2436 = vrsqrt.pop %v2434
        %v2437 = vmul.f32 %v2436, %v2434
        %v2438 = vmul.f32 %v2437, %v2436
        %v2439 = vmul.f32 0.5, %v2438
        %v2440 = vsub.f32 1.5, %v2439
        %v2441 = vmul.f32 %v2436, %v2440
        %vm2442 = vweird.f32 %v2434
        %vm2443 = vweird.f32 %v2436
        %vm2444 = vmor %vm2442, %vm2443
        %v2445 = vsel %vm2444, %v2436, %v2441
        %v2446 = vrsqrt.pop %v2435
        %v2447 = vmul.f32 %v2446, %v2435
        %v2448 = vmul.f32 %v2447, %v2446
        %v2449 = vmul.f32 0.5, %v2448
        %v2450 = vsub.f32 1.5, %v2449
        %v2451 = vmul.f32 %v2446, %v2450
        %vm2452 = vweird.f32 %v2435
        %vm2453 = vweird.f32 %v2446
        %vm2454 = vmor %vm2452, %vm2453
        %v2455 = vsel %vm2454, %v2446, %v2451
        %v2456 = vmul.f32 %v2406, %v2445
        %v2457 = vmul.f32 %v2407, %v2445
        %v2458 = vmul.f32 %v2408, %v2455
        %v2459 = vmul.f32 %v2409, %v2455
        %v2460 = vadd.f32 %v2011, %v2456
        %v2461 = vadd.f32 %v2012, %v2457
        %v2462 = vadd.f32 %v2013, %v2458
        %v2463 = vadd.f32 %v2014, %v2459
        %v2464 = vld [vmem:[#allocation4] sm:$0xff]
        %v2465 = vld [vmem:[#allocation4 + $0x8] sm:$0xff]
        %v2466 = vld [vmem:[#allocation4 + $0x10] sm:$0xff]
        %v2467 = vld [vmem:[#allocation4 + $0x18] sm:$0xff]
        %2472 = vrot.lane.b32.xlu0 %v2456, 120
        %v2473 = vpop.permute.xlu0 %2472
        %2474 = vrot.lane.b32.xlu0 %v2457, 120
        %v2475 = vpop.permute.xlu0 %2474
        %2476 = vrot.lane.b32.xlu0 %v2458, 120
        %v2477 = vpop.permute.xlu0 %2476
        %2478 = vrot.lane.b32.xlu0 %v2459, 120
        %v2479 = vpop.permute.xlu0 %2478
        %v2484 = vadd.f32 %v2464, %v2473
        %v2485 = vadd.f32 %v2465, %v2475
        %v2486 = vadd.f32 %v2466, %v2477
        %v2487 = vadd.f32 %v2467, %v2479
        %2488 = vst.msk [vmem:[#allocation4] sm:$0xff] %vm224, %v2484
        %2489 = vst.msk [vmem:[#allocation4 + $0x8] sm:$0xff] %vm224, %v2485
        %2490 = vst.msk [vmem:[#allocation4 + $0x10] sm:$0xff] %vm224, %v2486
        %2491 = vst.msk [vmem:[#allocation4 + $0x18] sm:$0xff] %vm224, %v2487
        %2492 = vst.msk [vmem:[#allocation2 + $0x8] sm:$0xff] %vm224, %v2460
        %2493 = vst.msk [vmem:[#allocation2 + $0x10] sm:$0xff] %vm224, %v2461
        %2494 = vst.msk [vmem:[#allocation2 + $0x28] sm:$0xff] %vm224, %v2462
        %2495 = vst.msk [vmem:[#allocation2 + $0x30] sm:$0xff] %vm224, %v2463
        %v2496 = vld [vmem:[#allocation2 + $0x4] sm:$0xff]
        %v2497 = vld [vmem:[#allocation2 + $0xc] sm:$0xff]
        %v2498 = vld [vmem:[#allocation2 + $0x24] sm:$0xff]
        %v2499 = vld [vmem:[#allocation2 + $0x2c] sm:$0xff]
        %2500 = vst.msk [vmem:[#allocation3] sm:$0xff] %vm224, %v2496
        %2501 = vst.msk [vmem:[#allocation3 + $0x8] sm:$0xff] %vm224, %v2497
        %2502 = vst.msk [vmem:[#allocation3 + $0x10] sm:$0xff] %vm224, %v2498
        %2503 = vst.msk [vmem:[#allocation3 + $0x18] sm:$0xff] %vm224, %v2499
        %v2504 = vld [vmem:[#allocation2 + $0x8] sm:$0xff]
        %v2505 = vld [vmem:[#allocation2 + $0x10] sm:$0xff]
        %v2506 = vld [vmem:[#allocation2 + $0x28] sm:$0xff]
        %v2507 = vld [vmem:[#allocation2 + $0x30] sm:$0xff]
        %2512 = vrot.lane.b32.xlu0 %v2504, 8
        %v2513 = vpop.permute.xlu0 %2512
        %2514 = vrot.lane.b32.xlu0 %v2505, 8
        %v2515 = vpop.permute.xlu0 %2514
        %2516 = vrot.lane.b32.xlu0 %v2506, 8
        %v2517 = vpop.permute.xlu0 %2516
        %2518 = vrot.lane.b32.xlu0 %v2507, 8
        %v2519 = vpop.permute.xlu0 %2518
        %2524 = vst.msk [vmem:[#allocation3] sm:$0xff] %vm269, %v2513
        %2525 = vst.msk [vmem:[#allocation3 + $0x8] sm:$0xff] %vm269, %v2515
        %2526 = vst.msk [vmem:[#allocation3 + $0x10] sm:$0xff] %vm269, %v2517
        %2527 = vst.msk [vmem:[#allocation3 + $0x18] sm:$0xff] %vm269, %v2519
        %v2528 = vld [vmem:[#allocation2 + $0xc] sm:$0xff]
        %v2529 = vld [vmem:[#allocation2 + $0x14] sm:$0xff]
        %v2530 = vld [vmem:[#allocation2 + $0x2c] sm:$0xff]
        %v2531 = vld [vmem:[#allocation2 + $0x34] sm:$0xff]
        %2536 = vrot.lane.b32.xlu0 %v2528, 16
        %v2537 = vpop.permute.xlu0 %2536
        %2538 = vrot.lane.b32.xlu0 %v2529, 16
        %v2539 = vpop.permute.xlu0 %2538
        %2540 = vrot.lane.b32.xlu0 %v2530, 16
        %v2541 = vpop.permute.xlu0 %2540
        %2542 = vrot.lane.b32.xlu0 %v2531, 16
        %v2543 = vpop.permute.xlu0 %2542
        %2548 = vst.msk [vmem:[#allocation3] sm:$0xff] %vm294, %v2537
        %2549 = vst.msk [vmem:[#allocation3 + $0x8] sm:$0xff] %vm294, %v2539
        %2550 = vst.msk [vmem:[#allocation3 + $0x10] sm:$0xff] %vm294, %v2541
        %2551 = vst.msk [vmem:[#allocation3 + $0x18] sm:$0xff] %vm294, %v2543
        %v2552 = vld [vmem:[#allocation3] sm:$0xff]
        %v2553 = vld [vmem:[#allocation3 + $0x8] sm:$0xff]
        %v2554 = vld [vmem:[#allocation3 + $0x10] sm:$0xff]
        %v2555 = vld [vmem:[#allocation3 + $0x18] sm:$0xff]
        %s2556 = scalar_lea.vmem %s2, 120
        %v2557 = vld [vmem:[%s2556] sm:$0xff]
        %v2558 = vld [vmem:[%s2556 + $0x8] sm:$0xff]
        %v2559 = vld [vmem:[%s2556 + $0x10] sm:$0xff]
        %v2561 = vsel %vm306, %v2552, 0
        %v2564 = vsel %vm306, %v2553, 0
        %v2567 = vsel %vm306, %v2554, 0
        %v2570 = vsel %vm306, %v2555, 0
        %2572 = vmatpush.msra.mxu0 0.0
        %2573 = vmatpush.msra.mxu0 0.0
        %2574 = vmatpush.msra.mxu0 0.0
        %2575 = vmatpush.msra.mxu0 0.0
        %2576 = vmatpush.msra.mxu0 0.0
        %2577 = vmatpush.msra.mxu0 0.0
        %2578 = vmatpush.msra.mxu0 0.0
        %2579 = vmatpush.msra.mxu0 0.0
        %2580 = vmatpush.msra.mxu0 0.0
        %2581 = vmatpush.msra.mxu0 0.0
        %2582 = vmatpush.msra.mxu0 0.0
        %2583 = vmatpush.msra.mxu0 0.0
        %2584 = vmatpush.msra.mxu0 0.0
        %2585 = vmatpush.msra.mxu0 %v2559
        %2586 = vmatpush.msra.mxu0 %v2558
        %2587 = vmatpush.msra.mxu0 %v2557
        %2588 = vmatmul.f32.gmra.mxu0 %v2561
        %v2589 = vpop.f32.mrf.mxu0
        %v2590 = vadd.f32 0.0, %v2589
        %2591 = vmatmul.f32.gmra.mxu0 %v2564
        %v2592 = vpop.f32.mrf.mxu0
        %v2593 = vadd.f32 0.0, %v2592
        %2594 = vmatmul.f32.gmra.mxu0 %v2567
        %v2595 = vpop.f32.mrf.mxu0
        %v2596 = vadd.f32 0.0, %v2595
        %2597 = vmatmul.f32.gmra.mxu0 %v2570
        %v2598 = vpop.f32.mrf.mxu0
        %v2599 = vadd.f32 0.0, %v2598
        %2600 = vdwg.mxu0
        %v2601 = vsel %vm348, %v2590, 0.0
        %v2602 = vsel %vm348, %v2593, 0.0
        %v2603 = vadd.f32 %v2601, %v2602
        %v2604 = vrot.slane %v2603, 4
        %v2605 = vadd.f32 %v2603, %v2604
        %v2606 = vrot.slane %v2605, 2
        %v2607 = vadd.f32 %v2605, %v2606
        %v2608 = vrot.slane %v2607, 1
        %v2609 = vadd.f32 %v2607, %v2608
        %v2610 = vsel %vm348, %v2596, 0.0
        %v2611 = vsel %vm348, %v2599, 0.0
        %v2612 = vadd.f32 %v2610, %v2611
        %v2613 = vrot.slane %v2612, 4
        %v2614 = vadd.f32 %v2612, %v2613
        %v2615 = vrot.slane %v2614, 2
        %v2616 = vadd.f32 %v2614, %v2615
        %v2617 = vrot.slane %v2616, 1
        %v2618 = vadd.f32 %v2616, %v2617
        %v2619 = vmul.f32 %v2609, %v373
        %v2620 = vmul.f32 %v2618, %v373
        %v2621 = vsub.f32 %v2590, %v2619
        %v2622 = vsub.f32 %v2593, %v2619
        %v2623 = vsub.f32 %v2596, %v2620
        %v2624 = vsub.f32 %v2599, %v2620
        %v2625 = vmul.f32 %v2621, %v2621
        %v2626 = vmul.f32 %v2622, %v2622
        %v2627 = vmul.f32 %v2623, %v2623
        %v2628 = vmul.f32 %v2624, %v2624
        %v2629 = vsel %vm348, %v2625, 0.0
        %v2630 = vsel %vm348, %v2626, 0.0
        %v2631 = vadd.f32 %v2629, %v2630
        %v2632 = vrot.slane %v2631, 4
        %v2633 = vadd.f32 %v2631, %v2632
        %v2634 = vrot.slane %v2633, 2
        %v2635 = vadd.f32 %v2633, %v2634
        %v2636 = vrot.slane %v2635, 1
        %v2637 = vadd.f32 %v2635, %v2636
        %v2638 = vsel %vm348, %v2627, 0.0
        %v2639 = vsel %vm348, %v2628, 0.0
        %v2640 = vadd.f32 %v2638, %v2639
        %v2641 = vrot.slane %v2640, 4
        %v2642 = vadd.f32 %v2640, %v2641
        %v2643 = vrot.slane %v2642, 2
        %v2644 = vadd.f32 %v2642, %v2643
        %v2645 = vrot.slane %v2644, 1
        %v2646 = vadd.f32 %v2644, %v2645
        %v2647 = vmul.f32 %v2637, %v373
        %v2648 = vmul.f32 %v2646, %v373
        %v2649 = vadd.f32 %v2647, 1e-05
        %v2650 = vadd.f32 %v2648, 1e-05
        %v2651 = vrsqrt.pop %v2649
        %v2652 = vmul.f32 %v2651, %v2649
        %v2653 = vmul.f32 %v2652, %v2651
        %v2654 = vmul.f32 0.5, %v2653
        %v2655 = vsub.f32 1.5, %v2654
        %v2656 = vmul.f32 %v2651, %v2655
        %vm2657 = vweird.f32 %v2649
        %vm2658 = vweird.f32 %v2651
        %vm2659 = vmor %vm2657, %vm2658
        %v2660 = vsel %vm2659, %v2651, %v2656
        %v2661 = vrsqrt.pop %v2650
        %v2662 = vmul.f32 %v2661, %v2650
        %v2663 = vmul.f32 %v2662, %v2661
        %v2664 = vmul.f32 0.5, %v2663
        %v2665 = vsub.f32 1.5, %v2664
        %v2666 = vmul.f32 %v2661, %v2665
        %vm2667 = vweird.f32 %v2650
        %vm2668 = vweird.f32 %v2661
        %vm2669 = vmor %vm2667, %vm2668
        %v2670 = vsel %vm2669, %v2661, %v2666
        %v2671 = vmul.f32 %v2621, %v2660
        %v2672 = vmul.f32 %v2622, %v2660
        %v2673 = vmul.f32 %v2623, %v2670
        %v2674 = vmul.f32 %v2624, %v2670
        %v2675 = vld [vmem:[%s214 + $0x5] sm:$0x1]
        %v2676 = vld [vmem:[%s214 + $0xd] sm:$0x1]
        %v2677 = vperm.slane %v2675, 0
        %v2678 = vperm.slane %v2676, 0
        %v2679 = vadd.f32 %v2671, %v2677
        %v2680 = vadd.f32 %v2672, %v2677
        %v2681 = vadd.f32 %v2673, %v2678
        %v2682 = vadd.f32 %v2674, %v2678
        %v2683 = vxor.u32 %v2679, 2147483648
        %v2684 = vxor.u32 %v2680, 2147483648
        %v2685 = vxor.u32 %v2681, 2147483648
        %v2686 = vxor.u32 %v2682, 2147483648
        %v2687 = vmul.f32 %v2683, 1.442695
        %v2688 = vpow.pop %v2687
        %v2689 = vmul.f32 %v2684, 1.442695
        %v2690 = vpow.pop %v2689
        %v2691 = vmul.f32 %v2685, 1.442695
        %v2692 = vpow.pop %v2691
        %v2693 = vmul.f32 %v2686, 1.442695
        %v2694 = vpow.pop %v2693
        %v2695 = vadd.f32 %v2688, 1.0
        %v2696 = vadd.f32 %v2690, 1.0
        %v2697 = vadd.f32 %v2692, 1.0
        %v2698 = vadd.f32 %v2694, 1.0
        %v2699 = vrcp.pop %v2695
        %v2700 = vmul.f32 %v2695, %v2699
        %v2701 = vsub.f32 1.0, %v2700
        %v2702 = vmul.f32 %v2699, %v2701
        %v2703 = vadd.f32 %v2699, %v2702
        %vm2704 = vweird.f32 %v2695
        %vm2705 = vweird.f32 %v2699
        %vm2706 = vmor %vm2704, %vm2705
        %v2707 = vsel %vm2706, %v2699, %v2703
        %v2708 = vand.u32 2147483647, %v2695
        %vm2709 = vcmp.eq.f32.partialorder %v2708, 8.507059e+37
        %v2710 = vand.u32 %v2695, 2147483648
        %v2711 = vor.u32 1.1754944e-38, %v2710
        %v2712 = vsel %vm2709, %v2711, %v2707
        %v2713 = vmul.f32 1.0, %v2712
        %v2714 = vrcp.pop %v2696
        %v2715 = vmul.f32 %v2696, %v2714
        %v2716 = vsub.f32 1.0, %v2715
        %v2717 = vmul.f32 %v2714, %v2716
        %v2718 = vadd.f32 %v2714, %v2717
        %vm2719 = vweird.f32 %v2696
        %vm2720 = vweird.f32 %v2714
        %vm2721 = vmor %vm2719, %vm2720
        %v2722 = vsel %vm2721, %v2714, %v2718
        %v2723 = vand.u32 2147483647, %v2696
        %vm2724 = vcmp.eq.f32.partialorder %v2723, 8.507059e+37
        %v2725 = vand.u32 %v2696, 2147483648
        %v2726 = vor.u32 1.1754944e-38, %v2725
        %v2727 = vsel %vm2724, %v2726, %v2722
        %v2728 = vmul.f32 1.0, %v2727
        %v2729 = vrcp.pop %v2697
        %v2730 = vmul.f32 %v2697, %v2729
        %v2731 = vsub.f32 1.0, %v2730
        %v2732 = vmul.f32 %v2729, %v2731
        %v2733 = vadd.f32 %v2729, %v2732
        %vm2734 = vweird.f32 %v2697
        %vm2735 = vweird.f32 %v2729
        %vm2736 = vmor %vm2734, %vm2735
        %v2737 = vsel %vm2736, %v2729, %v2733
        %v2738 = vand.u32 2147483647, %v2697
        %vm2739 = vcmp.eq.f32.partialorder %v2738, 8.507059e+37
        %v2740 = vand.u32 %v2697, 2147483648
        %v2741 = vor.u32 1.1754944e-38, %v2740
        %v2742 = vsel %vm2739, %v2741, %v2737
        %v2743 = vmul.f32 1.0, %v2742
        %v2744 = vrcp.pop %v2698
        %v2745 = vmul.f32 %v2698, %v2744
        %v2746 = vsub.f32 1.0, %v2745
        %v2747 = vmul.f32 %v2744, %v2746
        %v2748 = vadd.f32 %v2744, %v2747
        %vm2749 = vweird.f32 %v2698
        %vm2750 = vweird.f32 %v2744
        %vm2751 = vmor %vm2749, %vm2750
        %v2752 = vsel %vm2751, %v2744, %v2748
        %v2753 = vand.u32 2147483647, %v2698
        %vm2754 = vcmp.eq.f32.partialorder %v2753, 8.507059e+37
        %v2755 = vand.u32 %v2698, 2147483648
        %v2756 = vor.u32 1.1754944e-38, %v2755
        %v2757 = vsel %vm2754, %v2756, %v2752
        %v2758 = vmul.f32 1.0, %v2757
        %v2759 = vtanh.pop %v2679
        %v2760 = vtanh.pop %v2680
        %v2761 = vtanh.pop %v2681
        %v2762 = vtanh.pop %v2682
        %2767 = vrot.lane.b32.xlu0 %v2759, 16
        %v2768 = vpop.permute.xlu0 %2767
        %2769 = vrot.lane.b32.xlu0 %v2760, 16
        %v2770 = vpop.permute.xlu0 %2769
        %2771 = vrot.lane.b32.xlu0 %v2761, 16
        %v2772 = vpop.permute.xlu0 %2771
        %2773 = vrot.lane.b32.xlu0 %v2762, 16
        %v2774 = vpop.permute.xlu0 %2773
        %v2779 = vmul.f32 %v2713, %v2768
        %v2780 = vmul.f32 %v2728, %v2770
        %v2781 = vmul.f32 %v2743, %v2772
        %v2782 = vmul.f32 %v2758, %v2774
        %s2783 = scalar_lea.vmem %s3, 80
        %v2784 = vld [vmem:[%s2783] sm:$0xff]
        %v2785 = vld [vmem:[%s2783 + $0x8] sm:$0xff]
        %2790 = vrot.lane.b32.xlu0 %v2779, 112
        %v2791 = vpop.permute.xlu0 %2790
        %2792 = vrot.lane.b32.xlu0 %v2780, 112
        %v2793 = vpop.permute.xlu0 %2792
        %2794 = vrot.lane.b32.xlu0 %v2781, 112
        %v2795 = vpop.permute.xlu0 %2794
        %2796 = vrot.lane.b32.xlu0 %v2782, 112
        %v2797 = vpop.permute.xlu0 %2796
        %v2798 = vsel %vm552, %v2791, 0
        %v2800 = vsel %vm552, %v2793, 0
        %v2802 = vsel %vm552, %v2795, 0
        %v2804 = vsel %vm552, %v2797, 0
        %2806 = vmatpush.msra.mxu0 0.0
        %2807 = vmatpush.msra.mxu0 0.0
        %2808 = vmatpush.msra.mxu0 0.0
        %2809 = vmatpush.msra.mxu0 0.0
        %2810 = vmatpush.msra.mxu0 0.0
        %2811 = vmatpush.msra.mxu0 0.0
        %2812 = vmatpush.msra.mxu0 0.0
        %2813 = vmatpush.msra.mxu0 0.0
        %2814 = vmatpush.msra.mxu0 0.0
        %2815 = vmatpush.msra.mxu0 0.0
        %2816 = vmatpush.msra.mxu0 0.0
        %2817 = vmatpush.msra.mxu0 0.0
        %2818 = vmatpush.msra.mxu0 0.0
        %2819 = vmatpush.msra.mxu0 0.0
        %2820 = vmatpush.msra.mxu0 %v2785
        %2821 = vmatpush.msra.mxu0 %v2784
        %2822 = vmatmul.f32.gmra.mxu0 %v2798
        %v2823 = vpop.f32.mrf.mxu0
        %v2824 = vadd.f32 0.0, %v2823
        %2825 = vmatmul.f32.gmra.mxu0 %v2800
        %v2826 = vpop.f32.mrf.mxu0
        %v2827 = vadd.f32 0.0, %v2826
        %2828 = vmatmul.f32.gmra.mxu0 %v2802
        %v2829 = vpop.f32.mrf.mxu0
        %v2830 = vadd.f32 0.0, %v2829
        %2831 = vmatmul.f32.gmra.mxu0 %v2804
        %v2832 = vpop.f32.mrf.mxu0
        %v2833 = vadd.f32 0.0, %v2832
        %2834 = vdwg.mxu0
        %v2835 = vsel %vm552, %v2824, 0.0
        %v2836 = vsel %vm552, %v2827, 0.0
        %v2837 = vadd.f32 %v2835, %v2836
        %v2838 = vrot.slane %v2837, 4
        %v2839 = vadd.f32 %v2837, %v2838
        %v2840 = vrot.slane %v2839, 2
        %v2841 = vadd.f32 %v2839, %v2840
        %v2842 = vrot.slane %v2841, 1
        %v2843 = vadd.f32 %v2841, %v2842
        %v2844 = vsel %vm552, %v2830, 0.0
        %v2845 = vsel %vm552, %v2833, 0.0
        %v2846 = vadd.f32 %v2844, %v2845
        %v2847 = vrot.slane %v2846, 4
        %v2848 = vadd.f32 %v2846, %v2847
        %v2849 = vrot.slane %v2848, 2
        %v2850 = vadd.f32 %v2848, %v2849
        %v2851 = vrot.slane %v2850, 1
        %v2852 = vadd.f32 %v2850, %v2851
        %v2853 = vmul.f32 %v2843, %v373
        %v2854 = vmul.f32 %v2852, %v373
        %v2855 = vsub.f32 %v2824, %v2853
        %v2856 = vsub.f32 %v2827, %v2853
        %v2857 = vsub.f32 %v2830, %v2854
        %v2858 = vsub.f32 %v2833, %v2854
        %v2859 = vmul.f32 %v2855, %v2855
        %v2860 = vmul.f32 %v2856, %v2856
        %v2861 = vmul.f32 %v2857, %v2857
        %v2862 = vmul.f32 %v2858, %v2858
        %v2863 = vsel %vm552, %v2859, 0.0
        %v2864 = vsel %vm552, %v2860, 0.0
        %v2865 = vadd.f32 %v2863, %v2864
        %v2866 = vrot.slane %v2865, 4
        %v2867 = vadd.f32 %v2865, %v2866
        %v2868 = vrot.slane %v2867, 2
        %v2869 = vadd.f32 %v2867, %v2868
        %v2870 = vrot.slane %v2869, 1
        %v2871 = vadd.f32 %v2869, %v2870
        %v2872 = vsel %vm552, %v2861, 0.0
        %v2873 = vsel %vm552, %v2862, 0.0
        %v2874 = vadd.f32 %v2872, %v2873
        %v2875 = vrot.slane %v2874, 4
        %v2876 = vadd.f32 %v2874, %v2875
        %v2877 = vrot.slane %v2876, 2
        %v2878 = vadd.f32 %v2876, %v2877
        %v2879 = vrot.slane %v2878, 1
        %v2880 = vadd.f32 %v2878, %v2879
        %v2881 = vmul.f32 %v2871, %v373
        %v2882 = vmul.f32 %v2880, %v373
        %v2883 = vadd.f32 %v2881, 1e-05
        %v2884 = vadd.f32 %v2882, 1e-05
        %v2885 = vrsqrt.pop %v2883
        %v2886 = vmul.f32 %v2885, %v2883
        %v2887 = vmul.f32 %v2886, %v2885
        %v2888 = vmul.f32 0.5, %v2887
        %v2889 = vsub.f32 1.5, %v2888
        %v2890 = vmul.f32 %v2885, %v2889
        %vm2891 = vweird.f32 %v2883
        %vm2892 = vweird.f32 %v2885
        %vm2893 = vmor %vm2891, %vm2892
        %v2894 = vsel %vm2893, %v2885, %v2890
        %v2895 = vrsqrt.pop %v2884
        %v2896 = vmul.f32 %v2895, %v2884
        %v2897 = vmul.f32 %v2896, %v2895
        %v2898 = vmul.f32 0.5, %v2897
        %v2899 = vsub.f32 1.5, %v2898
        %v2900 = vmul.f32 %v2895, %v2899
        %vm2901 = vweird.f32 %v2884
        %vm2902 = vweird.f32 %v2895
        %vm2903 = vmor %vm2901, %vm2902
        %v2904 = vsel %vm2903, %v2895, %v2900
        %v2905 = vmul.f32 %v2855, %v2894
        %v2906 = vmul.f32 %v2856, %v2894
        %v2907 = vmul.f32 %v2857, %v2904
        %v2908 = vmul.f32 %v2858, %v2904
        %v2909 = vld [vmem:[#allocation4] sm:$0xff]
        %v2910 = vld [vmem:[#allocation4 + $0x8] sm:$0xff]
        %v2911 = vld [vmem:[#allocation4 + $0x10] sm:$0xff]
        %v2912 = vld [vmem:[#allocation4 + $0x18] sm:$0xff]
        %2917 = vrot.lane.b32.xlu0 %v2905, 120
        %v2918 = vpop.permute.xlu0 %2917
        %2919 = vrot.lane.b32.xlu0 %v2906, 120
        %v2920 = vpop.permute.xlu0 %2919
        %2921 = vrot.lane.b32.xlu0 %v2907, 120
        %v2922 = vpop.permute.xlu0 %2921
        %2923 = vrot.lane.b32.xlu0 %v2908, 120
        %v2924 = vpop.permute.xlu0 %2923
        %v2929 = vadd.f32 %v2909, %v2918
        %v2930 = vadd.f32 %v2910, %v2920
        %v2931 = vadd.f32 %v2911, %v2922
        %v2932 = vadd.f32 %v2912, %v2924
        %2933 = vst.msk [vmem:[#allocation4] sm:$0xff] %vm224, %v2929
        %2934 = vst.msk [vmem:[#allocation4 + $0x8] sm:$0xff] %vm224, %v2930
        %2935 = vst.msk [vmem:[#allocation4 + $0x10] sm:$0xff] %vm224, %v2931
        %2936 = vst.msk [vmem:[#allocation4 + $0x18] sm:$0xff] %vm224, %v2932
        %v2937 = vld [vmem:[#allocation4] sm:$0xff]
        %v2938 = vld [vmem:[#allocation4 + $0x8] sm:$0xff]
        %v2939 = vld [vmem:[#allocation4 + $0x10] sm:$0xff]
        %v2940 = vld [vmem:[#allocation4 + $0x18] sm:$0xff]
        %2941 = vxpose.xlu0.b32.start [1/16] %v2937, 128
        %2942 = vxpose.xlu0.b32.cont [2/16] %v2938, 128
        %2943 = vxpose.xlu0.b32.cont [3/16] 0.0, 128
        %2944 = vxpose.xlu0.b32.cont [4/16] 0.0, 128
        %2945 = vxpose.xlu0.b32.cont [5/16] 0.0, 128
        %2946 = vxpose.xlu0.b32.cont [6/16] 0.0, 128
        %2947 = vxpose.xlu0.b32.cont [7/16] 0.0, 128
        %2948 = vxpose.xlu0.b32.cont [8/16] 0.0, 128
        %2949 = vxpose.xlu0.b32.cont [9/16] 0.0, 128
        %2950 = vxpose.xlu0.b32.cont [10/16] 0.0, 128
        %2951 = vxpose.xlu0.b32.cont [11/16] 0.0, 128
        %2952 = vxpose.xlu0.b32.cont [12/16] 0.0, 128
        %2953 = vxpose.xlu0.b32.cont [13/16] 0.0, 128
        %2954 = vxpose.xlu0.b32.cont [14/16] 0.0, 128
        %2955 = vxpose.xlu0.b32.cont [15/16] 0.0, 128
        %2956 = vxpose.xlu0.b32.end [16/16] 0.0, 128
        %v2957 = vpop.trf.xlu0
        %v2958 = vpop.trf.xlu0
        %v2959 = vpop.trf.xlu0
        %v2960 = vpop.trf.xlu0
        %v2961 = vpop.trf.xlu0
        %v2962 = vpop.trf.xlu0
        %v2963 = vpop.trf.xlu0
        %v2964 = vpop.trf.xlu0
        %v2965 = vpop.trf.xlu0
        %v2966 = vpop.trf.xlu0
        %v2967 = vpop.trf.xlu0
        %v2968 = vpop.trf.xlu0
        %v2969 = vpop.trf.xlu0
        %v2970 = vpop.trf.xlu0
        %v2971 = vpop.trf.xlu0
        %v2972 = vpop.trf.xlu0
        %2973 = vxpose.xlu0.b32.start [1/16] %v2939, 128
        %2974 = vxpose.xlu0.b32.cont [2/16] %v2940, 128
        %2975 = vxpose.xlu0.b32.cont [3/16] 0.0, 128
        %2976 = vxpose.xlu0.b32.cont [4/16] 0.0, 128
        %2977 = vxpose.xlu0.b32.cont [5/16] 0.0, 128
        %2978 = vxpose.xlu0.b32.cont [6/16] 0.0, 128
        %2979 = vxpose.xlu0.b32.cont [7/16] 0.0, 128
        %2980 = vxpose.xlu0.b32.cont [8/16] 0.0, 128
        %2981 = vxpose.xlu0.b32.cont [9/16] 0.0, 128
        %2982 = vxpose.xlu0.b32.cont [10/16] 0.0, 128
        %2983 = vxpose.xlu0.b32.cont [11/16] 0.0, 128
        %2984 = vxpose.xlu0.b32.cont [12/16] 0.0, 128
        %2985 = vxpose.xlu0.b32.cont [13/16] 0.0, 128
        %2986 = vxpose.xlu0.b32.cont [14/16] 0.0, 128
        %2987 = vxpose.xlu0.b32.cont [15/16] 0.0, 128
        %2988 = vxpose.xlu0.b32.end [16/16] 0.0, 128
        %v2989 = vpop.trf.xlu0
        %v2990 = vpop.trf.xlu0
        %v2991 = vpop.trf.xlu0
        %v2992 = vpop.trf.xlu0
        %v2993 = vpop.trf.xlu0
        %v2994 = vpop.trf.xlu0
        %v2995 = vpop.trf.xlu0
        %v2996 = vpop.trf.xlu0
        %v2997 = vpop.trf.xlu0
        %v2998 = vpop.trf.xlu0
        %v2999 = vpop.trf.xlu0
        %v3000 = vpop.trf.xlu0
        %v3001 = vpop.trf.xlu0
        %v3002 = vpop.trf.xlu0
        %v3003 = vpop.trf.xlu0
        %v3004 = vpop.trf.xlu0
        %3005 = vst.msk [vmem:[%s209] sm:$0xff] %vm552, %v2957
        %3006 = vst.msk [vmem:[%s209 + $0x8] sm:$0xff] %vm552, %v2989
        %s3007 = sand.u32 %s120, 1
        %s3008 = scalar_lea.sflag [#allocation6], %s3007
        %s3009 = sand.u32 %s120, 1
        %s3010 = smul.addr %s3009, 16
        %s3011 = scalar_lea.vmem [#allocation5], %s3010
        // Predicated region
        $region37: #{wavenet_like_stack.1} parent=35 // pred_check
          %p3012 = pneg %p130
        $region38: #{wavenet_like_stack.1} parent=35 // pred_check_branch
          %3014 = sbr.rel (%p3012) target = $region40
        $region39: #{wavenet_like_stack.1} parent=35 // pred_region
          %s3015 = smul.u32 2, %s18
          %3017 = vsyncadd %s3008, 0
          %s3018 = smul.addr %s3015, 8
          %s3019 = scalar_lea.hbm %s4, %s3018
          %s3020 = sshll.u32 %s3011, 4
          %s3021 = int_to_ptr.vmem [resolvable:$true] %s3020
          %s3022 = sshll.u32 %s3019, 4
          %s3023 = int_to_ptr.hbm [resolvable:$true] %s3022
          %3028 = dma.vmem_to_hbm [thread:$0]  %s3021, 256, %s3023, %s3008, 128, 128, 8
        $region40: #{wavenet_like_stack.1} parent=35 // pred_fallthru
          _
      $region36: #{wavenet_like_stack.1} parent=5 // pred_fallthru
        _
      %p3029 = scmp.le.s32.totalorder 2, %s13
      // Predicated region
      $region41: #{wavenet_like_stack.1} parent=5 // pred_check
        %p3030 = pneg %p3029
      $region42: #{wavenet_like_stack.1} parent=5 // pred_check_branch
        %3032 = sbr.rel (%p3030) target = $region44
      $region43: #{wavenet_like_stack.1} parent=5 // pred_region
        %s3033 = ssub.s32 %s13, 2
        // Predicated region
        $region45: #{wavenet_like_stack.1} parent=43 // pred_check
          %p3034 = pneg %p136
        $region46: #{wavenet_like_stack.1} parent=43 // pred_check_branch
          %3036 = sbr.rel (%p3034) target = $region48
        $region47: #{wavenet_like_stack.1} parent=43 // pred_region
          %s3037 = sand.u32 %s121, 1
          %s3038 = scalar_lea.sflag [#allocation6], %s3037
          %s3039 = sand.u32 %s121, 1
          %s3040 = smul.addr %s3039, 16
          %s3041 = scalar_lea.vmem [#allocation5], %s3040
          %3043 = dma.done %s3038, 256
        $region48: #{wavenet_like_stack.1} parent=43 // pred_fallthru
          _
      $region44: #{wavenet_like_stack.1} parent=5 // pred_fallthru
        _
    $region6: #{wavenet_like_stack.1} parent=1 // loop_footer
      %s17 = sadd.s32 1, %s13
    $region7: #{wavenet_like_stack.1} parent=1 // loop_footer_branch
      %12 = sbr.rel target = $region3
    $region8: #{wavenet_like_stack.1} parent=1 // loop_exit
      _
    %3044 = vsyncpa [#allocation6], 1
    %s3045 = scalar_lea.sflag [#allocation6], 1
    %3046 = vsyncpa %s3045, 1

</llo_original>
